<compile_context>
chip_gen: v5e
topology: v5e:2x2
jax: 0.10.0
libtpu: 0.0.40
codegen_flags: <defaults>
</compile_context>

<pallas_src>
import functools

import jax
import jax.numpy as jnp
from jax.experimental import pallas as pl
from jax.experimental.pallas import tpu as pltpu


def _classifier_kernel(z_ref, w1_ref, p_ref, out_ref, *, finalize):
    # z: (B, F_pad) bf16, w1: (F_pad, tw) bf16, p: (3, tw) f32 = [b1'; w2; b2]
    h = jnp.dot(z_ref[...], w1_ref[...], preferred_element_type=jnp.float32)
    h = jnp.maximum(h + p_ref[0:1, :], 0.0)      # bias (BN folded) + ReLU
    # Linear-2 has out_features=1: lane-wise multiply + cross-lane reduce
    # instead of a 1-wide MXU matmul.
    partial = jnp.sum(h * p_ref[1:2, :], axis=-1, keepdims=True)   # (B, 1)
    if finalize:
        # Single-block path: finish the whole head in-kernel (b2 + sigmoid).
        logit = partial + p_ref[2:3, 0:1]
        partial = 1.0 / (1.0 + jnp.exp(-logit))
    # Broadcast over the 128-lane output block so the store stays lane-aligned.
    out_ref[...] = jnp.broadcast_to(partial, out_ref.shape)


def hybrid_classifier_pallas(z_bf16, w1_bf16, packed, b2, *, num_w_blocks=1):
    B, F = z_bf16.shape
    F2, W = w1_bf16.shape
    assert F == F2 and W % num_w_blocks == 0
    tw = W // num_w_blocks
    assert tw % 128 == 0 and B % 8 == 0 and F % 128 == 0
    finalize = num_w_blocks == 1

    out = pl.pallas_call(
        functools.partial(_classifier_kernel, finalize=finalize),
        out_shape=jax.ShapeDtypeStruct((B, 128 * num_w_blocks), jnp.float32),
        grid=(num_w_blocks,),
        in_specs=[
            pl.BlockSpec((B, F), lambda j: (0, 0)),    # z (same for all blocks)
            pl.BlockSpec((F, tw), lambda j: (0, j)),   # W1' column block
            pl.BlockSpec((3, tw), lambda j: (0, j)),   # packed [b1'; w2; b2] block
        ],
        out_specs=pl.BlockSpec((B, 128), lambda j: (0, j)),
        compiler_params=pltpu.CompilerParams(
            dimension_semantics=("parallel",),
            vmem_limit_bytes=32 << 20,
        ),
    )(z_bf16, w1_bf16, packed)

    if finalize:
        # Kernel already produced sigmoid(logits) broadcast across 128 lanes.
        return out[:, :1]
    # Each block's partial logit is broadcast across 128 lanes -> take lane 0.
    partials = out[:, ::128]                       # (B, num_w_blocks)
    logits = jnp.sum(partials, axis=1, keepdims=True) + b2
    return jax.nn.sigmoid(logits)


def prepare_params(params, eps=1e-5):
    """Fold BatchNorm into Linear-1, reorder/pad features, cast W1 to bf16."""
    d = params["ent_emb"].shape[1]
    scale = params["gamma"] * jax.lax.rsqrt(params["running_var"] + eps)  # (1, W)
    w1_f = params["w1"] * scale
    b1_f = (params["b1"] - params["running_mean"]) * scale + params["beta"]
    # Kernel feature order: [sentence (lane-aligned 2304), head, rel, tail].
    w1_reord = jnp.concatenate([w1_f[3 * d:], w1_f[:3 * d]], axis=0)
    f = w1_reord.shape[0]
    f_pad = ((f + 127) // 128) * 128
    w1_bf16 = jnp.pad(w1_reord, ((0, f_pad - f), (0, 0))).astype(jnp.bfloat16)
    width = w1_f.shape[1]
    packed = jnp.concatenate(
        [b1_f,
         params["w2"].reshape(1, -1),
         jnp.broadcast_to(params["b2"].reshape(1, 1), (1, width))],
        axis=0).astype(jnp.float32)               # (3, W)
    return {
        "ent_emb": params["ent_emb"],
        "rel_emb": params["rel_emb"],
        "sen_emb_train": params["sen_emb_train"],
        "w1_bf16": w1_bf16,
        "packed": packed,
        "b2": params["b2"],
    }


def _build_z(prepared, e1_idx, rel_idx, e2_idx, sen_idx):
    emb_head = jnp.take(prepared["ent_emb"], e1_idx, axis=0)
    emb_rel = jnp.take(prepared["rel_emb"], rel_idx, axis=0)
    emb_tail = jnp.take(prepared["ent_emb"], e2_idx, axis=0)
    emb_sen = jnp.take(prepared["sen_emb_train"], sen_idx, axis=0)
    z = jnp.concatenate([emb_sen, emb_head, emb_rel, emb_tail], axis=1)
    f_pad = prepared["w1_bf16"].shape[0]
    z = jnp.pad(z, ((0, 0), (0, f_pad - z.shape[1])))
    return z.astype(jnp.bfloat16)


@functools.partial(jax.jit, static_argnames=("num_w_blocks",))
def hybrid_model_setting2_forward(prepared, e1_idx, rel_idx, e2_idx, sen_idx,
                                  num_w_blocks=1):
    z = _build_z(prepared, e1_idx, rel_idx, e2_idx, sen_idx)
    b = z.shape[0]
    b_pad = ((b + 7) // 8) * 8
    if b_pad != b:
        z = jnp.pad(z, ((0, b_pad - b), (0, 0)))
    probs = hybrid_classifier_pallas(
        z, prepared["w1_bf16"], prepared["packed"], prepared["b2"],
        num_w_blocks=num_w_blocks)
    return probs[:b]


def _reference_forward_f32(params, e1_idx, rel_idx, e2_idx, sen_idx):
    emb_head = jnp.take(params["ent_emb"], e1_idx, axis=0)
    emb_rel = jnp.take(params["rel_emb"], rel_idx, axis=0)
    emb_tail = jnp.take(params["ent_emb"], e2_idx, axis=0)
    emb_sen = jnp.take(params["sen_emb_train"], sen_idx, axis=0)
    z = jnp.concatenate([emb_head, emb_rel, emb_tail, emb_sen], axis=1)
    h = z @ params["w1"] + params["b1"]
    h = params["gamma"] * (h - params["running_mean"]) * jax.lax.rsqrt(
        params["running_var"] + 1e-5) + params["beta"]
    h = jnp.maximum(h, 0.0)
    return jax.nn.sigmoid(h @ params["w2"] + params["b2"])


def _reference_forward_bf16(prepared, e1_idx, rel_idx, e2_idx, sen_idx):
    # Same bf16 weights / folded params as the kernel, computed in plain JAX.
    z = _build_z(prepared, e1_idx, rel_idx, e2_idx, sen_idx)
    h = jnp.dot(z, prepared["w1_bf16"], preferred_element_type=jnp.float32)
    h = jnp.maximum(h + prepared["packed"][0:1], 0.0)
    logits = jnp.sum(h * prepared["packed"][1:2], axis=-1, keepdims=True)
    return jax.nn.sigmoid(logits + prepared["b2"])


if __name__ == "__main__":
    # Small deterministic configuration consistent with the module's __init__.
    embedding_dim = 20
    sentence_dim = 768 * 3                       # fixed in the module: 2304
    shallom_width = int(25.6 * embedding_dim)    # 512
    num_entities = 50
    num_relations = 10
    num_train_sentences = 30
    batch = 8
    feat_dim = embedding_dim * 3 + sentence_dim  # 2364

    key = jax.random.PRNGKey(0)
    keys = jax.random.split(key, 12)

    params = {
        "ent_emb": jax.random.normal(keys[0], (num_entities, embedding_dim), jnp.float32),
        "rel_emb": jax.random.normal(keys[1], (num_relations, embedding_dim), jnp.float32),
        "sen_emb_train": jax.random.normal(keys[2], (num_train_sentences, sentence_dim), jnp.float32),
        "w1": jax.random.normal(keys[3], (feat_dim, shallom_width), jnp.float32) * 0.02,
        "b1": jax.random.normal(keys[4], (1, shallom_width), jnp.float32) * 0.01,
        "gamma": 1.0 + 0.1 * jax.random.normal(keys[5], (1, shallom_width), jnp.float32),
        "beta": 0.1 * jax.random.normal(keys[6], (1, shallom_width), jnp.float32),
        "running_mean": 0.1 * jax.random.normal(keys[7], (1, shallom_width), jnp.float32),
        "running_var": jnp.abs(1.0 + 0.1 * jax.random.normal(keys[8], (1, shallom_width), jnp.float32)),
        "w2": jax.random.normal(keys[9], (shallom_width, 1), jnp.float32) * 0.05,
        "b2": jax.random.normal(keys[10], (1, 1), jnp.float32) * 0.01,
    }

    idx_key = keys[11]
    e1_idx = jax.random.randint(jax.random.fold_in(idx_key, 0), (batch,), 0, num_entities)
    rel_idx = jax.random.randint(jax.random.fold_in(idx_key, 1), (batch,), 0, num_relations)
    e2_idx = jax.random.randint(jax.random.fold_in(idx_key, 2), (batch,), 0, num_entities)
    sen_idx = jax.random.randint(jax.random.fold_in(idx_key, 3), (batch,), 0, num_train_sentences)

    prepared = prepare_params(params)

    ref_f32 = _reference_forward_f32(params, e1_idx, rel_idx, e2_idx, sen_idx)
    ref_bf16 = _reference_forward_bf16(prepared, e1_idx, rel_idx, e2_idx, sen_idx)

    for nb in (1, 2):   # nb=1: fully fused in-kernel head; nb=2: parallel W-split
        out = hybrid_model_setting2_forward(
            prepared, e1_idx, rel_idx, e2_idx, sen_idx, num_w_blocks=nb)
        out = jax.block_until_ready(out)
        assert out.shape == (batch, 1)
        # Tight check against an identical bf16/folded-BN JAX reference.
        assert jnp.allclose(out, ref_bf16, rtol=1e-3, atol=1e-3)
        # Loose check against the original f32 un-folded formulation
        # (bf16 weights => ~1e-2 level agreement).
        assert jnp.allclose(out, ref_f32, rtol=2e-2, atol=2e-2)

    print("KERNEL_OK")
</pallas_src>

<mosaic_0001>
module attributes {stable_mosaic.version = 11 : i64} {
  func.func @_classifier_kernel(%arg0: i32, %arg1: memref<8x2432xbf16, #tpu.memory_space<vmem>>, %arg2: memref<2432x512xbf16, #tpu.memory_space<vmem>>, %arg3: memref<3x512xf32, #tpu.memory_space<vmem>>, %arg4: memref<8x128xf32, #tpu.memory_space<vmem>>) attributes {dimension_semantics = [#tpu.dimension_semantics<parallel>], iteration_bounds = array<i64: 1>, scalar_prefetch = 0 : i64, scratch_operands = 0 : i64, tpu.core_type = #tpu.core_type<tc>, window_params = [{pipeline_mode = #tpu.pipeline_mode<synchronous>, transform_indices = @transform_0, window_bounds = array<i64: 8, 2432>}, {transform_indices = @transform_1, window_bounds = array<i64: 2432, 512>}, {transform_indices = @transform_2, window_bounds = array<i64: 3, 512>}, {transform_indices = @transform_3, window_bounds = array<i64: 8, 128>}]} {
    %c0 = arith.constant 0 : index
    %c0_0 = arith.constant 0 : index
    %0 = vector.load %arg1[%c0, %c0_0] : memref<8x2432xbf16, #tpu.memory_space<vmem>>, vector<8x2432xbf16>
    %c0_1 = arith.constant 0 : index
    %c0_2 = arith.constant 0 : index
    %1 = vector.load %arg2[%c0_1, %c0_2] : memref<2432x512xbf16, #tpu.memory_space<vmem>>, vector<2432x512xbf16>
    %cst = arith.constant dense<0.000000e+00> : vector<8x512xf32>
    %2 = tpu.matmul %0, %1, %cst {dimension_numbers = #tpu.dot_dimension_numbers<[1], [0], [0], [1], [0, 0, 1, 1], [], []>} : vector<8x2432xbf16>, vector<2432x512xbf16>, vector<8x512xf32> -> vector<8x512xf32>
    %c0_3 = arith.constant 0 : index
    %c0_4 = arith.constant 0 : index
    %3 = vector.load %arg3[%c0_3, %c0_4] : memref<3x512xf32, #tpu.memory_space<vmem>>, vector<1x512xf32>
    %4 = vector.broadcast %3 : vector<1x512xf32> to vector<8x512xf32>
    %5 = arith.addf %2, %4 : vector<8x512xf32>
    %cst_5 = arith.constant 0.000000e+00 : f32
    %6 = vector.broadcast %cst_5 : f32 to vector<8x512xf32>
    %7 = arith.maximumf %5, %6 : vector<8x512xf32>
    %c1 = arith.constant 1 : index
    %c0_6 = arith.constant 0 : index
    %8 = vector.load %arg3[%c1, %c0_6] : memref<3x512xf32, #tpu.memory_space<vmem>>, vector<1x512xf32>
    %9 = vector.broadcast %8 : vector<1x512xf32> to vector<8x512xf32>
    %10 = arith.mulf %7, %9 : vector<8x512xf32>
    %cst_7 = arith.constant dense<0.000000e+00> : vector<8xf32>
    %11 = vector.multi_reduction <add>, %10, %cst_7 [1] : vector<8x512xf32> to vector<8xf32>
    %12 = vector.shape_cast %11 : vector<8xf32> to vector<8x1xf32>
    %c2 = arith.constant 2 : index
    %c0_8 = arith.constant 0 : index
    %13 = vector.load %arg3[%c2, %c0_8] : memref<3x512xf32, #tpu.memory_space<vmem>>, vector<1x1xf32>
    %14 = vector.broadcast %13 : vector<1x1xf32> to vector<8x1xf32>
    %15 = arith.addf %12, %14 : vector<8x1xf32>
    %cst_9 = arith.constant 0.000000e+00 : f32
    %16 = vector.broadcast %cst_9 : f32 to vector<8x1xf32>
    %17 = arith.subf %16, %15 : vector<8x1xf32>
    %18 = math.exp %17 : vector<8x1xf32>
    %cst_10 = arith.constant 1.000000e+00 : f32
    %19 = vector.broadcast %cst_10 : f32 to vector<8x1xf32>
    %20 = arith.addf %19, %18 : vector<8x1xf32>
    %cst_11 = arith.constant 1.000000e+00 : f32
    %21 = vector.broadcast %cst_11 : f32 to vector<8x1xf32>
    %22 = arith.divf %21, %20 : vector<8x1xf32>
    %23 = vector.shape_cast %22 : vector<8x1xf32> to vector<8x1xf32>
    %24 = vector.broadcast %23 : vector<8x1xf32> to vector<8x128xf32>
    %c0_12 = arith.constant 0 : index
    %c0_13 = arith.constant 0 : index
    %25 = vector.load %arg4[%c0_12, %c0_13] : memref<8x128xf32, #tpu.memory_space<vmem>>, vector<8x128xf32>
    tpu.vector_store %arg4[%c0_12, %c0_13], %24 {strides = array<i32>} : memref<8x128xf32, #tpu.memory_space<vmem>>, vector<8x128xf32>,
    return
  }
  func.func @transform_0(%arg0: i32) -> (i32, i32) {
    %c0_i32 = arith.constant 0 : i32
    %c0_i32_0 = arith.constant 0 : i32
    %c0_i32_1 = arith.constant 0 : i32
    return %c0_i32, %c0_i32_0 : i32, i32
  }
  func.func @transform_1(%arg0: i32) -> (i32, i32) {
    %c0_i32 = arith.constant 0 : i32
    %c0_i32_0 = arith.constant 0 : i32
    return %c0_i32, %arg0 : i32, i32
  }
  func.func @transform_2(%arg0: i32) -> (i32, i32) {
    %c0_i32 = arith.constant 0 : i32
    %c0_i32_0 = arith.constant 0 : i32
    return %c0_i32, %arg0 : i32, i32
  }
  func.func @transform_3(%arg0: i32) -> (i32, i32) {
    %c0_i32 = arith.constant 0 : i32
    %c0_i32_0 = arith.constant 0 : i32
    return %c0_i32, %arg0 : i32, i32
  }
}

</mosaic_0001>

<llo_original>
// kernel: hybrid_model_setting2_forward.1
$region0: #{hybrid_model_setting2_forward.1}
  #allocation0 [shape = 'u32[]', space=smem, size = 0x4, offset = 0x4, fixed_abs, tag = 'smem constant byte address 0x4 - core index']
  #allocation1 [shape = 'u32[72,128]{1,0:T(1,128)}', space=vmem, size = 0x9000, scoped, tag = 'internal scratch']
  %s0 = inlined_call_operand.vmem [shape: bf16[8,2432], index: 0, kind: input, shape index: {}]
  %s1 = inlined_call_operand.hbm [shape: bf16[2432,512], index: 1, kind: input, shape index: {}]
  %s2 = inlined_call_operand.hbm [shape: f32[3,512], index: 2, kind: input, shape index: {}]
  %s3 = inlined_call_operand.vmem [shape: f32[8,128], index: 3, kind: output, shape index: {}]
  %s4 = sld [smem:[#allocation0]]
  $region30: #{hybrid_model_setting2_forward.1} parent=0
    _
  %s6 = ssub.s32 1, %s4
  %s7 = scalar_select 0, %s6, %s4
  $region1: #{hybrid_model_setting2_forward.1} parent=0
    #allocation2 [shape = 'u8[2490368]{0}', space=vmem, size = 0x260000, scoped, tag = 'input window, operand 1, single buffered']
    #allocation3 [shape = 's32[1]{0}', space=sflag, size = 0x4, scoped, tag = 'scoped memory for hybrid_model_setting2_forward.1']
    #allocation4 [shape = 'u8[8192]{0}', space=vmem, size = 0x2000, scoped, tag = 'input window, operand 2, single buffered']
    #allocation5 [shape = 's32[1]{0}', space=sflag, size = 0x4, scoped, tag = 'scoped memory for hybrid_model_setting2_forward.1']
    %8 = vsyncpa [#allocation3], 0
    %9 = vsyncpa [#allocation5], 0
    // Predicated region
    $region2: #{hybrid_model_setting2_forward.1} parent=1 // pred_check
      _
    $region3: #{hybrid_model_setting2_forward.1} parent=1 // pred_check_branch
      %11 = sbr.rel (0) target = $region5
    $region4: #{hybrid_model_setting2_forward.1} parent=1 // pred_region
      _
    $region5: #{hybrid_model_setting2_forward.1} parent=1 // pred_fallthru
      _
    // Predicated region
    $region6: #{hybrid_model_setting2_forward.1} parent=1 // pred_check
      _
    $region7: #{hybrid_model_setting2_forward.1} parent=1 // pred_check_branch
      %13 = sbr.rel (0) target = $region9
    $region8: #{hybrid_model_setting2_forward.1} parent=1 // pred_region
      %15 = vsyncadd [#allocation3], 0
      %s16 = sshll.u32 %s1, 4
      %s17 = int_to_ptr.hbm [resolvable:$true] %s16
      %s18 = sshll.u32 [#allocation2], 4
      %s19 = int_to_ptr.vmem [resolvable:$true] %s18
      %24 = dma.hbm_to_vmem [thread:$0]  %s17, 77824, %s19, [#allocation3], 256, 256, 16
    $region9: #{hybrid_model_setting2_forward.1} parent=1 // pred_fallthru
      _
    // Predicated region
    $region10: #{hybrid_model_setting2_forward.1} parent=1 // pred_check
      _
    $region11: #{hybrid_model_setting2_forward.1} parent=1 // pred_check_branch
      %26 = sbr.rel (0) target = $region13
    $region12: #{hybrid_model_setting2_forward.1} parent=1 // pred_region
      %28 = vsyncadd [#allocation5], 0
      %s30 = sshll.u32 %s2, 4
      %s31 = int_to_ptr.hbm [resolvable:$true] %s30
      %s32 = sshll.u32 [#allocation4], 4
      %s33 = int_to_ptr.vmem [resolvable:$true] %s32
      %35 = dma.hbm_to_vmem [thread:$0]  %s31, 256, %s33, [#allocation5]
    $region13: #{hybrid_model_setting2_forward.1} parent=1 // pred_fallthru
      _
    // Predicated region
    $region14: #{hybrid_model_setting2_forward.1} parent=1 // pred_check
      _
    $region15: #{hybrid_model_setting2_forward.1} parent=1 // pred_check_branch
      %37 = sbr.rel (0) target = $region17
    $region16: #{hybrid_model_setting2_forward.1} parent=1 // pred_region
      %39 = dma.done [#allocation3], 77824
    $region17: #{hybrid_model_setting2_forward.1} parent=1 // pred_fallthru
      _
    // Predicated region
    $region18: #{hybrid_model_setting2_forward.1} parent=1 // pred_check
      _
    $region19: #{hybrid_model_setting2_forward.1} parent=1 // pred_check_branch
      %41 = sbr.rel (0) target = $region21
    $region20: #{hybrid_model_setting2_forward.1} parent=1 // pred_region
      %43 = dma.done [#allocation5], 256
    $region21: #{hybrid_model_setting2_forward.1} parent=1 // pred_fallthru
      _
    %v44 = vld [vmem:[%s0] sm:$0xff]
    %v45 = vld [vmem:[%s0 + $0x8] sm:$0xff]
    %v46 = vld [vmem:[%s0 + $0x10] sm:$0xff]
    %v47 = vld [vmem:[%s0 + $0x18] sm:$0xff]
    %v48 = vld [vmem:[%s0 + $0x20] sm:$0xff]
    %v49 = vld [vmem:[%s0 + $0x28] sm:$0xff]
    %v50 = vld [vmem:[%s0 + $0x30] sm:$0xff]
    %v51 = vld [vmem:[%s0 + $0x38] sm:$0xff]
    %v52 = vld [vmem:[%s0 + $0x40] sm:$0xff]
    %v53 = vld [vmem:[%s0 + $0x48] sm:$0xf]
    %v54 = vld [vmem:[#allocation2] sm:$0xff]
    %v55 = vld [vmem:[#allocation2 + $0x8] sm:$0xff]
    %v56 = vld [vmem:[#allocation2 + $0x10] sm:$0xff]
    %v57 = vld [vmem:[#allocation2 + $0x18] sm:$0xff]
    %v58 = vld [vmem:[#allocation2 + $0x20] sm:$0xff]
    %v59 = vld [vmem:[#allocation2 + $0x28] sm:$0xff]
    %v60 = vld [vmem:[#allocation2 + $0x30] sm:$0xff]
    %v61 = vld [vmem:[#allocation2 + $0x38] sm:$0xff]
    %v62 = vld [vmem:[#allocation2 + $0x40] sm:$0xff]
    %v63 = vld [vmem:[#allocation2 + $0x48] sm:$0xff]
    %v64 = vld [vmem:[#allocation2 + $0x50] sm:$0xff]
    %v65 = vld [vmem:[#allocation2 + $0x58] sm:$0xff]
    %v66 = vld [vmem:[#allocation2 + $0x60] sm:$0xff]
    %v67 = vld [vmem:[#allocation2 + $0x68] sm:$0xff]
    %v68 = vld [vmem:[#allocation2 + $0x70] sm:$0xff]
    %v69 = vld [vmem:[#allocation2 + $0x78] sm:$0xff]
    %v70 = vld [vmem:[#allocation2 + $0x80] sm:$0xff]
    %v71 = vld [vmem:[#allocation2 + $0x88] sm:$0xff]
    %v72 = vld [vmem:[#allocation2 + $0x90] sm:$0xff]
    %v73 = vld [vmem:[#allocation2 + $0x98] sm:$0xff]
    %v74 = vld [vmem:[#allocation2 + $0xa0] sm:$0xff]
    %v75 = vld [vmem:[#allocation2 + $0xa8] sm:$0xff]
    %v76 = vld [vmem:[#allocation2 + $0xb0] sm:$0xff]
    %v77 = vld [vmem:[#allocation2 + $0xb8] sm:$0xff]
    %v78 = vld [vmem:[#allocation2 + $0xc0] sm:$0xff]
    %v79 = vld [vmem:[#allocation2 + $0xc8] sm:$0xff]
    %v80 = vld [vmem:[#allocation2 + $0xd0] sm:$0xff]
    %v81 = vld [vmem:[#allocation2 + $0xd8] sm:$0xff]
    %v82 = vld [vmem:[#allocation2 + $0xe0] sm:$0xff]
    %v83 = vld [vmem:[#allocation2 + $0xe8] sm:$0xff]
    %v84 = vld [vmem:[#allocation2 + $0xf0] sm:$0xff]
    %v85 = vld [vmem:[#allocation2 + $0xf8] sm:$0xff]
    %v86 = vld [vmem:[#allocation2 + $0x100] sm:$0xff]
    %v87 = vld [vmem:[#allocation2 + $0x108] sm:$0xff]
    %v88 = vld [vmem:[#allocation2 + $0x110] sm:$0xff]
    %v89 = vld [vmem:[#allocation2 + $0x118] sm:$0xff]
    %v90 = vld [vmem:[#allocation2 + $0x120] sm:$0xff]
    %v91 = vld [vmem:[#allocation2 + $0x128] sm:$0xff]
    %v92 = vld [vmem:[#allocation2 + $0x130] sm:$0xff]
    %v93 = vld [vmem:[#allocation2 + $0x138] sm:$0xff]
    %v94 = vld [vmem:[#allocation2 + $0x140] sm:$0xff]
    %v95 = vld [vmem:[#allocation2 + $0x148] sm:$0xff]
    %v96 = vld [vmem:[#allocation2 + $0x150] sm:$0xff]
    %v97 = vld [vmem:[#allocation2 + $0x158] sm:$0xff]
    %v98 = vld [vmem:[#allocation2 + $0x160] sm:$0xff]
    %v99 = vld [vmem:[#allocation2 + $0x168] sm:$0xff]
    %v100 = vld [vmem:[#allocation2 + $0x170] sm:$0xff]
    %v101 = vld [vmem:[#allocation2 + $0x178] sm:$0xff]
    %v102 = vld [vmem:[#allocation2 + $0x180] sm:$0xff]
    %v103 = vld [vmem:[#allocation2 + $0x188] sm:$0xff]
    %v104 = vld [vmem:[#allocation2 + $0x190] sm:$0xff]
    %v105 = vld [vmem:[#allocation2 + $0x198] sm:$0xff]
    %v106 = vld [vmem:[#allocation2 + $0x1a0] sm:$0xff]
    %v107 = vld [vmem:[#allocation2 + $0x1a8] sm:$0xff]
    %v108 = vld [vmem:[#allocation2 + $0x1b0] sm:$0xff]
    %v109 = vld [vmem:[#allocation2 + $0x1b8] sm:$0xff]
    %v110 = vld [vmem:[#allocation2 + $0x1c0] sm:$0xff]
    %v111 = vld [vmem:[#allocation2 + $0x1c8] sm:$0xff]
    %v112 = vld [vmem:[#allocation2 + $0x1d0] sm:$0xff]
    %v113 = vld [vmem:[#allocation2 + $0x1d8] sm:$0xff]
    %v114 = vld [vmem:[#allocation2 + $0x1e0] sm:$0xff]
    %v115 = vld [vmem:[#allocation2 + $0x1e8] sm:$0xff]
    %v116 = vld [vmem:[#allocation2 + $0x1f0] sm:$0xff]
    %v117 = vld [vmem:[#allocation2 + $0x1f8] sm:$0xff]
    %v118 = vld [vmem:[#allocation2 + $0x200] sm:$0xff]
    %v119 = vld [vmem:[#allocation2 + $0x208] sm:$0xff]
    %v120 = vld [vmem:[#allocation2 + $0x210] sm:$0xff]
    %v121 = vld [vmem:[#allocation2 + $0x218] sm:$0xff]
    %v122 = vld [vmem:[#allocation2 + $0x220] sm:$0xff]
    %v123 = vld [vmem:[#allocation2 + $0x228] sm:$0xff]
    %v124 = vld [vmem:[#allocation2 + $0x230] sm:$0xff]
    %v125 = vld [vmem:[#allocation2 + $0x238] sm:$0xff]
    %v126 = vld [vmem:[#allocation2 + $0x240] sm:$0xff]
    %v127 = vld [vmem:[#allocation2 + $0x248] sm:$0xff]
    %v128 = vld [vmem:[#allocation2 + $0x250] sm:$0xff]
    %v129 = vld [vmem:[#allocation2 + $0x258] sm:$0xff]
    %v130 = vld [vmem:[#allocation2 + $0x260] sm:$0xff]
    %v131 = vld [vmem:[#allocation2 + $0x268] sm:$0xff]
    %v132 = vld [vmem:[#allocation2 + $0x270] sm:$0xff]
    %v133 = vld [vmem:[#allocation2 + $0x278] sm:$0xff]
    %v134 = vld [vmem:[#allocation2 + $0x280] sm:$0xff]
    %v135 = vld [vmem:[#allocation2 + $0x288] sm:$0xff]
    %v136 = vld [vmem:[#allocation2 + $0x290] sm:$0xff]
    %v137 = vld [vmem:[#allocation2 + $0x298] sm:$0xff]
    %v138 = vld [vmem:[#allocation2 + $0x2a0] sm:$0xff]
    %v139 = vld [vmem:[#allocation2 + $0x2a8] sm:$0xff]
    %v140 = vld [vmem:[#allocation2 + $0x2b0] sm:$0xff]
    %v141 = vld [vmem:[#allocation2 + $0x2b8] sm:$0xff]
    %v142 = vld [vmem:[#allocation2 + $0x2c0] sm:$0xff]
    %v143 = vld [vmem:[#allocation2 + $0x2c8] sm:$0xff]
    %v144 = vld [vmem:[#allocation2 + $0x2d0] sm:$0xff]
    %v145 = vld [vmem:[#allocation2 + $0x2d8] sm:$0xff]
    %v146 = vld [vmem:[#allocation2 + $0x2e0] sm:$0xff]
    %v147 = vld [vmem:[#allocation2 + $0x2e8] sm:$0xff]
    %v148 = vld [vmem:[#allocation2 + $0x2f0] sm:$0xff]
    %v149 = vld [vmem:[#allocation2 + $0x2f8] sm:$0xff]
    %v150 = vld [vmem:[#allocation2 + $0x300] sm:$0xff]
    %v151 = vld [vmem:[#allocation2 + $0x308] sm:$0xff]
    %v152 = vld [vmem:[#allocation2 + $0x310] sm:$0xff]
    %v153 = vld [vmem:[#allocation2 + $0x318] sm:$0xff]
    %v154 = vld [vmem:[#allocation2 + $0x320] sm:$0xff]
    %v155 = vld [vmem:[#allocation2 + $0x328] sm:$0xff]
    %v156 = vld [vmem:[#allocation2 + $0x330] sm:$0xff]
    %v157 = vld [vmem:[#allocation2 + $0x338] sm:$0xff]
    %v158 = vld [vmem:[#allocation2 + $0x340] sm:$0xff]
    %v159 = vld [vmem:[#allocation2 + $0x348] sm:$0xff]
    %v160 = vld [vmem:[#allocation2 + $0x350] sm:$0xff]
    %v161 = vld [vmem:[#allocation2 + $0x358] sm:$0xff]
    %v162 = vld [vmem:[#allocation2 + $0x360] sm:$0xff]
    %v163 = vld [vmem:[#allocation2 + $0x368] sm:$0xff]
    %v164 = vld [vmem:[#allocation2 + $0x370] sm:$0xff]
    %v165 = vld [vmem:[#allocation2 + $0x378] sm:$0xff]
    %v166 = vld [vmem:[#allocation2 + $0x380] sm:$0xff]
    %v167 = vld [vmem:[#allocation2 + $0x388] sm:$0xff]
    %v168 = vld [vmem:[#allocation2 + $0x390] sm:$0xff]
    %v169 = vld [vmem:[#allocation2 + $0x398] sm:$0xff]
    %v170 = vld [vmem:[#allocation2 + $0x3a0] sm:$0xff]
    %v171 = vld [vmem:[#allocation2 + $0x3a8] sm:$0xff]
    %v172 = vld [vmem:[#allocation2 + $0x3b0] sm:$0xff]
    %v173 = vld [vmem:[#allocation2 + $0x3b8] sm:$0xff]
    %v174 = vld [vmem:[#allocation2 + $0x3c0] sm:$0xff]
    %v175 = vld [vmem:[#allocation2 + $0x3c8] sm:$0xff]
    %v176 = vld [vmem:[#allocation2 + $0x3d0] sm:$0xff]
    %v177 = vld [vmem:[#allocation2 + $0x3d8] sm:$0xff]
    %v178 = vld [vmem:[#allocation2 + $0x3e0] sm:$0xff]
    %v179 = vld [vmem:[#allocation2 + $0x3e8] sm:$0xff]
    %v180 = vld [vmem:[#allocation2 + $0x3f0] sm:$0xff]
    %v181 = vld [vmem:[#allocation2 + $0x3f8] sm:$0xff]
    %v182 = vld [vmem:[#allocation2 + $0x400] sm:$0xff]
    %v183 = vld [vmem:[#allocation2 + $0x408] sm:$0xff]
    %v184 = vld [vmem:[#allocation2 + $0x410] sm:$0xff]
    %v185 = vld [vmem:[#allocation2 + $0x418] sm:$0xff]
    %v186 = vld [vmem:[#allocation2 + $0x420] sm:$0xff]
    %v187 = vld [vmem:[#allocation2 + $0x428] sm:$0xff]
    %v188 = vld [vmem:[#allocation2 + $0x430] sm:$0xff]
    %v189 = vld [vmem:[#allocation2 + $0x438] sm:$0xff]
    %v190 = vld [vmem:[#allocation2 + $0x440] sm:$0xff]
    %v191 = vld [vmem:[#allocation2 + $0x448] sm:$0xff]
    %v192 = vld [vmem:[#allocation2 + $0x450] sm:$0xff]
    %v193 = vld [vmem:[#allocation2 + $0x458] sm:$0xff]
    %v194 = vld [vmem:[#allocation2 + $0x460] sm:$0xff]
    %v195 = vld [vmem:[#allocation2 + $0x468] sm:$0xff]
    %v196 = vld [vmem:[#allocation2 + $0x470] sm:$0xff]
    %v197 = vld [vmem:[#allocation2 + $0x478] sm:$0xff]
    %v198 = vld [vmem:[#allocation2 + $0x480] sm:$0xff]
    %v199 = vld [vmem:[#allocation2 + $0x488] sm:$0xff]
    %v200 = vld [vmem:[#allocation2 + $0x490] sm:$0xff]
    %v201 = vld [vmem:[#allocation2 + $0x498] sm:$0xff]
    %v202 = vld [vmem:[#allocation2 + $0x4a0] sm:$0xff]
    %v203 = vld [vmem:[#allocation2 + $0x4a8] sm:$0xff]
    %v204 = vld [vmem:[#allocation2 + $0x4b0] sm:$0xff]
    %v205 = vld [vmem:[#allocation2 + $0x4b8] sm:$0xff]
    %v206 = vld [vmem:[#allocation2 + $0x4c0] sm:$0xff]
    %v207 = vld [vmem:[#allocation2 + $0x4c8] sm:$0xff]
    %v208 = vld [vmem:[#allocation2 + $0x4d0] sm:$0xff]
    %v209 = vld [vmem:[#allocation2 + $0x4d8] sm:$0xff]
    %v210 = vld [vmem:[#allocation2 + $0x4e0] sm:$0xff]
    %v211 = vld [vmem:[#allocation2 + $0x4e8] sm:$0xff]
    %v212 = vld [vmem:[#allocation2 + $0x4f0] sm:$0xff]
    %v213 = vld [vmem:[#allocation2 + $0x4f8] sm:$0xff]
    %v214 = vld [vmem:[#allocation2 + $0x500] sm:$0xff]
    %v215 = vld [vmem:[#allocation2 + $0x508] sm:$0xff]
    %v216 = vld [vmem:[#allocation2 + $0x510] sm:$0xff]
    %v217 = vld [vmem:[#allocation2 + $0x518] sm:$0xff]
    %v218 = vld [vmem:[#allocation2 + $0x520] sm:$0xff]
    %v219 = vld [vmem:[#allocation2 + $0x528] sm:$0xff]
    %v220 = vld [vmem:[#allocation2 + $0x530] sm:$0xff]
    %v221 = vld [vmem:[#allocation2 + $0x538] sm:$0xff]
    %v222 = vld [vmem:[#allocation2 + $0x540] sm:$0xff]
    %v223 = vld [vmem:[#allocation2 + $0x548] sm:$0xff]
    %v224 = vld [vmem:[#allocation2 + $0x550] sm:$0xff]
    %v225 = vld [vmem:[#allocation2 + $0x558] sm:$0xff]
    %v226 = vld [vmem:[#allocation2 + $0x560] sm:$0xff]
    %v227 = vld [vmem:[#allocation2 + $0x568] sm:$0xff]
    %v228 = vld [vmem:[#allocation2 + $0x570] sm:$0xff]
    %v229 = vld [vmem:[#allocation2 + $0x578] sm:$0xff]
    %v230 = vld [vmem:[#allocation2 + $0x580] sm:$0xff]
    %v231 = vld [vmem:[#allocation2 + $0x588] sm:$0xff]
    %v232 = vld [vmem:[#allocation2 + $0x590] sm:$0xff]
    %v233 = vld [vmem:[#allocation2 + $0x598] sm:$0xff]
    %v234 = vld [vmem:[#allocation2 + $0x5a0] sm:$0xff]
    %v235 = vld [vmem:[#allocation2 + $0x5a8] sm:$0xff]
    %v236 = vld [vmem:[#allocation2 + $0x5b0] sm:$0xff]
    %v237 = vld [vmem:[#allocation2 + $0x5b8] sm:$0xff]
    %v238 = vld [vmem:[#allocation2 + $0x5c0] sm:$0xff]
    %v239 = vld [vmem:[#allocation2 + $0x5c8] sm:$0xff]
    %v240 = vld [vmem:[#allocation2 + $0x5d0] sm:$0xff]
    %v241 = vld [vmem:[#allocation2 + $0x5d8] sm:$0xff]
    %v242 = vld [vmem:[#allocation2 + $0x5e0] sm:$0xff]
    %v243 = vld [vmem:[#allocation2 + $0x5e8] sm:$0xff]
    %v244 = vld [vmem:[#allocation2 + $0x5f0] sm:$0xff]
    %v245 = vld [vmem:[#allocation2 + $0x5f8] sm:$0xff]
    %v246 = vld [vmem:[#allocation2 + $0x600] sm:$0xff]
    %v247 = vld [vmem:[#allocation2 + $0x608] sm:$0xff]
    %v248 = vld [vmem:[#allocation2 + $0x610] sm:$0xff]
    %v249 = vld [vmem:[#allocation2 + $0x618] sm:$0xff]
    %v250 = vld [vmem:[#allocation2 + $0x620] sm:$0xff]
    %v251 = vld [vmem:[#allocation2 + $0x628] sm:$0xff]
    %v252 = vld [vmem:[#allocation2 + $0x630] sm:$0xff]
    %v253 = vld [vmem:[#allocation2 + $0x638] sm:$0xff]
    %v254 = vld [vmem:[#allocation2 + $0x640] sm:$0xff]
    %v255 = vld [vmem:[#allocation2 + $0x648] sm:$0xff]
    %v256 = vld [vmem:[#allocation2 + $0x650] sm:$0xff]
    %v257 = vld [vmem:[#allocation2 + $0x658] sm:$0xff]
    %v258 = vld [vmem:[#allocation2 + $0x660] sm:$0xff]
    %v259 = vld [vmem:[#allocation2 + $0x668] sm:$0xff]
    %v260 = vld [vmem:[#allocation2 + $0x670] sm:$0xff]
    %v261 = vld [vmem:[#allocation2 + $0x678] sm:$0xff]
    %v262 = vld [vmem:[#allocation2 + $0x680] sm:$0xff]
    %v263 = vld [vmem:[#allocation2 + $0x688] sm:$0xff]
    %v264 = vld [vmem:[#allocation2 + $0x690] sm:$0xff]
    %v265 = vld [vmem:[#allocation2 + $0x698] sm:$0xff]
    %v266 = vld [vmem:[#allocation2 + $0x6a0] sm:$0xff]
    %v267 = vld [vmem:[#allocation2 + $0x6a8] sm:$0xff]
    %v268 = vld [vmem:[#allocation2 + $0x6b0] sm:$0xff]
    %v269 = vld [vmem:[#allocation2 + $0x6b8] sm:$0xff]
    %v270 = vld [vmem:[#allocation2 + $0x6c0] sm:$0xff]
    %v271 = vld [vmem:[#allocation2 + $0x6c8] sm:$0xff]
    %v272 = vld [vmem:[#allocation2 + $0x6d0] sm:$0xff]
    %v273 = vld [vmem:[#allocation2 + $0x6d8] sm:$0xff]
    %v274 = vld [vmem:[#allocation2 + $0x6e0] sm:$0xff]
    %v275 = vld [vmem:[#allocation2 + $0x6e8] sm:$0xff]
    %v276 = vld [vmem:[#allocation2 + $0x6f0] sm:$0xff]
    %v277 = vld [vmem:[#allocation2 + $0x6f8] sm:$0xff]
    %v278 = vld [vmem:[#allocation2 + $0x700] sm:$0xff]
    %v279 = vld [vmem:[#allocation2 + $0x708] sm:$0xff]
    %v280 = vld [vmem:[#allocation2 + $0x710] sm:$0xff]
    %v281 = vld [vmem:[#allocation2 + $0x718] sm:$0xff]
    %v282 = vld [vmem:[#allocation2 + $0x720] sm:$0xff]
    %v283 = vld [vmem:[#allocation2 + $0x728] sm:$0xff]
    %v284 = vld [vmem:[#allocation2 + $0x730] sm:$0xff]
    %v285 = vld [vmem:[#allocation2 + $0x738] sm:$0xff]
    %v286 = vld [vmem:[#allocation2 + $0x740] sm:$0xff]
    %v287 = vld [vmem:[#allocation2 + $0x748] sm:$0xff]
    %v288 = vld [vmem:[#allocation2 + $0x750] sm:$0xff]
    %v289 = vld [vmem:[#allocation2 + $0x758] sm:$0xff]
    %v290 = vld [vmem:[#allocation2 + $0x760] sm:$0xff]
    %v291 = vld [vmem:[#allocation2 + $0x768] sm:$0xff]
    %v292 = vld [vmem:[#allocation2 + $0x770] sm:$0xff]
    %v293 = vld [vmem:[#allocation2 + $0x778] sm:$0xff]
    %v294 = vld [vmem:[#allocation2 + $0x780] sm:$0xff]
    %v295 = vld [vmem:[#allocation2 + $0x788] sm:$0xff]
    %v296 = vld [vmem:[#allocation2 + $0x790] sm:$0xff]
    %v297 = vld [vmem:[#allocation2 + $0x798] sm:$0xff]
    %v298 = vld [vmem:[#allocation2 + $0x7a0] sm:$0xff]
    %v299 = vld [vmem:[#allocation2 + $0x7a8] sm:$0xff]
    %v300 = vld [vmem:[#allocation2 + $0x7b0] sm:$0xff]
    %v301 = vld [vmem:[#allocation2 + $0x7b8] sm:$0xff]
    %v302 = vld [vmem:[#allocation2 + $0x7c0] sm:$0xff]
    %v303 = vld [vmem:[#allocation2 + $0x7c8] sm:$0xff]
    %v304 = vld [vmem:[#allocation2 + $0x7d0] sm:$0xff]
    %v305 = vld [vmem:[#allocation2 + $0x7d8] sm:$0xff]
    %v306 = vld [vmem:[#allocation2 + $0x7e0] sm:$0xff]
    %v307 = vld [vmem:[#allocation2 + $0x7e8] sm:$0xff]
    %v308 = vld [vmem:[#allocation2 + $0x7f0] sm:$0xff]
    %v309 = vld [vmem:[#allocation2 + $0x7f8] sm:$0xff]
    %v310 = vld [vmem:[#allocation2 + $0x800] sm:$0xff]
    %v311 = vld [vmem:[#allocation2 + $0x808] sm:$0xff]
    %v312 = vld [vmem:[#allocation2 + $0x810] sm:$0xff]
    %v313 = vld [vmem:[#allocation2 + $0x818] sm:$0xff]
    %v314 = vld [vmem:[#allocation2 + $0x820] sm:$0xff]
    %v315 = vld [vmem:[#allocation2 + $0x828] sm:$0xff]
    %v316 = vld [vmem:[#allocation2 + $0x830] sm:$0xff]
    %v317 = vld [vmem:[#allocation2 + $0x838] sm:$0xff]
    %v318 = vld [vmem:[#allocation2 + $0x840] sm:$0xff]
    %v319 = vld [vmem:[#allocation2 + $0x848] sm:$0xff]
    %v320 = vld [vmem:[#allocation2 + $0x850] sm:$0xff]
    %v321 = vld [vmem:[#allocation2 + $0x858] sm:$0xff]
    %v322 = vld [vmem:[#allocation2 + $0x860] sm:$0xff]
    %v323 = vld [vmem:[#allocation2 + $0x868] sm:$0xff]
    %v324 = vld [vmem:[#allocation2 + $0x870] sm:$0xff]
    %v325 = vld [vmem:[#allocation2 + $0x878] sm:$0xff]
    %v326 = vld [vmem:[#allocation2 + $0x880] sm:$0xff]
    %v327 = vld [vmem:[#allocation2 + $0x888] sm:$0xff]
    %v328 = vld [vmem:[#allocation2 + $0x890] sm:$0xff]
    %v329 = vld [vmem:[#allocation2 + $0x898] sm:$0xff]
    %v330 = vld [vmem:[#allocation2 + $0x8a0] sm:$0xff]
    %v331 = vld [vmem:[#allocation2 + $0x8a8] sm:$0xff]
    %v332 = vld [vmem:[#allocation2 + $0x8b0] sm:$0xff]
    %v333 = vld [vmem:[#allocation2 + $0x8b8] sm:$0xff]
    %v334 = vld [vmem:[#allocation2 + $0x8c0] sm:$0xff]
    %v335 = vld [vmem:[#allocation2 + $0x8c8] sm:$0xff]
    %v336 = vld [vmem:[#allocation2 + $0x8d0] sm:$0xff]
    %v337 = vld [vmem:[#allocation2 + $0x8d8] sm:$0xff]
    %v338 = vld [vmem:[#allocation2 + $0x8e0] sm:$0xff]
    %v339 = vld [vmem:[#allocation2 + $0x8e8] sm:$0xff]
    %v340 = vld [vmem:[#allocation2 + $0x8f0] sm:$0xff]
    %v341 = vld [vmem:[#allocation2 + $0x8f8] sm:$0xff]
    %v342 = vld [vmem:[#allocation2 + $0x900] sm:$0xff]
    %v343 = vld [vmem:[#allocation2 + $0x908] sm:$0xff]
    %v344 = vld [vmem:[#allocation2 + $0x910] sm:$0xff]
    %v345 = vld [vmem:[#allocation2 + $0x918] sm:$0xff]
    %v346 = vld [vmem:[#allocation2 + $0x920] sm:$0xff]
    %v347 = vld [vmem:[#allocation2 + $0x928] sm:$0xff]
    %v348 = vld [vmem:[#allocation2 + $0x930] sm:$0xff]
    %v349 = vld [vmem:[#allocation2 + $0x938] sm:$0xff]
    %v350 = vld [vmem:[#allocation2 + $0x940] sm:$0xff]
    %v351 = vld [vmem:[#allocation2 + $0x948] sm:$0xff]
    %v352 = vld [vmem:[#allocation2 + $0x950] sm:$0xff]
    %v353 = vld [vmem:[#allocation2 + $0x958] sm:$0xff]
    %v354 = vld [vmem:[#allocation2 + $0x960] sm:$0xff]
    %v355 = vld [vmem:[#allocation2 + $0x968] sm:$0xff]
    %v356 = vld [vmem:[#allocation2 + $0x970] sm:$0xff]
    %v357 = vld [vmem:[#allocation2 + $0x978] sm:$0xff]
    %v358 = vld [vmem:[#allocation2 + $0x980] sm:$0xff]
    %v359 = vld [vmem:[#allocation2 + $0x988] sm:$0xff]
    %v360 = vld [vmem:[#allocation2 + $0x990] sm:$0xff]
    %v361 = vld [vmem:[#allocation2 + $0x998] sm:$0xff]
    %v362 = vld [vmem:[#allocation2 + $0x9a0] sm:$0xff]
    %v363 = vld [vmem:[#allocation2 + $0x9a8] sm:$0xff]
    %v364 = vld [vmem:[#allocation2 + $0x9b0] sm:$0xff]
    %v365 = vld [vmem:[#allocation2 + $0x9b8] sm:$0xff]
    %v366 = vld [vmem:[#allocation2 + $0x9c0] sm:$0xff]
    %v367 = vld [vmem:[#allocation2 + $0x9c8] sm:$0xff]
    %v368 = vld [vmem:[#allocation2 + $0x9d0] sm:$0xff]
    %v369 = vld [vmem:[#allocation2 + $0x9d8] sm:$0xff]
    %v370 = vld [vmem:[#allocation2 + $0x9e0] sm:$0xff]
    %v371 = vld [vmem:[#allocation2 + $0x9e8] sm:$0xff]
    %v372 = vld [vmem:[#allocation2 + $0x9f0] sm:$0xff]
    %v373 = vld [vmem:[#allocation2 + $0x9f8] sm:$0xff]
    %v374 = vld [vmem:[#allocation2 + $0xa00] sm:$0xff]
    %v375 = vld [vmem:[#allocation2 + $0xa08] sm:$0xff]
    %v376 = vld [vmem:[#allocation2 + $0xa10] sm:$0xff]
    %v377 = vld [vmem:[#allocation2 + $0xa18] sm:$0xff]
    %v378 = vld [vmem:[#allocation2 + $0xa20] sm:$0xff]
    %v379 = vld [vmem:[#allocation2 + $0xa28] sm:$0xff]
    %v380 = vld [vmem:[#allocation2 + $0xa30] sm:$0xff]
    %v381 = vld [vmem:[#allocation2 + $0xa38] sm:$0xff]
    %v382 = vld [vmem:[#allocation2 + $0xa40] sm:$0xff]
    %v383 = vld [vmem:[#allocation2 + $0xa48] sm:$0xff]
    %v384 = vld [vmem:[#allocation2 + $0xa50] sm:$0xff]
    %v385 = vld [vmem:[#allocation2 + $0xa58] sm:$0xff]
    %v386 = vld [vmem:[#allocation2 + $0xa60] sm:$0xff]
    %v387 = vld [vmem:[#allocation2 + $0xa68] sm:$0xff]
    %v388 = vld [vmem:[#allocation2 + $0xa70] sm:$0xff]
    %v389 = vld [vmem:[#allocation2 + $0xa78] sm:$0xff]
    %v390 = vld [vmem:[#allocation2 + $0xa80] sm:$0xff]
    %v391 = vld [vmem:[#allocation2 + $0xa88] sm:$0xff]
    %v392 = vld [vmem:[#allocation2 + $0xa90] sm:$0xff]
    %v393 = vld [vmem:[#allocation2 + $0xa98] sm:$0xff]
    %v394 = vld [vmem:[#allocation2 + $0xaa0] sm:$0xff]
    %v395 = vld [vmem:[#allocation2 + $0xaa8] sm:$0xff]
    %v396 = vld [vmem:[#allocation2 + $0xab0] sm:$0xff]
    %v397 = vld [vmem:[#allocation2 + $0xab8] sm:$0xff]
    %v398 = vld [vmem:[#allocation2 + $0xac0] sm:$0xff]
    %v399 = vld [vmem:[#allocation2 + $0xac8] sm:$0xff]
    %v400 = vld [vmem:[#allocation2 + $0xad0] sm:$0xff]
    %v401 = vld [vmem:[#allocation2 + $0xad8] sm:$0xff]
    %v402 = vld [vmem:[#allocation2 + $0xae0] sm:$0xff]
    %v403 = vld [vmem:[#allocation2 + $0xae8] sm:$0xff]
    %v404 = vld [vmem:[#allocation2 + $0xaf0] sm:$0xff]
    %v405 = vld [vmem:[#allocation2 + $0xaf8] sm:$0xff]
    %v406 = vld [vmem:[#allocation2 + $0xb00] sm:$0xff]
    %v407 = vld [vmem:[#allocation2 + $0xb08] sm:$0xff]
    %v408 = vld [vmem:[#allocation2 + $0xb10] sm:$0xff]
    %v409 = vld [vmem:[#allocation2 + $0xb18] sm:$0xff]
    %v410 = vld [vmem:[#allocation2 + $0xb20] sm:$0xff]
    %v411 = vld [vmem:[#allocation2 + $0xb28] sm:$0xff]
    %v412 = vld [vmem:[#allocation2 + $0xb30] sm:$0xff]
    %v413 = vld [vmem:[#allocation2 + $0xb38] sm:$0xff]
    %v414 = vld [vmem:[#allocation2 + $0xb40] sm:$0xff]
    %v415 = vld [vmem:[#allocation2 + $0xb48] sm:$0xff]
    %v416 = vld [vmem:[#allocation2 + $0xb50] sm:$0xff]
    %v417 = vld [vmem:[#allocation2 + $0xb58] sm:$0xff]
    %v418 = vld [vmem:[#allocation2 + $0xb60] sm:$0xff]
    %v419 = vld [vmem:[#allocation2 + $0xb68] sm:$0xff]
    %v420 = vld [vmem:[#allocation2 + $0xb70] sm:$0xff]
    %v421 = vld [vmem:[#allocation2 + $0xb78] sm:$0xff]
    %v422 = vld [vmem:[#allocation2 + $0xb80] sm:$0xff]
    %v423 = vld [vmem:[#allocation2 + $0xb88] sm:$0xff]
    %v424 = vld [vmem:[#allocation2 + $0xb90] sm:$0xff]
    %v425 = vld [vmem:[#allocation2 + $0xb98] sm:$0xff]
    %v426 = vld [vmem:[#allocation2 + $0xba0] sm:$0xff]
    %v427 = vld [vmem:[#allocation2 + $0xba8] sm:$0xff]
    %v428 = vld [vmem:[#allocation2 + $0xbb0] sm:$0xff]
    %v429 = vld [vmem:[#allocation2 + $0xbb8] sm:$0xff]
    %v430 = vld [vmem:[#allocation2 + $0xbc0] sm:$0xff]
    %v431 = vld [vmem:[#allocation2 + $0xbc8] sm:$0xff]
    %v432 = vld [vmem:[#allocation2 + $0xbd0] sm:$0xff]
    %v433 = vld [vmem:[#allocation2 + $0xbd8] sm:$0xff]
    %v434 = vld [vmem:[#allocation2 + $0xbe0] sm:$0xff]
    %v435 = vld [vmem:[#allocation2 + $0xbe8] sm:$0xff]
    %v436 = vld [vmem:[#allocation2 + $0xbf0] sm:$0xff]
    %v437 = vld [vmem:[#allocation2 + $0xbf8] sm:$0xff]
    %v438 = vld [vmem:[#allocation2 + $0xc00] sm:$0xff]
    %v439 = vld [vmem:[#allocation2 + $0xc08] sm:$0xff]
    %v440 = vld [vmem:[#allocation2 + $0xc10] sm:$0xff]
    %v441 = vld [vmem:[#allocation2 + $0xc18] sm:$0xff]
    %v442 = vld [vmem:[#allocation2 + $0xc20] sm:$0xff]
    %v443 = vld [vmem:[#allocation2 + $0xc28] sm:$0xff]
    %v444 = vld [vmem:[#allocation2 + $0xc30] sm:$0xff]
    %v445 = vld [vmem:[#allocation2 + $0xc38] sm:$0xff]
    %v446 = vld [vmem:[#allocation2 + $0xc40] sm:$0xff]
    %v447 = vld [vmem:[#allocation2 + $0xc48] sm:$0xff]
    %v448 = vld [vmem:[#allocation2 + $0xc50] sm:$0xff]
    %v449 = vld [vmem:[#allocation2 + $0xc58] sm:$0xff]
    %v450 = vld [vmem:[#allocation2 + $0xc60] sm:$0xff]
    %v451 = vld [vmem:[#allocation2 + $0xc68] sm:$0xff]
    %v452 = vld [vmem:[#allocation2 + $0xc70] sm:$0xff]
    %v453 = vld [vmem:[#allocation2 + $0xc78] sm:$0xff]
    %v454 = vld [vmem:[#allocation2 + $0xc80] sm:$0xff]
    %v455 = vld [vmem:[#allocation2 + $0xc88] sm:$0xff]
    %v456 = vld [vmem:[#allocation2 + $0xc90] sm:$0xff]
    %v457 = vld [vmem:[#allocation2 + $0xc98] sm:$0xff]
    %v458 = vld [vmem:[#allocation2 + $0xca0] sm:$0xff]
    %v459 = vld [vmem:[#allocation2 + $0xca8] sm:$0xff]
    %v460 = vld [vmem:[#allocation2 + $0xcb0] sm:$0xff]
    %v461 = vld [vmem:[#allocation2 + $0xcb8] sm:$0xff]
    %v462 = vld [vmem:[#allocation2 + $0xcc0] sm:$0xff]
    %v463 = vld [vmem:[#allocation2 + $0xcc8] sm:$0xff]
    %v464 = vld [vmem:[#allocation2 + $0xcd0] sm:$0xff]
    %v465 = vld [vmem:[#allocation2 + $0xcd8] sm:$0xff]
    %v466 = vld [vmem:[#allocation2 + $0xce0] sm:$0xff]
    %v467 = vld [vmem:[#allocation2 + $0xce8] sm:$0xff]
    %v468 = vld [vmem:[#allocation2 + $0xcf0] sm:$0xff]
    %v469 = vld [vmem:[#allocation2 + $0xcf8] sm:$0xff]
    %v470 = vld [vmem:[#allocation2 + $0xd00] sm:$0xff]
    %v471 = vld [vmem:[#allocation2 + $0xd08] sm:$0xff]
    %v472 = vld [vmem:[#allocation2 + $0xd10] sm:$0xff]
    %v473 = vld [vmem:[#allocation2 + $0xd18] sm:$0xff]
    %v474 = vld [vmem:[#allocation2 + $0xd20] sm:$0xff]
    %v475 = vld [vmem:[#allocation2 + $0xd28] sm:$0xff]
    %v476 = vld [vmem:[#allocation2 + $0xd30] sm:$0xff]
    %v477 = vld [vmem:[#allocation2 + $0xd38] sm:$0xff]
    %v478 = vld [vmem:[#allocation2 + $0xd40] sm:$0xff]
    %v479 = vld [vmem:[#allocation2 + $0xd48] sm:$0xff]
    %v480 = vld [vmem:[#allocation2 + $0xd50] sm:$0xff]
    %v481 = vld [vmem:[#allocation2 + $0xd58] sm:$0xff]
    %v482 = vld [vmem:[#allocation2 + $0xd60] sm:$0xff]
    %v483 = vld [vmem:[#allocation2 + $0xd68] sm:$0xff]
    %v484 = vld [vmem:[#allocation2 + $0xd70] sm:$0xff]
    %v485 = vld [vmem:[#allocation2 + $0xd78] sm:$0xff]
    %v486 = vld [vmem:[#allocation2 + $0xd80] sm:$0xff]
    %v487 = vld [vmem:[#allocation2 + $0xd88] sm:$0xff]
    %v488 = vld [vmem:[#allocation2 + $0xd90] sm:$0xff]
    %v489 = vld [vmem:[#allocation2 + $0xd98] sm:$0xff]
    %v490 = vld [vmem:[#allocation2 + $0xda0] sm:$0xff]
    %v491 = vld [vmem:[#allocation2 + $0xda8] sm:$0xff]
    %v492 = vld [vmem:[#allocation2 + $0xdb0] sm:$0xff]
    %v493 = vld [vmem:[#allocation2 + $0xdb8] sm:$0xff]
    %v494 = vld [vmem:[#allocation2 + $0xdc0] sm:$0xff]
    %v495 = vld [vmem:[#allocation2 + $0xdc8] sm:$0xff]
    %v496 = vld [vmem:[#allocation2 + $0xdd0] sm:$0xff]
    %v497 = vld [vmem:[#allocation2 + $0xdd8] sm:$0xff]
    %v498 = vld [vmem:[#allocation2 + $0xde0] sm:$0xff]
    %v499 = vld [vmem:[#allocation2 + $0xde8] sm:$0xff]
    %v500 = vld [vmem:[#allocation2 + $0xdf0] sm:$0xff]
    %v501 = vld [vmem:[#allocation2 + $0xdf8] sm:$0xff]
    %v502 = vld [vmem:[#allocation2 + $0xe00] sm:$0xff]
    %v503 = vld [vmem:[#allocation2 + $0xe08] sm:$0xff]
    %v504 = vld [vmem:[#allocation2 + $0xe10] sm:$0xff]
    %v505 = vld [vmem:[#allocation2 + $0xe18] sm:$0xff]
    %v506 = vld [vmem:[#allocation2 + $0xe20] sm:$0xff]
    %v507 = vld [vmem:[#allocation2 + $0xe28] sm:$0xff]
    %v508 = vld [vmem:[#allocation2 + $0xe30] sm:$0xff]
    %v509 = vld [vmem:[#allocation2 + $0xe38] sm:$0xff]
    %v510 = vld [vmem:[#allocation2 + $0xe40] sm:$0xff]
    %v511 = vld [vmem:[#allocation2 + $0xe48] sm:$0xff]
    %v512 = vld [vmem:[#allocation2 + $0xe50] sm:$0xff]
    %v513 = vld [vmem:[#allocation2 + $0xe58] sm:$0xff]
    %v514 = vld [vmem:[#allocation2 + $0xe60] sm:$0xff]
    %v515 = vld [vmem:[#allocation2 + $0xe68] sm:$0xff]
    %v516 = vld [vmem:[#allocation2 + $0xe70] sm:$0xff]
    %v517 = vld [vmem:[#allocation2 + $0xe78] sm:$0xff]
    %v518 = vld [vmem:[#allocation2 + $0xe80] sm:$0xff]
    %v519 = vld [vmem:[#allocation2 + $0xe88] sm:$0xff]
    %v520 = vld [vmem:[#allocation2 + $0xe90] sm:$0xff]
    %v521 = vld [vmem:[#allocation2 + $0xe98] sm:$0xff]
    %v522 = vld [vmem:[#allocation2 + $0xea0] sm:$0xff]
    %v523 = vld [vmem:[#allocation2 + $0xea8] sm:$0xff]
    %v524 = vld [vmem:[#allocation2 + $0xeb0] sm:$0xff]
    %v525 = vld [vmem:[#allocation2 + $0xeb8] sm:$0xff]
    %v526 = vld [vmem:[#allocation2 + $0xec0] sm:$0xff]
    %v527 = vld [vmem:[#allocation2 + $0xec8] sm:$0xff]
    %v528 = vld [vmem:[#allocation2 + $0xed0] sm:$0xff]
    %v529 = vld [vmem:[#allocation2 + $0xed8] sm:$0xff]
    %v530 = vld [vmem:[#allocation2 + $0xee0] sm:$0xff]
    %v531 = vld [vmem:[#allocation2 + $0xee8] sm:$0xff]
    %v532 = vld [vmem:[#allocation2 + $0xef0] sm:$0xff]
    %v533 = vld [vmem:[#allocation2 + $0xef8] sm:$0xff]
    %v534 = vld [vmem:[#allocation2 + $0xf00] sm:$0xff]
    %v535 = vld [vmem:[#allocation2 + $0xf08] sm:$0xff]
    %v536 = vld [vmem:[#allocation2 + $0xf10] sm:$0xff]
    %v537 = vld [vmem:[#allocation2 + $0xf18] sm:$0xff]
    %v538 = vld [vmem:[#allocation2 + $0xf20] sm:$0xff]
    %v539 = vld [vmem:[#allocation2 + $0xf28] sm:$0xff]
    %v540 = vld [vmem:[#allocation2 + $0xf30] sm:$0xff]
    %v541 = vld [vmem:[#allocation2 + $0xf38] sm:$0xff]
    %v542 = vld [vmem:[#allocation2 + $0xf40] sm:$0xff]
    %v543 = vld [vmem:[#allocation2 + $0xf48] sm:$0xff]
    %v544 = vld [vmem:[#allocation2 + $0xf50] sm:$0xff]
    %v545 = vld [vmem:[#allocation2 + $0xf58] sm:$0xff]
    %v546 = vld [vmem:[#allocation2 + $0xf60] sm:$0xff]
    %v547 = vld [vmem:[#allocation2 + $0xf68] sm:$0xff]
    %v548 = vld [vmem:[#allocation2 + $0xf70] sm:$0xff]
    %v549 = vld [vmem:[#allocation2 + $0xf78] sm:$0xff]
    %v550 = vld [vmem:[#allocation2 + $0xf80] sm:$0xff]
    %v551 = vld [vmem:[#allocation2 + $0xf88] sm:$0xff]
    %v552 = vld [vmem:[#allocation2 + $0xf90] sm:$0xff]
    %v553 = vld [vmem:[#allocation2 + $0xf98] sm:$0xff]
    %v554 = vld [vmem:[#allocation2 + $0xfa0] sm:$0xff]
    %v555 = vld [vmem:[#allocation2 + $0xfa8] sm:$0xff]
    %v556 = vld [vmem:[#allocation2 + $0xfb0] sm:$0xff]
    %v557 = vld [vmem:[#allocation2 + $0xfb8] sm:$0xff]
    %v558 = vld [vmem:[#allocation2 + $0xfc0] sm:$0xff]
    %v559 = vld [vmem:[#allocation2 + $0xfc8] sm:$0xff]
    %v560 = vld [vmem:[#allocation2 + $0xfd0] sm:$0xff]
    %v561 = vld [vmem:[#allocation2 + $0xfd8] sm:$0xff]
    %v562 = vld [vmem:[#allocation2 + $0xfe0] sm:$0xff]
    %v563 = vld [vmem:[#allocation2 + $0xfe8] sm:$0xff]
    %v564 = vld [vmem:[#allocation2 + $0xff0] sm:$0xff]
    %v565 = vld [vmem:[#allocation2 + $0xff8] sm:$0xff]
    %v566 = vld [vmem:[#allocation2 + $0x1000] sm:$0xff]
    %v567 = vld [vmem:[#allocation2 + $0x1008] sm:$0xff]
    %v568 = vld [vmem:[#allocation2 + $0x1010] sm:$0xff]
    %v569 = vld [vmem:[#allocation2 + $0x1018] sm:$0xff]
    %v570 = vld [vmem:[#allocation2 + $0x1020] sm:$0xff]
    %v571 = vld [vmem:[#allocation2 + $0x1028] sm:$0xff]
    %v572 = vld [vmem:[#allocation2 + $0x1030] sm:$0xff]
    %v573 = vld [vmem:[#allocation2 + $0x1038] sm:$0xff]
    %v574 = vld [vmem:[#allocation2 + $0x1040] sm:$0xff]
    %v575 = vld [vmem:[#allocation2 + $0x1048] sm:$0xff]
    %v576 = vld [vmem:[#allocation2 + $0x1050] sm:$0xff]
    %v577 = vld [vmem:[#allocation2 + $0x1058] sm:$0xff]
    %v578 = vld [vmem:[#allocation2 + $0x1060] sm:$0xff]
    %v579 = vld [vmem:[#allocation2 + $0x1068] sm:$0xff]
    %v580 = vld [vmem:[#allocation2 + $0x1070] sm:$0xff]
    %v581 = vld [vmem:[#allocation2 + $0x1078] sm:$0xff]
    %v582 = vld [vmem:[#allocation2 + $0x1080] sm:$0xff]
    %v583 = vld [vmem:[#allocation2 + $0x1088] sm:$0xff]
    %v584 = vld [vmem:[#allocation2 + $0x1090] sm:$0xff]
    %v585 = vld [vmem:[#allocation2 + $0x1098] sm:$0xff]
    %v586 = vld [vmem:[#allocation2 + $0x10a0] sm:$0xff]
    %v587 = vld [vmem:[#allocation2 + $0x10a8] sm:$0xff]
    %v588 = vld [vmem:[#allocation2 + $0x10b0] sm:$0xff]
    %v589 = vld [vmem:[#allocation2 + $0x10b8] sm:$0xff]
    %v590 = vld [vmem:[#allocation2 + $0x10c0] sm:$0xff]
    %v591 = vld [vmem:[#allocation2 + $0x10c8] sm:$0xff]
    %v592 = vld [vmem:[#allocation2 + $0x10d0] sm:$0xff]
    %v593 = vld [vmem:[#allocation2 + $0x10d8] sm:$0xff]
    %v594 = vld [vmem:[#allocation2 + $0x10e0] sm:$0xff]
    %v595 = vld [vmem:[#allocation2 + $0x10e8] sm:$0xff]
    %v596 = vld [vmem:[#allocation2 + $0x10f0] sm:$0xff]
    %v597 = vld [vmem:[#allocation2 + $0x10f8] sm:$0xff]
    %v598 = vld [vmem:[#allocation2 + $0x1100] sm:$0xff]
    %v599 = vld [vmem:[#allocation2 + $0x1108] sm:$0xff]
    %v600 = vld [vmem:[#allocation2 + $0x1110] sm:$0xff]
    %v601 = vld [vmem:[#allocation2 + $0x1118] sm:$0xff]
    %v602 = vld [vmem:[#allocation2 + $0x1120] sm:$0xff]
    %v603 = vld [vmem:[#allocation2 + $0x1128] sm:$0xff]
    %v604 = vld [vmem:[#allocation2 + $0x1130] sm:$0xff]
    %v605 = vld [vmem:[#allocation2 + $0x1138] sm:$0xff]
    %v606 = vld [vmem:[#allocation2 + $0x1140] sm:$0xff]
    %v607 = vld [vmem:[#allocation2 + $0x1148] sm:$0xff]
    %v608 = vld [vmem:[#allocation2 + $0x1150] sm:$0xff]
    %v609 = vld [vmem:[#allocation2 + $0x1158] sm:$0xff]
    %v610 = vld [vmem:[#allocation2 + $0x1160] sm:$0xff]
    %v611 = vld [vmem:[#allocation2 + $0x1168] sm:$0xff]
    %v612 = vld [vmem:[#allocation2 + $0x1170] sm:$0xff]
    %v613 = vld [vmem:[#allocation2 + $0x1178] sm:$0xff]
    %v614 = vld [vmem:[#allocation2 + $0x1180] sm:$0xff]
    %v615 = vld [vmem:[#allocation2 + $0x1188] sm:$0xff]
    %v616 = vld [vmem:[#allocation2 + $0x1190] sm:$0xff]
    %v617 = vld [vmem:[#allocation2 + $0x1198] sm:$0xff]
    %v618 = vld [vmem:[#allocation2 + $0x11a0] sm:$0xff]
    %v619 = vld [vmem:[#allocation2 + $0x11a8] sm:$0xff]
    %v620 = vld [vmem:[#allocation2 + $0x11b0] sm:$0xff]
    %v621 = vld [vmem:[#allocation2 + $0x11b8] sm:$0xff]
    %v622 = vld [vmem:[#allocation2 + $0x11c0] sm:$0xff]
    %v623 = vld [vmem:[#allocation2 + $0x11c8] sm:$0xff]
    %v624 = vld [vmem:[#allocation2 + $0x11d0] sm:$0xff]
    %v625 = vld [vmem:[#allocation2 + $0x11d8] sm:$0xff]
    %v626 = vld [vmem:[#allocation2 + $0x11e0] sm:$0xff]
    %v627 = vld [vmem:[#allocation2 + $0x11e8] sm:$0xff]
    %v628 = vld [vmem:[#allocation2 + $0x11f0] sm:$0xff]
    %v629 = vld [vmem:[#allocation2 + $0x11f8] sm:$0xff]
    %v630 = vld [vmem:[#allocation2 + $0x1200] sm:$0xff]
    %v631 = vld [vmem:[#allocation2 + $0x1208] sm:$0xff]
    %v632 = vld [vmem:[#allocation2 + $0x1210] sm:$0xff]
    %v633 = vld [vmem:[#allocation2 + $0x1218] sm:$0xff]
    %v634 = vld [vmem:[#allocation2 + $0x1220] sm:$0xff]
    %v635 = vld [vmem:[#allocation2 + $0x1228] sm:$0xff]
    %v636 = vld [vmem:[#allocation2 + $0x1230] sm:$0xff]
    %v637 = vld [vmem:[#allocation2 + $0x1238] sm:$0xff]
    %v638 = vld [vmem:[#allocation2 + $0x1240] sm:$0xff]
    %v639 = vld [vmem:[#allocation2 + $0x1248] sm:$0xff]
    %v640 = vld [vmem:[#allocation2 + $0x1250] sm:$0xff]
    %v641 = vld [vmem:[#allocation2 + $0x1258] sm:$0xff]
    %v642 = vld [vmem:[#allocation2 + $0x1260] sm:$0xff]
    %v643 = vld [vmem:[#allocation2 + $0x1268] sm:$0xff]
    %v644 = vld [vmem:[#allocation2 + $0x1270] sm:$0xff]
    %v645 = vld [vmem:[#allocation2 + $0x1278] sm:$0xff]
    %v646 = vld [vmem:[#allocation2 + $0x1280] sm:$0xff]
    %v647 = vld [vmem:[#allocation2 + $0x1288] sm:$0xff]
    %v648 = vld [vmem:[#allocation2 + $0x1290] sm:$0xff]
    %v649 = vld [vmem:[#allocation2 + $0x1298] sm:$0xff]
    %v650 = vld [vmem:[#allocation2 + $0x12a0] sm:$0xff]
    %v651 = vld [vmem:[#allocation2 + $0x12a8] sm:$0xff]
    %v652 = vld [vmem:[#allocation2 + $0x12b0] sm:$0xff]
    %v653 = vld [vmem:[#allocation2 + $0x12b8] sm:$0xff]
    %v654 = vld [vmem:[#allocation2 + $0x12c0] sm:$0xff]
    %v655 = vld [vmem:[#allocation2 + $0x12c8] sm:$0xff]
    %v656 = vld [vmem:[#allocation2 + $0x12d0] sm:$0xff]
    %v657 = vld [vmem:[#allocation2 + $0x12d8] sm:$0xff]
    %v658 = vld [vmem:[#allocation2 + $0x12e0] sm:$0xff]
    %v659 = vld [vmem:[#allocation2 + $0x12e8] sm:$0xff]
    %v660 = vld [vmem:[#allocation2 + $0x12f0] sm:$0xff]
    %v661 = vld [vmem:[#allocation2 + $0x12f8] sm:$0xff]
    %v662 = vld [vmem:[#allocation4] ss:$4 sm:$0xf]
    %v664 = vperm.slane %v662, 0
    %v665 = vperm.slane %v662, 1
    %v666 = vperm.slane %v662, 2
    %v667 = vperm.slane %v662, 3
    %v682 = vunpack.c.l.b16 %v44
    %v683 = vunpack.c.h.b16 %v44
    %v684 = vunpack.c.l.b16 %v45
    %v685 = vunpack.c.h.b16 %v45
    %v686 = vunpack.c.l.b16 %v46
    %v687 = vunpack.c.h.b16 %v46
    %v688 = vunpack.c.l.b16 %v47
    %v689 = vunpack.c.h.b16 %v47
    %v690 = vunpack.c.l.b16 %v48
    %v691 = vunpack.c.h.b16 %v48
    %v692 = vunpack.c.l.b16 %v49
    %v693 = vunpack.c.h.b16 %v49
    %v694 = vunpack.c.l.b16 %v50
    %v695 = vunpack.c.h.b16 %v50
    %v696 = vunpack.c.l.b16 %v51
    %v697 = vunpack.c.h.b16 %v51
    %v698 = vunpack.c.l.b16 %v52
    %v699 = vunpack.c.h.b16 %v52
    %v700 = vunpack.c.l.b16 %v53
    %v701 = vpack.c.b16 %v682, %v682
    %v702 = vpack.c.b16 %v683, %v683
    %v703 = vpack.c.b16 %v684, %v684
    %v704 = vpack.c.b16 %v685, %v685
    %v705 = vpack.c.b16 %v686, %v686
    %v706 = vpack.c.b16 %v687, %v687
    %v707 = vpack.c.b16 %v688, %v688
    %v708 = vpack.c.b16 %v689, %v689
    %v709 = vpack.c.b16 %v690, %v690
    %v710 = vpack.c.b16 %v691, %v691
    %v711 = vpack.c.b16 %v692, %v692
    %v712 = vpack.c.b16 %v693, %v693
    %v713 = vpack.c.b16 %v694, %v694
    %v714 = vpack.c.b16 %v695, %v695
    %v715 = vpack.c.b16 %v696, %v696
    %v716 = vpack.c.b16 %v697, %v697
    %v717 = vpack.c.b16 %v698, %v698
    %v718 = vpack.c.b16 %v699, %v699
    %v719 = vpack.c.b16 %v700, %v700
    %v1347 = vunpack.c.l.b16 %v54
    %v1348 = vunpack.c.h.b16 %v54
    %v1349 = vunpack.c.l.b16 %v55
    %v1350 = vunpack.c.h.b16 %v55
    %v1351 = vunpack.c.l.b16 %v56
    %v1352 = vunpack.c.h.b16 %v56
    %v1353 = vunpack.c.l.b16 %v57
    %v1354 = vunpack.c.h.b16 %v57
    %v1355 = vunpack.c.l.b16 %v58
    %v1356 = vunpack.c.h.b16 %v58
    %v1357 = vunpack.c.l.b16 %v59
    %v1358 = vunpack.c.h.b16 %v59
    %v1359 = vunpack.c.l.b16 %v60
    %v1360 = vunpack.c.h.b16 %v60
    %v1361 = vunpack.c.l.b16 %v61
    %v1362 = vunpack.c.h.b16 %v61
    %v1363 = vunpack.c.l.b16 %v62
    %v1364 = vunpack.c.h.b16 %v62
    %v1365 = vunpack.c.l.b16 %v63
    %v1366 = vunpack.c.h.b16 %v63
    %v1367 = vunpack.c.l.b16 %v64
    %v1368 = vunpack.c.h.b16 %v64
    %v1369 = vunpack.c.l.b16 %v65
    %v1370 = vunpack.c.h.b16 %v65
    %v1371 = vunpack.c.l.b16 %v66
    %v1372 = vunpack.c.h.b16 %v66
    %v1373 = vunpack.c.l.b16 %v67
    %v1374 = vunpack.c.h.b16 %v67
    %v1375 = vunpack.c.l.b16 %v68
    %v1376 = vunpack.c.h.b16 %v68
    %v1377 = vunpack.c.l.b16 %v69
    %v1378 = vunpack.c.h.b16 %v69
    %v1379 = vunpack.c.l.b16 %v70
    %v1380 = vunpack.c.h.b16 %v70
    %v1381 = vunpack.c.l.b16 %v71
    %v1382 = vunpack.c.h.b16 %v71
    %v1383 = vunpack.c.l.b16 %v72
    %v1384 = vunpack.c.h.b16 %v72
    %v1385 = vunpack.c.l.b16 %v73
    %v1386 = vunpack.c.h.b16 %v73
    %v1387 = vunpack.c.l.b16 %v74
    %v1388 = vunpack.c.h.b16 %v74
    %v1389 = vunpack.c.l.b16 %v75
    %v1390 = vunpack.c.h.b16 %v75
    %v1391 = vunpack.c.l.b16 %v76
    %v1392 = vunpack.c.h.b16 %v76
    %v1393 = vunpack.c.l.b16 %v77
    %v1394 = vunpack.c.h.b16 %v77
    %v1395 = vunpack.c.l.b16 %v78
    %v1396 = vunpack.c.h.b16 %v78
    %v1397 = vunpack.c.l.b16 %v79
    %v1398 = vunpack.c.h.b16 %v79
    %v1399 = vunpack.c.l.b16 %v80
    %v1400 = vunpack.c.h.b16 %v80
    %v1401 = vunpack.c.l.b16 %v81
    %v1402 = vunpack.c.h.b16 %v81
    %v1403 = vunpack.c.l.b16 %v82
    %v1404 = vunpack.c.h.b16 %v82
    %v1405 = vunpack.c.l.b16 %v83
    %v1406 = vunpack.c.h.b16 %v83
    %v1407 = vunpack.c.l.b16 %v84
    %v1408 = vunpack.c.h.b16 %v84
    %v1409 = vunpack.c.l.b16 %v85
    %v1410 = vunpack.c.h.b16 %v85
    %v1411 = vunpack.c.l.b16 %v86
    %v1412 = vunpack.c.h.b16 %v86
    %v1413 = vunpack.c.l.b16 %v87
    %v1414 = vunpack.c.h.b16 %v87
    %v1415 = vunpack.c.l.b16 %v88
    %v1416 = vunpack.c.h.b16 %v88
    %v1417 = vunpack.c.l.b16 %v89
    %v1418 = vunpack.c.h.b16 %v89
    %v1419 = vunpack.c.l.b16 %v90
    %v1420 = vunpack.c.h.b16 %v90
    %v1421 = vunpack.c.l.b16 %v91
    %v1422 = vunpack.c.h.b16 %v91
    %v1423 = vunpack.c.l.b16 %v92
    %v1424 = vunpack.c.h.b16 %v92
    %v1425 = vunpack.c.l.b16 %v93
    %v1426 = vunpack.c.h.b16 %v93
    %v1427 = vunpack.c.l.b16 %v94
    %v1428 = vunpack.c.h.b16 %v94
    %v1429 = vunpack.c.l.b16 %v95
    %v1430 = vunpack.c.h.b16 %v95
    %v1431 = vunpack.c.l.b16 %v96
    %v1432 = vunpack.c.h.b16 %v96
    %v1433 = vunpack.c.l.b16 %v97
    %v1434 = vunpack.c.h.b16 %v97
    %v1435 = vunpack.c.l.b16 %v98
    %v1436 = vunpack.c.h.b16 %v98
    %v1437 = vunpack.c.l.b16 %v99
    %v1438 = vunpack.c.h.b16 %v99
    %v1439 = vunpack.c.l.b16 %v100
    %v1440 = vunpack.c.h.b16 %v100
    %v1441 = vunpack.c.l.b16 %v101
    %v1442 = vunpack.c.h.b16 %v101
    %v1443 = vunpack.c.l.b16 %v102
    %v1444 = vunpack.c.h.b16 %v102
    %v1445 = vunpack.c.l.b16 %v103
    %v1446 = vunpack.c.h.b16 %v103
    %v1447 = vunpack.c.l.b16 %v104
    %v1448 = vunpack.c.h.b16 %v104
    %v1449 = vunpack.c.l.b16 %v105
    %v1450 = vunpack.c.h.b16 %v105
    %v1451 = vunpack.c.l.b16 %v106
    %v1452 = vunpack.c.h.b16 %v106
    %v1453 = vunpack.c.l.b16 %v107
    %v1454 = vunpack.c.h.b16 %v107
    %v1455 = vunpack.c.l.b16 %v108
    %v1456 = vunpack.c.h.b16 %v108
    %v1457 = vunpack.c.l.b16 %v109
    %v1458 = vunpack.c.h.b16 %v109
    %v1459 = vunpack.c.l.b16 %v110
    %v1460 = vunpack.c.h.b16 %v110
    %v1461 = vunpack.c.l.b16 %v111
    %v1462 = vunpack.c.h.b16 %v111
    %v1463 = vunpack.c.l.b16 %v112
    %v1464 = vunpack.c.h.b16 %v112
    %v1465 = vunpack.c.l.b16 %v113
    %v1466 = vunpack.c.h.b16 %v113
    %v1467 = vunpack.c.l.b16 %v114
    %v1468 = vunpack.c.h.b16 %v114
    %v1469 = vunpack.c.l.b16 %v115
    %v1470 = vunpack.c.h.b16 %v115
    %v1471 = vunpack.c.l.b16 %v116
    %v1472 = vunpack.c.h.b16 %v116
    %v1473 = vunpack.c.l.b16 %v117
    %v1474 = vunpack.c.h.b16 %v117
    %v1475 = vunpack.c.l.b16 %v118
    %v1476 = vunpack.c.h.b16 %v118
    %v1477 = vunpack.c.l.b16 %v119
    %v1478 = vunpack.c.h.b16 %v119
    %v1479 = vunpack.c.l.b16 %v120
    %v1480 = vunpack.c.h.b16 %v120
    %v1481 = vunpack.c.l.b16 %v121
    %v1482 = vunpack.c.h.b16 %v121
    %v1483 = vunpack.c.l.b16 %v122
    %v1484 = vunpack.c.h.b16 %v122
    %v1485 = vunpack.c.l.b16 %v123
    %v1486 = vunpack.c.h.b16 %v123
    %v1487 = vunpack.c.l.b16 %v124
    %v1488 = vunpack.c.h.b16 %v124
    %v1489 = vunpack.c.l.b16 %v125
    %v1490 = vunpack.c.h.b16 %v125
    %v1491 = vunpack.c.l.b16 %v126
    %v1492 = vunpack.c.h.b16 %v126
    %v1493 = vunpack.c.l.b16 %v127
    %v1494 = vunpack.c.h.b16 %v127
    %v1495 = vunpack.c.l.b16 %v128
    %v1496 = vunpack.c.h.b16 %v128
    %v1497 = vunpack.c.l.b16 %v129
    %v1498 = vunpack.c.h.b16 %v129
    %v1499 = vunpack.c.l.b16 %v130
    %v1500 = vunpack.c.h.b16 %v130
    %v1501 = vunpack.c.l.b16 %v131
    %v1502 = vunpack.c.h.b16 %v131
    %v1503 = vunpack.c.l.b16 %v132
    %v1504 = vunpack.c.h.b16 %v132
    %v1505 = vunpack.c.l.b16 %v133
    %v1506 = vunpack.c.h.b16 %v133
    %v1507 = vunpack.c.l.b16 %v134
    %v1508 = vunpack.c.h.b16 %v134
    %v1509 = vunpack.c.l.b16 %v135
    %v1510 = vunpack.c.h.b16 %v135
    %v1511 = vunpack.c.l.b16 %v136
    %v1512 = vunpack.c.h.b16 %v136
    %v1513 = vunpack.c.l.b16 %v137
    %v1514 = vunpack.c.h.b16 %v137
    %v1515 = vunpack.c.l.b16 %v138
    %v1516 = vunpack.c.h.b16 %v138
    %v1517 = vunpack.c.l.b16 %v139
    %v1518 = vunpack.c.h.b16 %v139
    %v1519 = vunpack.c.l.b16 %v140
    %v1520 = vunpack.c.h.b16 %v140
    %v1521 = vunpack.c.l.b16 %v141
    %v1522 = vunpack.c.h.b16 %v141
    %v1523 = vunpack.c.l.b16 %v142
    %v1524 = vunpack.c.h.b16 %v142
    %v1525 = vunpack.c.l.b16 %v143
    %v1526 = vunpack.c.h.b16 %v143
    %v1527 = vunpack.c.l.b16 %v144
    %v1528 = vunpack.c.h.b16 %v144
    %v1529 = vunpack.c.l.b16 %v145
    %v1530 = vunpack.c.h.b16 %v145
    %v1531 = vunpack.c.l.b16 %v146
    %v1532 = vunpack.c.h.b16 %v146
    %v1533 = vunpack.c.l.b16 %v147
    %v1534 = vunpack.c.h.b16 %v147
    %v1535 = vunpack.c.l.b16 %v148
    %v1536 = vunpack.c.h.b16 %v148
    %v1537 = vunpack.c.l.b16 %v149
    %v1538 = vunpack.c.h.b16 %v149
    %v1539 = vunpack.c.l.b16 %v150
    %v1540 = vunpack.c.h.b16 %v150
    %v1541 = vunpack.c.l.b16 %v151
    %v1542 = vunpack.c.h.b16 %v151
    %v1543 = vunpack.c.l.b16 %v152
    %v1544 = vunpack.c.h.b16 %v152
    %v1545 = vunpack.c.l.b16 %v153
    %v1546 = vunpack.c.h.b16 %v153
    %v1547 = vunpack.c.l.b16 %v154
    %v1548 = vunpack.c.h.b16 %v154
    %v1549 = vunpack.c.l.b16 %v155
    %v1550 = vunpack.c.h.b16 %v155
    %v1551 = vunpack.c.l.b16 %v156
    %v1552 = vunpack.c.h.b16 %v156
    %v1553 = vunpack.c.l.b16 %v157
    %v1554 = vunpack.c.h.b16 %v157
    %v1555 = vunpack.c.l.b16 %v158
    %v1556 = vunpack.c.h.b16 %v158
    %v1557 = vunpack.c.l.b16 %v159
    %v1558 = vunpack.c.h.b16 %v159
    %v1559 = vunpack.c.l.b16 %v160
    %v1560 = vunpack.c.h.b16 %v160
    %v1561 = vunpack.c.l.b16 %v161
    %v1562 = vunpack.c.h.b16 %v161
    %v1563 = vunpack.c.l.b16 %v162
    %v1564 = vunpack.c.h.b16 %v162
    %v1565 = vunpack.c.l.b16 %v163
    %v1566 = vunpack.c.h.b16 %v163
    %v1567 = vunpack.c.l.b16 %v164
    %v1568 = vunpack.c.h.b16 %v164
    %v1569 = vunpack.c.l.b16 %v165
    %v1570 = vunpack.c.h.b16 %v165
    %v1571 = vunpack.c.l.b16 %v166
    %v1572 = vunpack.c.h.b16 %v166
    %v1573 = vunpack.c.l.b16 %v167
    %v1574 = vunpack.c.h.b16 %v167
    %v1575 = vunpack.c.l.b16 %v168
    %v1576 = vunpack.c.h.b16 %v168
    %v1577 = vunpack.c.l.b16 %v169
    %v1578 = vunpack.c.h.b16 %v169
    %v1579 = vunpack.c.l.b16 %v170
    %v1580 = vunpack.c.h.b16 %v170
    %v1581 = vunpack.c.l.b16 %v171
    %v1582 = vunpack.c.h.b16 %v171
    %v1583 = vunpack.c.l.b16 %v172
    %v1584 = vunpack.c.h.b16 %v172
    %v1585 = vunpack.c.l.b16 %v173
    %v1586 = vunpack.c.h.b16 %v173
    %v1587 = vunpack.c.l.b16 %v174
    %v1588 = vunpack.c.h.b16 %v174
    %v1589 = vunpack.c.l.b16 %v175
    %v1590 = vunpack.c.h.b16 %v175
    %v1591 = vunpack.c.l.b16 %v176
    %v1592 = vunpack.c.h.b16 %v176
    %v1593 = vunpack.c.l.b16 %v177
    %v1594 = vunpack.c.h.b16 %v177
    %v1595 = vunpack.c.l.b16 %v178
    %v1596 = vunpack.c.h.b16 %v178
    %v1597 = vunpack.c.l.b16 %v179
    %v1598 = vunpack.c.h.b16 %v179
    %v1599 = vunpack.c.l.b16 %v180
    %v1600 = vunpack.c.h.b16 %v180
    %v1601 = vunpack.c.l.b16 %v181
    %v1602 = vunpack.c.h.b16 %v181
    %v1603 = vunpack.c.l.b16 %v182
    %v1604 = vunpack.c.h.b16 %v182
    %v1605 = vunpack.c.l.b16 %v183
    %v1606 = vunpack.c.h.b16 %v183
    %v1607 = vunpack.c.l.b16 %v184
    %v1608 = vunpack.c.h.b16 %v184
    %v1609 = vunpack.c.l.b16 %v185
    %v1610 = vunpack.c.h.b16 %v185
    %v1611 = vunpack.c.l.b16 %v186
    %v1612 = vunpack.c.h.b16 %v186
    %v1613 = vunpack.c.l.b16 %v187
    %v1614 = vunpack.c.h.b16 %v187
    %v1615 = vunpack.c.l.b16 %v188
    %v1616 = vunpack.c.h.b16 %v188
    %v1617 = vunpack.c.l.b16 %v189
    %v1618 = vunpack.c.h.b16 %v189
    %v1619 = vunpack.c.l.b16 %v190
    %v1620 = vunpack.c.h.b16 %v190
    %v1621 = vunpack.c.l.b16 %v191
    %v1622 = vunpack.c.h.b16 %v191
    %v1623 = vunpack.c.l.b16 %v192
    %v1624 = vunpack.c.h.b16 %v192
    %v1625 = vunpack.c.l.b16 %v193
    %v1626 = vunpack.c.h.b16 %v193
    %v1627 = vunpack.c.l.b16 %v194
    %v1628 = vunpack.c.h.b16 %v194
    %v1629 = vunpack.c.l.b16 %v195
    %v1630 = vunpack.c.h.b16 %v195
    %v1631 = vunpack.c.l.b16 %v196
    %v1632 = vunpack.c.h.b16 %v196
    %v1633 = vunpack.c.l.b16 %v197
    %v1634 = vunpack.c.h.b16 %v197
    %v1635 = vunpack.c.l.b16 %v198
    %v1636 = vunpack.c.h.b16 %v198
    %v1637 = vunpack.c.l.b16 %v199
    %v1638 = vunpack.c.h.b16 %v199
    %v1639 = vunpack.c.l.b16 %v200
    %v1640 = vunpack.c.h.b16 %v200
    %v1641 = vunpack.c.l.b16 %v201
    %v1642 = vunpack.c.h.b16 %v201
    %v1643 = vunpack.c.l.b16 %v202
    %v1644 = vunpack.c.h.b16 %v202
    %v1645 = vunpack.c.l.b16 %v203
    %v1646 = vunpack.c.h.b16 %v203
    %v1647 = vunpack.c.l.b16 %v204
    %v1648 = vunpack.c.h.b16 %v204
    %v1649 = vunpack.c.l.b16 %v205
    %v1650 = vunpack.c.h.b16 %v205
    %v1651 = vunpack.c.l.b16 %v206
    %v1652 = vunpack.c.h.b16 %v206
    %v1653 = vunpack.c.l.b16 %v207
    %v1654 = vunpack.c.h.b16 %v207
    %v1655 = vunpack.c.l.b16 %v208
    %v1656 = vunpack.c.h.b16 %v208
    %v1657 = vunpack.c.l.b16 %v209
    %v1658 = vunpack.c.h.b16 %v209
    %v1659 = vunpack.c.l.b16 %v210
    %v1660 = vunpack.c.h.b16 %v210
    %v1661 = vunpack.c.l.b16 %v211
    %v1662 = vunpack.c.h.b16 %v211
    %v1663 = vunpack.c.l.b16 %v212
    %v1664 = vunpack.c.h.b16 %v212
    %v1665 = vunpack.c.l.b16 %v213
    %v1666 = vunpack.c.h.b16 %v213
    %v1667 = vunpack.c.l.b16 %v214
    %v1668 = vunpack.c.h.b16 %v214
    %v1669 = vunpack.c.l.b16 %v215
    %v1670 = vunpack.c.h.b16 %v215
    %v1671 = vunpack.c.l.b16 %v216
    %v1672 = vunpack.c.h.b16 %v216
    %v1673 = vunpack.c.l.b16 %v217
    %v1674 = vunpack.c.h.b16 %v217
    %v1675 = vunpack.c.l.b16 %v218
    %v1676 = vunpack.c.h.b16 %v218
    %v1677 = vunpack.c.l.b16 %v219
    %v1678 = vunpack.c.h.b16 %v219
    %v1679 = vunpack.c.l.b16 %v220
    %v1680 = vunpack.c.h.b16 %v220
    %v1681 = vunpack.c.l.b16 %v221
    %v1682 = vunpack.c.h.b16 %v221
    %v1683 = vunpack.c.l.b16 %v222
    %v1684 = vunpack.c.h.b16 %v222
    %v1685 = vunpack.c.l.b16 %v223
    %v1686 = vunpack.c.h.b16 %v223
    %v1687 = vunpack.c.l.b16 %v224
    %v1688 = vunpack.c.h.b16 %v224
    %v1689 = vunpack.c.l.b16 %v225
    %v1690 = vunpack.c.h.b16 %v225
    %v1691 = vunpack.c.l.b16 %v226
    %v1692 = vunpack.c.h.b16 %v226
    %v1693 = vunpack.c.l.b16 %v227
    %v1694 = vunpack.c.h.b16 %v227
    %v1695 = vunpack.c.l.b16 %v228
    %v1696 = vunpack.c.h.b16 %v228
    %v1697 = vunpack.c.l.b16 %v229
    %v1698 = vunpack.c.h.b16 %v229
    %v1699 = vunpack.c.l.b16 %v230
    %v1700 = vunpack.c.h.b16 %v230
    %v1701 = vunpack.c.l.b16 %v231
    %v1702 = vunpack.c.h.b16 %v231
    %v1703 = vunpack.c.l.b16 %v232
    %v1704 = vunpack.c.h.b16 %v232
    %v1705 = vunpack.c.l.b16 %v233
    %v1706 = vunpack.c.h.b16 %v233
    %v1707 = vunpack.c.l.b16 %v234
    %v1708 = vunpack.c.h.b16 %v234
    %v1709 = vunpack.c.l.b16 %v235
    %v1710 = vunpack.c.h.b16 %v235
    %v1711 = vunpack.c.l.b16 %v236
    %v1712 = vunpack.c.h.b16 %v236
    %v1713 = vunpack.c.l.b16 %v237
    %v1714 = vunpack.c.h.b16 %v237
    %v1715 = vunpack.c.l.b16 %v238
    %v1716 = vunpack.c.h.b16 %v238
    %v1717 = vunpack.c.l.b16 %v239
    %v1718 = vunpack.c.h.b16 %v239
    %v1719 = vunpack.c.l.b16 %v240
    %v1720 = vunpack.c.h.b16 %v240
    %v1721 = vunpack.c.l.b16 %v241
    %v1722 = vunpack.c.h.b16 %v241
    %v1723 = vunpack.c.l.b16 %v242
    %v1724 = vunpack.c.h.b16 %v242
    %v1725 = vunpack.c.l.b16 %v243
    %v1726 = vunpack.c.h.b16 %v243
    %v1727 = vunpack.c.l.b16 %v244
    %v1728 = vunpack.c.h.b16 %v244
    %v1729 = vunpack.c.l.b16 %v245
    %v1730 = vunpack.c.h.b16 %v245
    %v1731 = vunpack.c.l.b16 %v246
    %v1732 = vunpack.c.h.b16 %v246
    %v1733 = vunpack.c.l.b16 %v247
    %v1734 = vunpack.c.h.b16 %v247
    %v1735 = vunpack.c.l.b16 %v248
    %v1736 = vunpack.c.h.b16 %v248
    %v1737 = vunpack.c.l.b16 %v249
    %v1738 = vunpack.c.h.b16 %v249
    %v1739 = vunpack.c.l.b16 %v250
    %v1740 = vunpack.c.h.b16 %v250
    %v1741 = vunpack.c.l.b16 %v251
    %v1742 = vunpack.c.h.b16 %v251
    %v1743 = vunpack.c.l.b16 %v252
    %v1744 = vunpack.c.h.b16 %v252
    %v1745 = vunpack.c.l.b16 %v253
    %v1746 = vunpack.c.h.b16 %v253
    %v1747 = vunpack.c.l.b16 %v254
    %v1748 = vunpack.c.h.b16 %v254
    %v1749 = vunpack.c.l.b16 %v255
    %v1750 = vunpack.c.h.b16 %v255
    %v1751 = vunpack.c.l.b16 %v256
    %v1752 = vunpack.c.h.b16 %v256
    %v1753 = vunpack.c.l.b16 %v257
    %v1754 = vunpack.c.h.b16 %v257
    %v1755 = vunpack.c.l.b16 %v258
    %v1756 = vunpack.c.h.b16 %v258
    %v1757 = vunpack.c.l.b16 %v259
    %v1758 = vunpack.c.h.b16 %v259
    %v1759 = vunpack.c.l.b16 %v260
    %v1760 = vunpack.c.h.b16 %v260
    %v1761 = vunpack.c.l.b16 %v261
    %v1762 = vunpack.c.h.b16 %v261
    %v1763 = vunpack.c.l.b16 %v262
    %v1764 = vunpack.c.h.b16 %v262
    %v1765 = vunpack.c.l.b16 %v263
    %v1766 = vunpack.c.h.b16 %v263
    %v1767 = vunpack.c.l.b16 %v264
    %v1768 = vunpack.c.h.b16 %v264
    %v1769 = vunpack.c.l.b16 %v265
    %v1770 = vunpack.c.h.b16 %v265
    %v1771 = vunpack.c.l.b16 %v266
    %v1772 = vunpack.c.h.b16 %v266
    %v1773 = vunpack.c.l.b16 %v267
    %v1774 = vunpack.c.h.b16 %v267
    %v1775 = vunpack.c.l.b16 %v268
    %v1776 = vunpack.c.h.b16 %v268
    %v1777 = vunpack.c.l.b16 %v269
    %v1778 = vunpack.c.h.b16 %v269
    %v1779 = vunpack.c.l.b16 %v270
    %v1780 = vunpack.c.h.b16 %v270
    %v1781 = vunpack.c.l.b16 %v271
    %v1782 = vunpack.c.h.b16 %v271
    %v1783 = vunpack.c.l.b16 %v272
    %v1784 = vunpack.c.h.b16 %v272
    %v1785 = vunpack.c.l.b16 %v273
    %v1786 = vunpack.c.h.b16 %v273
    %v1787 = vunpack.c.l.b16 %v274
    %v1788 = vunpack.c.h.b16 %v274
    %v1789 = vunpack.c.l.b16 %v275
    %v1790 = vunpack.c.h.b16 %v275
    %v1791 = vunpack.c.l.b16 %v276
    %v1792 = vunpack.c.h.b16 %v276
    %v1793 = vunpack.c.l.b16 %v277
    %v1794 = vunpack.c.h.b16 %v277
    %v1795 = vunpack.c.l.b16 %v278
    %v1796 = vunpack.c.h.b16 %v278
    %v1797 = vunpack.c.l.b16 %v279
    %v1798 = vunpack.c.h.b16 %v279
    %v1799 = vunpack.c.l.b16 %v280
    %v1800 = vunpack.c.h.b16 %v280
    %v1801 = vunpack.c.l.b16 %v281
    %v1802 = vunpack.c.h.b16 %v281
    %v1803 = vunpack.c.l.b16 %v282
    %v1804 = vunpack.c.h.b16 %v282
    %v1805 = vunpack.c.l.b16 %v283
    %v1806 = vunpack.c.h.b16 %v283
    %v1807 = vunpack.c.l.b16 %v284
    %v1808 = vunpack.c.h.b16 %v284
    %v1809 = vunpack.c.l.b16 %v285
    %v1810 = vunpack.c.h.b16 %v285
    %v1811 = vunpack.c.l.b16 %v286
    %v1812 = vunpack.c.h.b16 %v286
    %v1813 = vunpack.c.l.b16 %v287
    %v1814 = vunpack.c.h.b16 %v287
    %v1815 = vunpack.c.l.b16 %v288
    %v1816 = vunpack.c.h.b16 %v288
    %v1817 = vunpack.c.l.b16 %v289
    %v1818 = vunpack.c.h.b16 %v289
    %v1819 = vunpack.c.l.b16 %v290
    %v1820 = vunpack.c.h.b16 %v290
    %v1821 = vunpack.c.l.b16 %v291
    %v1822 = vunpack.c.h.b16 %v291
    %v1823 = vunpack.c.l.b16 %v292
    %v1824 = vunpack.c.h.b16 %v292
    %v1825 = vunpack.c.l.b16 %v293
    %v1826 = vunpack.c.h.b16 %v293
    %v1827 = vunpack.c.l.b16 %v294
    %v1828 = vunpack.c.h.b16 %v294
    %v1829 = vunpack.c.l.b16 %v295
    %v1830 = vunpack.c.h.b16 %v295
    %v1831 = vunpack.c.l.b16 %v296
    %v1832 = vunpack.c.h.b16 %v296
    %v1833 = vunpack.c.l.b16 %v297
    %v1834 = vunpack.c.h.b16 %v297
    %v1835 = vunpack.c.l.b16 %v298
    %v1836 = vunpack.c.h.b16 %v298
    %v1837 = vunpack.c.l.b16 %v299
    %v1838 = vunpack.c.h.b16 %v299
    %v1839 = vunpack.c.l.b16 %v300
    %v1840 = vunpack.c.h.b16 %v300
    %v1841 = vunpack.c.l.b16 %v301
    %v1842 = vunpack.c.h.b16 %v301
    %v1843 = vunpack.c.l.b16 %v302
    %v1844 = vunpack.c.h.b16 %v302
    %v1845 = vunpack.c.l.b16 %v303
    %v1846 = vunpack.c.h.b16 %v303
    %v1847 = vunpack.c.l.b16 %v304
    %v1848 = vunpack.c.h.b16 %v304
    %v1849 = vunpack.c.l.b16 %v305
    %v1850 = vunpack.c.h.b16 %v305
    %v1851 = vunpack.c.l.b16 %v306
    %v1852 = vunpack.c.h.b16 %v306
    %v1853 = vunpack.c.l.b16 %v307
    %v1854 = vunpack.c.h.b16 %v307
    %v1855 = vunpack.c.l.b16 %v308
    %v1856 = vunpack.c.h.b16 %v308
    %v1857 = vunpack.c.l.b16 %v309
    %v1858 = vunpack.c.h.b16 %v309
    %v1859 = vunpack.c.l.b16 %v310
    %v1860 = vunpack.c.h.b16 %v310
    %v1861 = vunpack.c.l.b16 %v311
    %v1862 = vunpack.c.h.b16 %v311
    %v1863 = vunpack.c.l.b16 %v312
    %v1864 = vunpack.c.h.b16 %v312
    %v1865 = vunpack.c.l.b16 %v313
    %v1866 = vunpack.c.h.b16 %v313
    %v1867 = vunpack.c.l.b16 %v314
    %v1868 = vunpack.c.h.b16 %v314
    %v1869 = vunpack.c.l.b16 %v315
    %v1870 = vunpack.c.h.b16 %v315
    %v1871 = vunpack.c.l.b16 %v316
    %v1872 = vunpack.c.h.b16 %v316
    %v1873 = vunpack.c.l.b16 %v317
    %v1874 = vunpack.c.h.b16 %v317
    %v1875 = vunpack.c.l.b16 %v318
    %v1876 = vunpack.c.h.b16 %v318
    %v1877 = vunpack.c.l.b16 %v319
    %v1878 = vunpack.c.h.b16 %v319
    %v1879 = vunpack.c.l.b16 %v320
    %v1880 = vunpack.c.h.b16 %v320
    %v1881 = vunpack.c.l.b16 %v321
    %v1882 = vunpack.c.h.b16 %v321
    %v1883 = vunpack.c.l.b16 %v322
    %v1884 = vunpack.c.h.b16 %v322
    %v1885 = vunpack.c.l.b16 %v323
    %v1886 = vunpack.c.h.b16 %v323
    %v1887 = vunpack.c.l.b16 %v324
    %v1888 = vunpack.c.h.b16 %v324
    %v1889 = vunpack.c.l.b16 %v325
    %v1890 = vunpack.c.h.b16 %v325
    %v1891 = vunpack.c.l.b16 %v326
    %v1892 = vunpack.c.h.b16 %v326
    %v1893 = vunpack.c.l.b16 %v327
    %v1894 = vunpack.c.h.b16 %v327
    %v1895 = vunpack.c.l.b16 %v328
    %v1896 = vunpack.c.h.b16 %v328
    %v1897 = vunpack.c.l.b16 %v329
    %v1898 = vunpack.c.h.b16 %v329
    %v1899 = vunpack.c.l.b16 %v330
    %v1900 = vunpack.c.h.b16 %v330
    %v1901 = vunpack.c.l.b16 %v331
    %v1902 = vunpack.c.h.b16 %v331
    %v1903 = vunpack.c.l.b16 %v332
    %v1904 = vunpack.c.h.b16 %v332
    %v1905 = vunpack.c.l.b16 %v333
    %v1906 = vunpack.c.h.b16 %v333
    %v1907 = vunpack.c.l.b16 %v334
    %v1908 = vunpack.c.h.b16 %v334
    %v1909 = vunpack.c.l.b16 %v335
    %v1910 = vunpack.c.h.b16 %v335
    %v1911 = vunpack.c.l.b16 %v336
    %v1912 = vunpack.c.h.b16 %v336
    %v1913 = vunpack.c.l.b16 %v337
    %v1914 = vunpack.c.h.b16 %v337
    %v1915 = vunpack.c.l.b16 %v338
    %v1916 = vunpack.c.h.b16 %v338
    %v1917 = vunpack.c.l.b16 %v339
    %v1918 = vunpack.c.h.b16 %v339
    %v1919 = vunpack.c.l.b16 %v340
    %v1920 = vunpack.c.h.b16 %v340
    %v1921 = vunpack.c.l.b16 %v341
    %v1922 = vunpack.c.h.b16 %v341
    %v1923 = vunpack.c.l.b16 %v342
    %v1924 = vunpack.c.h.b16 %v342
    %v1925 = vunpack.c.l.b16 %v343
    %v1926 = vunpack.c.h.b16 %v343
    %v1927 = vunpack.c.l.b16 %v344
    %v1928 = vunpack.c.h.b16 %v344
    %v1929 = vunpack.c.l.b16 %v345
    %v1930 = vunpack.c.h.b16 %v345
    %v1931 = vunpack.c.l.b16 %v346
    %v1932 = vunpack.c.h.b16 %v346
    %v1933 = vunpack.c.l.b16 %v347
    %v1934 = vunpack.c.h.b16 %v347
    %v1935 = vunpack.c.l.b16 %v348
    %v1936 = vunpack.c.h.b16 %v348
    %v1937 = vunpack.c.l.b16 %v349
    %v1938 = vunpack.c.h.b16 %v349
    %v1939 = vunpack.c.l.b16 %v350
    %v1940 = vunpack.c.h.b16 %v350
    %v1941 = vunpack.c.l.b16 %v351
    %v1942 = vunpack.c.h.b16 %v351
    %v1943 = vunpack.c.l.b16 %v352
    %v1944 = vunpack.c.h.b16 %v352
    %v1945 = vunpack.c.l.b16 %v353
    %v1946 = vunpack.c.h.b16 %v353
    %v1947 = vunpack.c.l.b16 %v354
    %v1948 = vunpack.c.h.b16 %v354
    %v1949 = vunpack.c.l.b16 %v355
    %v1950 = vunpack.c.h.b16 %v355
    %v1951 = vunpack.c.l.b16 %v356
    %v1952 = vunpack.c.h.b16 %v356
    %v1953 = vunpack.c.l.b16 %v357
    %v1954 = vunpack.c.h.b16 %v357
    %v1955 = vunpack.c.l.b16 %v358
    %v1956 = vunpack.c.h.b16 %v358
    %v1957 = vunpack.c.l.b16 %v359
    %v1958 = vunpack.c.h.b16 %v359
    %v1959 = vunpack.c.l.b16 %v360
    %v1960 = vunpack.c.h.b16 %v360
    %v1961 = vunpack.c.l.b16 %v361
    %v1962 = vunpack.c.h.b16 %v361
    %v1963 = vunpack.c.l.b16 %v362
    %v1964 = vunpack.c.h.b16 %v362
    %v1965 = vunpack.c.l.b16 %v363
    %v1966 = vunpack.c.h.b16 %v363
    %v1967 = vunpack.c.l.b16 %v364
    %v1968 = vunpack.c.h.b16 %v364
    %v1969 = vunpack.c.l.b16 %v365
    %v1970 = vunpack.c.h.b16 %v365
    %v1971 = vunpack.c.l.b16 %v366
    %v1972 = vunpack.c.h.b16 %v366
    %v1973 = vunpack.c.l.b16 %v367
    %v1974 = vunpack.c.h.b16 %v367
    %v1975 = vunpack.c.l.b16 %v368
    %v1976 = vunpack.c.h.b16 %v368
    %v1977 = vunpack.c.l.b16 %v369
    %v1978 = vunpack.c.h.b16 %v369
    %v1979 = vunpack.c.l.b16 %v370
    %v1980 = vunpack.c.h.b16 %v370
    %v1981 = vunpack.c.l.b16 %v371
    %v1982 = vunpack.c.h.b16 %v371
    %v1983 = vunpack.c.l.b16 %v372
    %v1984 = vunpack.c.h.b16 %v372
    %v1985 = vunpack.c.l.b16 %v373
    %v1986 = vunpack.c.h.b16 %v373
    %v1987 = vunpack.c.l.b16 %v374
    %v1988 = vunpack.c.h.b16 %v374
    %v1989 = vunpack.c.l.b16 %v375
    %v1990 = vunpack.c.h.b16 %v375
    %v1991 = vunpack.c.l.b16 %v376
    %v1992 = vunpack.c.h.b16 %v376
    %v1993 = vunpack.c.l.b16 %v377
    %v1994 = vunpack.c.h.b16 %v377
    %v1995 = vunpack.c.l.b16 %v378
    %v1996 = vunpack.c.h.b16 %v378
    %v1997 = vunpack.c.l.b16 %v379
    %v1998 = vunpack.c.h.b16 %v379
    %v1999 = vunpack.c.l.b16 %v380
    %v2000 = vunpack.c.h.b16 %v380
    %v2001 = vunpack.c.l.b16 %v381
    %v2002 = vunpack.c.h.b16 %v381
    %v2003 = vunpack.c.l.b16 %v382
    %v2004 = vunpack.c.h.b16 %v382
    %v2005 = vunpack.c.l.b16 %v383
    %v2006 = vunpack.c.h.b16 %v383
    %v2007 = vunpack.c.l.b16 %v384
    %v2008 = vunpack.c.h.b16 %v384
    %v2009 = vunpack.c.l.b16 %v385
    %v2010 = vunpack.c.h.b16 %v385
    %v2011 = vunpack.c.l.b16 %v386
    %v2012 = vunpack.c.h.b16 %v386
    %v2013 = vunpack.c.l.b16 %v387
    %v2014 = vunpack.c.h.b16 %v387
    %v2015 = vunpack.c.l.b16 %v388
    %v2016 = vunpack.c.h.b16 %v388
    %v2017 = vunpack.c.l.b16 %v389
    %v2018 = vunpack.c.h.b16 %v389
    %v2019 = vunpack.c.l.b16 %v390
    %v2020 = vunpack.c.h.b16 %v390
    %v2021 = vunpack.c.l.b16 %v391
    %v2022 = vunpack.c.h.b16 %v391
    %v2023 = vunpack.c.l.b16 %v392
    %v2024 = vunpack.c.h.b16 %v392
    %v2025 = vunpack.c.l.b16 %v393
    %v2026 = vunpack.c.h.b16 %v393
    %v2027 = vunpack.c.l.b16 %v394
    %v2028 = vunpack.c.h.b16 %v394
    %v2029 = vunpack.c.l.b16 %v395
    %v2030 = vunpack.c.h.b16 %v395
    %v2031 = vunpack.c.l.b16 %v396
    %v2032 = vunpack.c.h.b16 %v396
    %v2033 = vunpack.c.l.b16 %v397
    %v2034 = vunpack.c.h.b16 %v397
    %v2035 = vunpack.c.l.b16 %v398
    %v2036 = vunpack.c.h.b16 %v398
    %v2037 = vunpack.c.l.b16 %v399
    %v2038 = vunpack.c.h.b16 %v399
    %v2039 = vunpack.c.l.b16 %v400
    %v2040 = vunpack.c.h.b16 %v400
    %v2041 = vunpack.c.l.b16 %v401
    %v2042 = vunpack.c.h.b16 %v401
    %v2043 = vunpack.c.l.b16 %v402
    %v2044 = vunpack.c.h.b16 %v402
    %v2045 = vunpack.c.l.b16 %v403
    %v2046 = vunpack.c.h.b16 %v403
    %v2047 = vunpack.c.l.b16 %v404
    %v2048 = vunpack.c.h.b16 %v404
    %v2049 = vunpack.c.l.b16 %v405
    %v2050 = vunpack.c.h.b16 %v405
    %v2051 = vunpack.c.l.b16 %v406
    %v2052 = vunpack.c.h.b16 %v406
    %v2053 = vunpack.c.l.b16 %v407
    %v2054 = vunpack.c.h.b16 %v407
    %v2055 = vunpack.c.l.b16 %v408
    %v2056 = vunpack.c.h.b16 %v408
    %v2057 = vunpack.c.l.b16 %v409
    %v2058 = vunpack.c.h.b16 %v409
    %v2059 = vunpack.c.l.b16 %v410
    %v2060 = vunpack.c.h.b16 %v410
    %v2061 = vunpack.c.l.b16 %v411
    %v2062 = vunpack.c.h.b16 %v411
    %v2063 = vunpack.c.l.b16 %v412
    %v2064 = vunpack.c.h.b16 %v412
    %v2065 = vunpack.c.l.b16 %v413
    %v2066 = vunpack.c.h.b16 %v413
    %v2067 = vunpack.c.l.b16 %v414
    %v2068 = vunpack.c.h.b16 %v414
    %v2069 = vunpack.c.l.b16 %v415
    %v2070 = vunpack.c.h.b16 %v415
    %v2071 = vunpack.c.l.b16 %v416
    %v2072 = vunpack.c.h.b16 %v416
    %v2073 = vunpack.c.l.b16 %v417
    %v2074 = vunpack.c.h.b16 %v417
    %v2075 = vunpack.c.l.b16 %v418
    %v2076 = vunpack.c.h.b16 %v418
    %v2077 = vunpack.c.l.b16 %v419
    %v2078 = vunpack.c.h.b16 %v419
    %v2079 = vunpack.c.l.b16 %v420
    %v2080 = vunpack.c.h.b16 %v420
    %v2081 = vunpack.c.l.b16 %v421
    %v2082 = vunpack.c.h.b16 %v421
    %v2083 = vunpack.c.l.b16 %v422
    %v2084 = vunpack.c.h.b16 %v422
    %v2085 = vunpack.c.l.b16 %v423
    %v2086 = vunpack.c.h.b16 %v423
    %v2087 = vunpack.c.l.b16 %v424
    %v2088 = vunpack.c.h.b16 %v424
    %v2089 = vunpack.c.l.b16 %v425
    %v2090 = vunpack.c.h.b16 %v425
    %v2091 = vunpack.c.l.b16 %v426
    %v2092 = vunpack.c.h.b16 %v426
    %v2093 = vunpack.c.l.b16 %v427
    %v2094 = vunpack.c.h.b16 %v427
    %v2095 = vunpack.c.l.b16 %v428
    %v2096 = vunpack.c.h.b16 %v428
    %v2097 = vunpack.c.l.b16 %v429
    %v2098 = vunpack.c.h.b16 %v429
    %v2099 = vunpack.c.l.b16 %v430
    %v2100 = vunpack.c.h.b16 %v430
    %v2101 = vunpack.c.l.b16 %v431
    %v2102 = vunpack.c.h.b16 %v431
    %v2103 = vunpack.c.l.b16 %v432
    %v2104 = vunpack.c.h.b16 %v432
    %v2105 = vunpack.c.l.b16 %v433
    %v2106 = vunpack.c.h.b16 %v433
    %v2107 = vunpack.c.l.b16 %v434
    %v2108 = vunpack.c.h.b16 %v434
    %v2109 = vunpack.c.l.b16 %v435
    %v2110 = vunpack.c.h.b16 %v435
    %v2111 = vunpack.c.l.b16 %v436
    %v2112 = vunpack.c.h.b16 %v436
    %v2113 = vunpack.c.l.b16 %v437
    %v2114 = vunpack.c.h.b16 %v437
    %v2115 = vunpack.c.l.b16 %v438
    %v2116 = vunpack.c.h.b16 %v438
    %v2117 = vunpack.c.l.b16 %v439
    %v2118 = vunpack.c.h.b16 %v439
    %v2119 = vunpack.c.l.b16 %v440
    %v2120 = vunpack.c.h.b16 %v440
    %v2121 = vunpack.c.l.b16 %v441
    %v2122 = vunpack.c.h.b16 %v441
    %v2123 = vunpack.c.l.b16 %v442
    %v2124 = vunpack.c.h.b16 %v442
    %v2125 = vunpack.c.l.b16 %v443
    %v2126 = vunpack.c.h.b16 %v443
    %v2127 = vunpack.c.l.b16 %v444
    %v2128 = vunpack.c.h.b16 %v444
    %v2129 = vunpack.c.l.b16 %v445
    %v2130 = vunpack.c.h.b16 %v445
    %v2131 = vunpack.c.l.b16 %v446
    %v2132 = vunpack.c.h.b16 %v446
    %v2133 = vunpack.c.l.b16 %v447
    %v2134 = vunpack.c.h.b16 %v447
    %v2135 = vunpack.c.l.b16 %v448
    %v2136 = vunpack.c.h.b16 %v448
    %v2137 = vunpack.c.l.b16 %v449
    %v2138 = vunpack.c.h.b16 %v449
    %v2139 = vunpack.c.l.b16 %v450
    %v2140 = vunpack.c.h.b16 %v450
    %v2141 = vunpack.c.l.b16 %v451
    %v2142 = vunpack.c.h.b16 %v451
    %v2143 = vunpack.c.l.b16 %v452
    %v2144 = vunpack.c.h.b16 %v452
    %v2145 = vunpack.c.l.b16 %v453
    %v2146 = vunpack.c.h.b16 %v453
    %v2147 = vunpack.c.l.b16 %v454
    %v2148 = vunpack.c.h.b16 %v454
    %v2149 = vunpack.c.l.b16 %v455
    %v2150 = vunpack.c.h.b16 %v455
    %v2151 = vunpack.c.l.b16 %v456
    %v2152 = vunpack.c.h.b16 %v456
    %v2153 = vunpack.c.l.b16 %v457
    %v2154 = vunpack.c.h.b16 %v457
    %v2155 = vunpack.c.l.b16 %v458
    %v2156 = vunpack.c.h.b16 %v458
    %v2157 = vunpack.c.l.b16 %v459
    %v2158 = vunpack.c.h.b16 %v459
    %v2159 = vunpack.c.l.b16 %v460
    %v2160 = vunpack.c.h.b16 %v460
    %v2161 = vunpack.c.l.b16 %v461
    %v2162 = vunpack.c.h.b16 %v461
    %v2163 = vunpack.c.l.b16 %v462
    %v2164 = vunpack.c.h.b16 %v462
    %v2165 = vunpack.c.l.b16 %v463
    %v2166 = vunpack.c.h.b16 %v463
    %v2167 = vunpack.c.l.b16 %v464
    %v2168 = vunpack.c.h.b16 %v464
    %v2169 = vunpack.c.l.b16 %v465
    %v2170 = vunpack.c.h.b16 %v465
    %v2171 = vunpack.c.l.b16 %v466
    %v2172 = vunpack.c.h.b16 %v466
    %v2173 = vunpack.c.l.b16 %v467
    %v2174 = vunpack.c.h.b16 %v467
    %v2175 = vunpack.c.l.b16 %v468
    %v2176 = vunpack.c.h.b16 %v468
    %v2177 = vunpack.c.l.b16 %v469
    %v2178 = vunpack.c.h.b16 %v469
    %v2179 = vunpack.c.l.b16 %v470
    %v2180 = vunpack.c.h.b16 %v470
    %v2181 = vunpack.c.l.b16 %v471
    %v2182 = vunpack.c.h.b16 %v471
    %v2183 = vunpack.c.l.b16 %v472
    %v2184 = vunpack.c.h.b16 %v472
    %v2185 = vunpack.c.l.b16 %v473
    %v2186 = vunpack.c.h.b16 %v473
    %v2187 = vunpack.c.l.b16 %v474
    %v2188 = vunpack.c.h.b16 %v474
    %v2189 = vunpack.c.l.b16 %v475
    %v2190 = vunpack.c.h.b16 %v475
    %v2191 = vunpack.c.l.b16 %v476
    %v2192 = vunpack.c.h.b16 %v476
    %v2193 = vunpack.c.l.b16 %v477
    %v2194 = vunpack.c.h.b16 %v477
    %v2195 = vunpack.c.l.b16 %v478
    %v2196 = vunpack.c.h.b16 %v478
    %v2197 = vunpack.c.l.b16 %v479
    %v2198 = vunpack.c.h.b16 %v479
    %v2199 = vunpack.c.l.b16 %v480
    %v2200 = vunpack.c.h.b16 %v480
    %v2201 = vunpack.c.l.b16 %v481
    %v2202 = vunpack.c.h.b16 %v481
    %v2203 = vunpack.c.l.b16 %v482
    %v2204 = vunpack.c.h.b16 %v482
    %v2205 = vunpack.c.l.b16 %v483
    %v2206 = vunpack.c.h.b16 %v483
    %v2207 = vunpack.c.l.b16 %v484
    %v2208 = vunpack.c.h.b16 %v484
    %v2209 = vunpack.c.l.b16 %v485
    %v2210 = vunpack.c.h.b16 %v485
    %v2211 = vunpack.c.l.b16 %v486
    %v2212 = vunpack.c.h.b16 %v486
    %v2213 = vunpack.c.l.b16 %v487
    %v2214 = vunpack.c.h.b16 %v487
    %v2215 = vunpack.c.l.b16 %v488
    %v2216 = vunpack.c.h.b16 %v488
    %v2217 = vunpack.c.l.b16 %v489
    %v2218 = vunpack.c.h.b16 %v489
    %v2219 = vunpack.c.l.b16 %v490
    %v2220 = vunpack.c.h.b16 %v490
    %v2221 = vunpack.c.l.b16 %v491
    %v2222 = vunpack.c.h.b16 %v491
    %v2223 = vunpack.c.l.b16 %v492
    %v2224 = vunpack.c.h.b16 %v492
    %v2225 = vunpack.c.l.b16 %v493
    %v2226 = vunpack.c.h.b16 %v493
    %v2227 = vunpack.c.l.b16 %v494
    %v2228 = vunpack.c.h.b16 %v494
    %v2229 = vunpack.c.l.b16 %v495
    %v2230 = vunpack.c.h.b16 %v495
    %v2231 = vunpack.c.l.b16 %v496
    %v2232 = vunpack.c.h.b16 %v496
    %v2233 = vunpack.c.l.b16 %v497
    %v2234 = vunpack.c.h.b16 %v497
    %v2235 = vunpack.c.l.b16 %v498
    %v2236 = vunpack.c.h.b16 %v498
    %v2237 = vunpack.c.l.b16 %v499
    %v2238 = vunpack.c.h.b16 %v499
    %v2239 = vunpack.c.l.b16 %v500
    %v2240 = vunpack.c.h.b16 %v500
    %v2241 = vunpack.c.l.b16 %v501
    %v2242 = vunpack.c.h.b16 %v501
    %v2243 = vunpack.c.l.b16 %v502
    %v2244 = vunpack.c.h.b16 %v502
    %v2245 = vunpack.c.l.b16 %v503
    %v2246 = vunpack.c.h.b16 %v503
    %v2247 = vunpack.c.l.b16 %v504
    %v2248 = vunpack.c.h.b16 %v504
    %v2249 = vunpack.c.l.b16 %v505
    %v2250 = vunpack.c.h.b16 %v505
    %v2251 = vunpack.c.l.b16 %v506
    %v2252 = vunpack.c.h.b16 %v506
    %v2253 = vunpack.c.l.b16 %v507
    %v2254 = vunpack.c.h.b16 %v507
    %v2255 = vunpack.c.l.b16 %v508
    %v2256 = vunpack.c.h.b16 %v508
    %v2257 = vunpack.c.l.b16 %v509
    %v2258 = vunpack.c.h.b16 %v509
    %v2259 = vunpack.c.l.b16 %v510
    %v2260 = vunpack.c.h.b16 %v510
    %v2261 = vunpack.c.l.b16 %v511
    %v2262 = vunpack.c.h.b16 %v511
    %v2263 = vunpack.c.l.b16 %v512
    %v2264 = vunpack.c.h.b16 %v512
    %v2265 = vunpack.c.l.b16 %v513
    %v2266 = vunpack.c.h.b16 %v513
    %v2267 = vunpack.c.l.b16 %v514
    %v2268 = vunpack.c.h.b16 %v514
    %v2269 = vunpack.c.l.b16 %v515
    %v2270 = vunpack.c.h.b16 %v515
    %v2271 = vunpack.c.l.b16 %v516
    %v2272 = vunpack.c.h.b16 %v516
    %v2273 = vunpack.c.l.b16 %v517
    %v2274 = vunpack.c.h.b16 %v517
    %v2275 = vunpack.c.l.b16 %v518
    %v2276 = vunpack.c.h.b16 %v518
    %v2277 = vunpack.c.l.b16 %v519
    %v2278 = vunpack.c.h.b16 %v519
    %v2279 = vunpack.c.l.b16 %v520
    %v2280 = vunpack.c.h.b16 %v520
    %v2281 = vunpack.c.l.b16 %v521
    %v2282 = vunpack.c.h.b16 %v521
    %v2283 = vunpack.c.l.b16 %v522
    %v2284 = vunpack.c.h.b16 %v522
    %v2285 = vunpack.c.l.b16 %v523
    %v2286 = vunpack.c.h.b16 %v523
    %v2287 = vunpack.c.l.b16 %v524
    %v2288 = vunpack.c.h.b16 %v524
    %v2289 = vunpack.c.l.b16 %v525
    %v2290 = vunpack.c.h.b16 %v525
    %v2291 = vunpack.c.l.b16 %v526
    %v2292 = vunpack.c.h.b16 %v526
    %v2293 = vunpack.c.l.b16 %v527
    %v2294 = vunpack.c.h.b16 %v527
    %v2295 = vunpack.c.l.b16 %v528
    %v2296 = vunpack.c.h.b16 %v528
    %v2297 = vunpack.c.l.b16 %v529
    %v2298 = vunpack.c.h.b16 %v529
    %v2299 = vunpack.c.l.b16 %v530
    %v2300 = vunpack.c.h.b16 %v530
    %v2301 = vunpack.c.l.b16 %v531
    %v2302 = vunpack.c.h.b16 %v531
    %v2303 = vunpack.c.l.b16 %v532
    %v2304 = vunpack.c.h.b16 %v532
    %v2305 = vunpack.c.l.b16 %v533
    %v2306 = vunpack.c.h.b16 %v533
    %v2307 = vunpack.c.l.b16 %v534
    %v2308 = vunpack.c.h.b16 %v534
    %v2309 = vunpack.c.l.b16 %v535
    %v2310 = vunpack.c.h.b16 %v535
    %v2311 = vunpack.c.l.b16 %v536
    %v2312 = vunpack.c.h.b16 %v536
    %v2313 = vunpack.c.l.b16 %v537
    %v2314 = vunpack.c.h.b16 %v537
    %v2315 = vunpack.c.l.b16 %v538
    %v2316 = vunpack.c.h.b16 %v538
    %v2317 = vunpack.c.l.b16 %v539
    %v2318 = vunpack.c.h.b16 %v539
    %v2319 = vunpack.c.l.b16 %v540
    %v2320 = vunpack.c.h.b16 %v540
    %v2321 = vunpack.c.l.b16 %v541
    %v2322 = vunpack.c.h.b16 %v541
    %v2323 = vunpack.c.l.b16 %v542
    %v2324 = vunpack.c.h.b16 %v542
    %v2325 = vunpack.c.l.b16 %v543
    %v2326 = vunpack.c.h.b16 %v543
    %v2327 = vunpack.c.l.b16 %v544
    %v2328 = vunpack.c.h.b16 %v544
    %v2329 = vunpack.c.l.b16 %v545
    %v2330 = vunpack.c.h.b16 %v545
    %v2331 = vunpack.c.l.b16 %v546
    %v2332 = vunpack.c.h.b16 %v546
    %v2333 = vunpack.c.l.b16 %v547
    %v2334 = vunpack.c.h.b16 %v547
    %v2335 = vunpack.c.l.b16 %v548
    %v2336 = vunpack.c.h.b16 %v548
    %v2337 = vunpack.c.l.b16 %v549
    %v2338 = vunpack.c.h.b16 %v549
    %v2339 = vunpack.c.l.b16 %v550
    %v2340 = vunpack.c.h.b16 %v550
    %v2341 = vunpack.c.l.b16 %v551
    %v2342 = vunpack.c.h.b16 %v551
    %v2343 = vunpack.c.l.b16 %v552
    %v2344 = vunpack.c.h.b16 %v552
    %v2345 = vunpack.c.l.b16 %v553
    %v2346 = vunpack.c.h.b16 %v553
    %v2347 = vunpack.c.l.b16 %v554
    %v2348 = vunpack.c.h.b16 %v554
    %v2349 = vunpack.c.l.b16 %v555
    %v2350 = vunpack.c.h.b16 %v555
    %v2351 = vunpack.c.l.b16 %v556
    %v2352 = vunpack.c.h.b16 %v556
    %v2353 = vunpack.c.l.b16 %v557
    %v2354 = vunpack.c.h.b16 %v557
    %v2355 = vunpack.c.l.b16 %v558
    %v2356 = vunpack.c.h.b16 %v558
    %v2357 = vunpack.c.l.b16 %v559
    %v2358 = vunpack.c.h.b16 %v559
    %v2359 = vunpack.c.l.b16 %v560
    %v2360 = vunpack.c.h.b16 %v560
    %v2361 = vunpack.c.l.b16 %v561
    %v2362 = vunpack.c.h.b16 %v561
    %v2363 = vunpack.c.l.b16 %v562
    %v2364 = vunpack.c.h.b16 %v562
    %v2365 = vunpack.c.l.b16 %v563
    %v2366 = vunpack.c.h.b16 %v563
    %v2367 = vunpack.c.l.b16 %v564
    %v2368 = vunpack.c.h.b16 %v564
    %v2369 = vunpack.c.l.b16 %v565
    %v2370 = vunpack.c.h.b16 %v565
    %v2371 = vunpack.c.l.b16 %v566
    %v2372 = vunpack.c.h.b16 %v566
    %v2373 = vunpack.c.l.b16 %v567
    %v2374 = vunpack.c.h.b16 %v567
    %v2375 = vunpack.c.l.b16 %v568
    %v2376 = vunpack.c.h.b16 %v568
    %v2377 = vunpack.c.l.b16 %v569
    %v2378 = vunpack.c.h.b16 %v569
    %v2379 = vunpack.c.l.b16 %v570
    %v2380 = vunpack.c.h.b16 %v570
    %v2381 = vunpack.c.l.b16 %v571
    %v2382 = vunpack.c.h.b16 %v571
    %v2383 = vunpack.c.l.b16 %v572
    %v2384 = vunpack.c.h.b16 %v572
    %v2385 = vunpack.c.l.b16 %v573
    %v2386 = vunpack.c.h.b16 %v573
    %v2387 = vunpack.c.l.b16 %v574
    %v2388 = vunpack.c.h.b16 %v574
    %v2389 = vunpack.c.l.b16 %v575
    %v2390 = vunpack.c.h.b16 %v575
    %v2391 = vunpack.c.l.b16 %v576
    %v2392 = vunpack.c.h.b16 %v576
    %v2393 = vunpack.c.l.b16 %v577
    %v2394 = vunpack.c.h.b16 %v577
    %v2395 = vunpack.c.l.b16 %v578
    %v2396 = vunpack.c.h.b16 %v578
    %v2397 = vunpack.c.l.b16 %v579
    %v2398 = vunpack.c.h.b16 %v579
    %v2399 = vunpack.c.l.b16 %v580
    %v2400 = vunpack.c.h.b16 %v580
    %v2401 = vunpack.c.l.b16 %v581
    %v2402 = vunpack.c.h.b16 %v581
    %v2403 = vunpack.c.l.b16 %v582
    %v2404 = vunpack.c.h.b16 %v582
    %v2405 = vunpack.c.l.b16 %v583
    %v2406 = vunpack.c.h.b16 %v583
    %v2407 = vunpack.c.l.b16 %v584
    %v2408 = vunpack.c.h.b16 %v584
    %v2409 = vunpack.c.l.b16 %v585
    %v2410 = vunpack.c.h.b16 %v585
    %v2411 = vunpack.c.l.b16 %v586
    %v2412 = vunpack.c.h.b16 %v586
    %v2413 = vunpack.c.l.b16 %v587
    %v2414 = vunpack.c.h.b16 %v587
    %v2415 = vunpack.c.l.b16 %v588
    %v2416 = vunpack.c.h.b16 %v588
    %v2417 = vunpack.c.l.b16 %v589
    %v2418 = vunpack.c.h.b16 %v589
    %v2419 = vunpack.c.l.b16 %v590
    %v2420 = vunpack.c.h.b16 %v590
    %v2421 = vunpack.c.l.b16 %v591
    %v2422 = vunpack.c.h.b16 %v591
    %v2423 = vunpack.c.l.b16 %v592
    %v2424 = vunpack.c.h.b16 %v592
    %v2425 = vunpack.c.l.b16 %v593
    %v2426 = vunpack.c.h.b16 %v593
    %v2427 = vunpack.c.l.b16 %v594
    %v2428 = vunpack.c.h.b16 %v594
    %v2429 = vunpack.c.l.b16 %v595
    %v2430 = vunpack.c.h.b16 %v595
    %v2431 = vunpack.c.l.b16 %v596
    %v2432 = vunpack.c.h.b16 %v596
    %v2433 = vunpack.c.l.b16 %v597
    %v2434 = vunpack.c.h.b16 %v597
    %v2435 = vunpack.c.l.b16 %v598
    %v2436 = vunpack.c.h.b16 %v598
    %v2437 = vunpack.c.l.b16 %v599
    %v2438 = vunpack.c.h.b16 %v599
    %v2439 = vunpack.c.l.b16 %v600
    %v2440 = vunpack.c.h.b16 %v600
    %v2441 = vunpack.c.l.b16 %v601
    %v2442 = vunpack.c.h.b16 %v601
    %v2443 = vunpack.c.l.b16 %v602
    %v2444 = vunpack.c.h.b16 %v602
    %v2445 = vunpack.c.l.b16 %v603
    %v2446 = vunpack.c.h.b16 %v603
    %v2447 = vunpack.c.l.b16 %v604
    %v2448 = vunpack.c.h.b16 %v604
    %v2449 = vunpack.c.l.b16 %v605
    %v2450 = vunpack.c.h.b16 %v605
    %v2451 = vunpack.c.l.b16 %v606
    %v2452 = vunpack.c.h.b16 %v606
    %v2453 = vunpack.c.l.b16 %v607
    %v2454 = vunpack.c.h.b16 %v607
    %v2455 = vunpack.c.l.b16 %v608
    %v2456 = vunpack.c.h.b16 %v608
    %v2457 = vunpack.c.l.b16 %v609
    %v2458 = vunpack.c.h.b16 %v609
    %v2459 = vunpack.c.l.b16 %v610
    %v2460 = vunpack.c.h.b16 %v610
    %v2461 = vunpack.c.l.b16 %v611
    %v2462 = vunpack.c.h.b16 %v611
    %v2463 = vunpack.c.l.b16 %v612
    %v2464 = vunpack.c.h.b16 %v612
    %v2465 = vunpack.c.l.b16 %v613
    %v2466 = vunpack.c.h.b16 %v613
    %v2467 = vunpack.c.l.b16 %v614
    %v2468 = vunpack.c.h.b16 %v614
    %v2469 = vunpack.c.l.b16 %v615
    %v2470 = vunpack.c.h.b16 %v615
    %v2471 = vunpack.c.l.b16 %v616
    %v2472 = vunpack.c.h.b16 %v616
    %v2473 = vunpack.c.l.b16 %v617
    %v2474 = vunpack.c.h.b16 %v617
    %v2475 = vunpack.c.l.b16 %v618
    %v2476 = vunpack.c.h.b16 %v618
    %v2477 = vunpack.c.l.b16 %v619
    %v2478 = vunpack.c.h.b16 %v619
    %v2479 = vunpack.c.l.b16 %v620
    %v2480 = vunpack.c.h.b16 %v620
    %v2481 = vunpack.c.l.b16 %v621
    %v2482 = vunpack.c.h.b16 %v621
    %v2483 = vunpack.c.l.b16 %v622
    %v2484 = vunpack.c.h.b16 %v622
    %v2485 = vunpack.c.l.b16 %v623
    %v2486 = vunpack.c.h.b16 %v623
    %v2487 = vunpack.c.l.b16 %v624
    %v2488 = vunpack.c.h.b16 %v624
    %v2489 = vunpack.c.l.b16 %v625
    %v2490 = vunpack.c.h.b16 %v625
    %v2491 = vunpack.c.l.b16 %v626
    %v2492 = vunpack.c.h.b16 %v626
    %v2493 = vunpack.c.l.b16 %v627
    %v2494 = vunpack.c.h.b16 %v627
    %v2495 = vunpack.c.l.b16 %v628
    %v2496 = vunpack.c.h.b16 %v628
    %v2497 = vunpack.c.l.b16 %v629
    %v2498 = vunpack.c.h.b16 %v629
    %v2499 = vunpack.c.l.b16 %v630
    %v2500 = vunpack.c.h.b16 %v630
    %v2501 = vunpack.c.l.b16 %v631
    %v2502 = vunpack.c.h.b16 %v631
    %v2503 = vunpack.c.l.b16 %v632
    %v2504 = vunpack.c.h.b16 %v632
    %v2505 = vunpack.c.l.b16 %v633
    %v2506 = vunpack.c.h.b16 %v633
    %v2507 = vunpack.c.l.b16 %v634
    %v2508 = vunpack.c.h.b16 %v634
    %v2509 = vunpack.c.l.b16 %v635
    %v2510 = vunpack.c.h.b16 %v635
    %v2511 = vunpack.c.l.b16 %v636
    %v2512 = vunpack.c.h.b16 %v636
    %v2513 = vunpack.c.l.b16 %v637
    %v2514 = vunpack.c.h.b16 %v637
    %v2515 = vunpack.c.l.b16 %v638
    %v2516 = vunpack.c.h.b16 %v638
    %v2517 = vunpack.c.l.b16 %v639
    %v2518 = vunpack.c.h.b16 %v639
    %v2519 = vunpack.c.l.b16 %v640
    %v2520 = vunpack.c.h.b16 %v640
    %v2521 = vunpack.c.l.b16 %v641
    %v2522 = vunpack.c.h.b16 %v641
    %v2523 = vunpack.c.l.b16 %v642
    %v2524 = vunpack.c.h.b16 %v642
    %v2525 = vunpack.c.l.b16 %v643
    %v2526 = vunpack.c.h.b16 %v643
    %v2527 = vunpack.c.l.b16 %v644
    %v2528 = vunpack.c.h.b16 %v644
    %v2529 = vunpack.c.l.b16 %v645
    %v2530 = vunpack.c.h.b16 %v645
    %v2531 = vunpack.c.l.b16 %v646
    %v2532 = vunpack.c.h.b16 %v646
    %v2533 = vunpack.c.l.b16 %v647
    %v2534 = vunpack.c.h.b16 %v647
    %v2535 = vunpack.c.l.b16 %v648
    %v2536 = vunpack.c.h.b16 %v648
    %v2537 = vunpack.c.l.b16 %v649
    %v2538 = vunpack.c.h.b16 %v649
    %v2539 = vunpack.c.l.b16 %v650
    %v2540 = vunpack.c.h.b16 %v650
    %v2541 = vunpack.c.l.b16 %v651
    %v2542 = vunpack.c.h.b16 %v651
    %v2543 = vunpack.c.l.b16 %v652
    %v2544 = vunpack.c.h.b16 %v652
    %v2545 = vunpack.c.l.b16 %v653
    %v2546 = vunpack.c.h.b16 %v653
    %v2547 = vunpack.c.l.b16 %v654
    %v2548 = vunpack.c.h.b16 %v654
    %v2549 = vunpack.c.l.b16 %v655
    %v2550 = vunpack.c.h.b16 %v655
    %v2551 = vunpack.c.l.b16 %v656
    %v2552 = vunpack.c.h.b16 %v656
    %v2553 = vunpack.c.l.b16 %v657
    %v2554 = vunpack.c.h.b16 %v657
    %v2555 = vunpack.c.l.b16 %v658
    %v2556 = vunpack.c.h.b16 %v658
    %v2557 = vunpack.c.l.b16 %v659
    %v2558 = vunpack.c.h.b16 %v659
    %v2559 = vunpack.c.l.b16 %v660
    %v2560 = vunpack.c.h.b16 %v660
    %v2561 = vunpack.c.l.b16 %v661
    %v2562 = vunpack.c.h.b16 %v661
    %v2563 = vpack.c.b16 %v1351, %v1347
    %v2564 = vpack.c.b16 %v1352, %v1348
    %v2565 = vpack.c.b16 %v1353, %v1349
    %v2566 = vpack.c.b16 %v1354, %v1350
    %v2567 = vpack.c.b16 %v1359, %v1355
    %v2568 = vpack.c.b16 %v1360, %v1356
    %v2569 = vpack.c.b16 %v1361, %v1357
    %v2570 = vpack.c.b16 %v1362, %v1358
    %v2571 = vpack.c.b16 %v1367, %v1363
    %v2572 = vpack.c.b16 %v1368, %v1364
    %v2573 = vpack.c.b16 %v1369, %v1365
    %v2574 = vpack.c.b16 %v1370, %v1366
    %v2575 = vpack.c.b16 %v1375, %v1371
    %v2576 = vpack.c.b16 %v1376, %v1372
    %v2577 = vpack.c.b16 %v1377, %v1373
    %v2578 = vpack.c.b16 %v1378, %v1374
    %v2579 = vpack.c.b16 %v1383, %v1379
    %v2580 = vpack.c.b16 %v1384, %v1380
    %v2581 = vpack.c.b16 %v1385, %v1381
    %v2582 = vpack.c.b16 %v1386, %v1382
    %v2583 = vpack.c.b16 %v1391, %v1387
    %v2584 = vpack.c.b16 %v1392, %v1388
    %v2585 = vpack.c.b16 %v1393, %v1389
    %v2586 = vpack.c.b16 %v1394, %v1390
    %v2587 = vpack.c.b16 %v1399, %v1395
    %v2588 = vpack.c.b16 %v1400, %v1396
    %v2589 = vpack.c.b16 %v1401, %v1397
    %v2590 = vpack.c.b16 %v1402, %v1398
    %v2591 = vpack.c.b16 %v1407, %v1403
    %v2592 = vpack.c.b16 %v1408, %v1404
    %v2593 = vpack.c.b16 %v1409, %v1405
    %v2594 = vpack.c.b16 %v1410, %v1406
    %v2595 = vpack.c.b16 %v1415, %v1411
    %v2596 = vpack.c.b16 %v1416, %v1412
    %v2597 = vpack.c.b16 %v1417, %v1413
    %v2598 = vpack.c.b16 %v1418, %v1414
    %v2599 = vpack.c.b16 %v1423, %v1419
    %v2600 = vpack.c.b16 %v1424, %v1420
    %v2601 = vpack.c.b16 %v1425, %v1421
    %v2602 = vpack.c.b16 %v1426, %v1422
    %v2603 = vpack.c.b16 %v1431, %v1427
    %v2604 = vpack.c.b16 %v1432, %v1428
    %v2605 = vpack.c.b16 %v1433, %v1429
    %v2606 = vpack.c.b16 %v1434, %v1430
    %v2607 = vpack.c.b16 %v1439, %v1435
    %v2608 = vpack.c.b16 %v1440, %v1436
    %v2609 = vpack.c.b16 %v1441, %v1437
    %v2610 = vpack.c.b16 %v1442, %v1438
    %v2611 = vpack.c.b16 %v1447, %v1443
    %v2612 = vpack.c.b16 %v1448, %v1444
    %v2613 = vpack.c.b16 %v1449, %v1445
    %v2614 = vpack.c.b16 %v1450, %v1446
    %v2615 = vpack.c.b16 %v1455, %v1451
    %v2616 = vpack.c.b16 %v1456, %v1452
    %v2617 = vpack.c.b16 %v1457, %v1453
    %v2618 = vpack.c.b16 %v1458, %v1454
    %v2619 = vpack.c.b16 %v1463, %v1459
    %v2620 = vpack.c.b16 %v1464, %v1460
    %v2621 = vpack.c.b16 %v1465, %v1461
    %v2622 = vpack.c.b16 %v1466, %v1462
    %v2623 = vpack.c.b16 %v1471, %v1467
    %v2624 = vpack.c.b16 %v1472, %v1468
    %v2625 = vpack.c.b16 %v1473, %v1469
    %v2626 = vpack.c.b16 %v1474, %v1470
    %v2627 = vpack.c.b16 %v1479, %v1475
    %v2628 = vpack.c.b16 %v1480, %v1476
    %v2629 = vpack.c.b16 %v1481, %v1477
    %v2630 = vpack.c.b16 %v1482, %v1478
    %v2631 = vpack.c.b16 %v1487, %v1483
    %v2632 = vpack.c.b16 %v1488, %v1484
    %v2633 = vpack.c.b16 %v1489, %v1485
    %v2634 = vpack.c.b16 %v1490, %v1486
    %v2635 = vpack.c.b16 %v1495, %v1491
    %v2636 = vpack.c.b16 %v1496, %v1492
    %v2637 = vpack.c.b16 %v1497, %v1493
    %v2638 = vpack.c.b16 %v1498, %v1494
    %v2639 = vpack.c.b16 %v1503, %v1499
    %v2640 = vpack.c.b16 %v1504, %v1500
    %v2641 = vpack.c.b16 %v1505, %v1501
    %v2642 = vpack.c.b16 %v1506, %v1502
    %v2643 = vpack.c.b16 %v1511, %v1507
    %v2644 = vpack.c.b16 %v1512, %v1508
    %v2645 = vpack.c.b16 %v1513, %v1509
    %v2646 = vpack.c.b16 %v1514, %v1510
    %v2647 = vpack.c.b16 %v1519, %v1515
    %v2648 = vpack.c.b16 %v1520, %v1516
    %v2649 = vpack.c.b16 %v1521, %v1517
    %v2650 = vpack.c.b16 %v1522, %v1518
    %v2651 = vpack.c.b16 %v1527, %v1523
    %v2652 = vpack.c.b16 %v1528, %v1524
    %v2653 = vpack.c.b16 %v1529, %v1525
    %v2654 = vpack.c.b16 %v1530, %v1526
    %v2655 = vpack.c.b16 %v1535, %v1531
    %v2656 = vpack.c.b16 %v1536, %v1532
    %v2657 = vpack.c.b16 %v1537, %v1533
    %v2658 = vpack.c.b16 %v1538, %v1534
    %v2659 = vpack.c.b16 %v1543, %v1539
    %v2660 = vpack.c.b16 %v1544, %v1540
    %v2661 = vpack.c.b16 %v1545, %v1541
    %v2662 = vpack.c.b16 %v1546, %v1542
    %v2663 = vpack.c.b16 %v1551, %v1547
    %v2664 = vpack.c.b16 %v1552, %v1548
    %v2665 = vpack.c.b16 %v1553, %v1549
    %v2666 = vpack.c.b16 %v1554, %v1550
    %v2667 = vpack.c.b16 %v1559, %v1555
    %v2668 = vpack.c.b16 %v1560, %v1556
    %v2669 = vpack.c.b16 %v1561, %v1557
    %v2670 = vpack.c.b16 %v1562, %v1558
    %v2671 = vpack.c.b16 %v1567, %v1563
    %v2672 = vpack.c.b16 %v1568, %v1564
    %v2673 = vpack.c.b16 %v1569, %v1565
    %v2674 = vpack.c.b16 %v1570, %v1566
    %v2675 = vpack.c.b16 %v1575, %v1571
    %v2676 = vpack.c.b16 %v1576, %v1572
    %v2677 = vpack.c.b16 %v1577, %v1573
    %v2678 = vpack.c.b16 %v1578, %v1574
    %v2679 = vpack.c.b16 %v1583, %v1579
    %v2680 = vpack.c.b16 %v1584, %v1580
    %v2681 = vpack.c.b16 %v1585, %v1581
    %v2682 = vpack.c.b16 %v1586, %v1582
    %v2683 = vpack.c.b16 %v1591, %v1587
    %v2684 = vpack.c.b16 %v1592, %v1588
    %v2685 = vpack.c.b16 %v1593, %v1589
    %v2686 = vpack.c.b16 %v1594, %v1590
    %v2687 = vpack.c.b16 %v1599, %v1595
    %v2688 = vpack.c.b16 %v1600, %v1596
    %v2689 = vpack.c.b16 %v1601, %v1597
    %v2690 = vpack.c.b16 %v1602, %v1598
    %v2691 = vpack.c.b16 %v1607, %v1603
    %v2692 = vpack.c.b16 %v1608, %v1604
    %v2693 = vpack.c.b16 %v1609, %v1605
    %v2694 = vpack.c.b16 %v1610, %v1606
    %v2695 = vpack.c.b16 %v1615, %v1611
    %v2696 = vpack.c.b16 %v1616, %v1612
    %v2697 = vpack.c.b16 %v1617, %v1613
    %v2698 = vpack.c.b16 %v1618, %v1614
    %v2699 = vpack.c.b16 %v1623, %v1619
    %v2700 = vpack.c.b16 %v1624, %v1620
    %v2701 = vpack.c.b16 %v1625, %v1621
    %v2702 = vpack.c.b16 %v1626, %v1622
    %v2703 = vpack.c.b16 %v1631, %v1627
    %v2704 = vpack.c.b16 %v1632, %v1628
    %v2705 = vpack.c.b16 %v1633, %v1629
    %v2706 = vpack.c.b16 %v1634, %v1630
    %v2707 = vpack.c.b16 %v1639, %v1635
    %v2708 = vpack.c.b16 %v1640, %v1636
    %v2709 = vpack.c.b16 %v1641, %v1637
    %v2710 = vpack.c.b16 %v1642, %v1638
    %v2711 = vpack.c.b16 %v1647, %v1643
    %v2712 = vpack.c.b16 %v1648, %v1644
    %v2713 = vpack.c.b16 %v1649, %v1645
    %v2714 = vpack.c.b16 %v1650, %v1646
    %v2715 = vpack.c.b16 %v1655, %v1651
    %v2716 = vpack.c.b16 %v1656, %v1652
    %v2717 = vpack.c.b16 %v1657, %v1653
    %v2718 = vpack.c.b16 %v1658, %v1654
    %v2719 = vpack.c.b16 %v1663, %v1659
    %v2720 = vpack.c.b16 %v1664, %v1660
    %v2721 = vpack.c.b16 %v1665, %v1661
    %v2722 = vpack.c.b16 %v1666, %v1662
    %v2723 = vpack.c.b16 %v1671, %v1667
    %v2724 = vpack.c.b16 %v1672, %v1668
    %v2725 = vpack.c.b16 %v1673, %v1669
    %v2726 = vpack.c.b16 %v1674, %v1670
    %v2727 = vpack.c.b16 %v1679, %v1675
    %v2728 = vpack.c.b16 %v1680, %v1676
    %v2729 = vpack.c.b16 %v1681, %v1677
    %v2730 = vpack.c.b16 %v1682, %v1678
    %v2731 = vpack.c.b16 %v1687, %v1683
    %v2732 = vpack.c.b16 %v1688, %v1684
    %v2733 = vpack.c.b16 %v1689, %v1685
    %v2734 = vpack.c.b16 %v1690, %v1686
    %v2735 = vpack.c.b16 %v1695, %v1691
    %v2736 = vpack.c.b16 %v1696, %v1692
    %v2737 = vpack.c.b16 %v1697, %v1693
    %v2738 = vpack.c.b16 %v1698, %v1694
    %v2739 = vpack.c.b16 %v1703, %v1699
    %v2740 = vpack.c.b16 %v1704, %v1700
    %v2741 = vpack.c.b16 %v1705, %v1701
    %v2742 = vpack.c.b16 %v1706, %v1702
    %v2743 = vpack.c.b16 %v1711, %v1707
    %v2744 = vpack.c.b16 %v1712, %v1708
    %v2745 = vpack.c.b16 %v1713, %v1709
    %v2746 = vpack.c.b16 %v1714, %v1710
    %v2747 = vpack.c.b16 %v1719, %v1715
    %v2748 = vpack.c.b16 %v1720, %v1716
    %v2749 = vpack.c.b16 %v1721, %v1717
    %v2750 = vpack.c.b16 %v1722, %v1718
    %v2751 = vpack.c.b16 %v1727, %v1723
    %v2752 = vpack.c.b16 %v1728, %v1724
    %v2753 = vpack.c.b16 %v1729, %v1725
    %v2754 = vpack.c.b16 %v1730, %v1726
    %v2755 = vpack.c.b16 %v1735, %v1731
    %v2756 = vpack.c.b16 %v1736, %v1732
    %v2757 = vpack.c.b16 %v1737, %v1733
    %v2758 = vpack.c.b16 %v1738, %v1734
    %v2759 = vpack.c.b16 %v1743, %v1739
    %v2760 = vpack.c.b16 %v1744, %v1740
    %v2761 = vpack.c.b16 %v1745, %v1741
    %v2762 = vpack.c.b16 %v1746, %v1742
    %v2763 = vpack.c.b16 %v1751, %v1747
    %v2764 = vpack.c.b16 %v1752, %v1748
    %v2765 = vpack.c.b16 %v1753, %v1749
    %v2766 = vpack.c.b16 %v1754, %v1750
    %v2767 = vpack.c.b16 %v1759, %v1755
    %v2768 = vpack.c.b16 %v1760, %v1756
    %v2769 = vpack.c.b16 %v1761, %v1757
    %v2770 = vpack.c.b16 %v1762, %v1758
    %v2771 = vpack.c.b16 %v1767, %v1763
    %v2772 = vpack.c.b16 %v1768, %v1764
    %v2773 = vpack.c.b16 %v1769, %v1765
    %v2774 = vpack.c.b16 %v1770, %v1766
    %v2775 = vpack.c.b16 %v1775, %v1771
    %v2776 = vpack.c.b16 %v1776, %v1772
    %v2777 = vpack.c.b16 %v1777, %v1773
    %v2778 = vpack.c.b16 %v1778, %v1774
    %v2779 = vpack.c.b16 %v1783, %v1779
    %v2780 = vpack.c.b16 %v1784, %v1780
    %v2781 = vpack.c.b16 %v1785, %v1781
    %v2782 = vpack.c.b16 %v1786, %v1782
    %v2783 = vpack.c.b16 %v1791, %v1787
    %v2784 = vpack.c.b16 %v1792, %v1788
    %v2785 = vpack.c.b16 %v1793, %v1789
    %v2786 = vpack.c.b16 %v1794, %v1790
    %v2787 = vpack.c.b16 %v1799, %v1795
    %v2788 = vpack.c.b16 %v1800, %v1796
    %v2789 = vpack.c.b16 %v1801, %v1797
    %v2790 = vpack.c.b16 %v1802, %v1798
    %v2791 = vpack.c.b16 %v1807, %v1803
    %v2792 = vpack.c.b16 %v1808, %v1804
    %v2793 = vpack.c.b16 %v1809, %v1805
    %v2794 = vpack.c.b16 %v1810, %v1806
    %v2795 = vpack.c.b16 %v1815, %v1811
    %v2796 = vpack.c.b16 %v1816, %v1812
    %v2797 = vpack.c.b16 %v1817, %v1813
    %v2798 = vpack.c.b16 %v1818, %v1814
    %v2799 = vpack.c.b16 %v1823, %v1819
    %v2800 = vpack.c.b16 %v1824, %v1820
    %v2801 = vpack.c.b16 %v1825, %v1821
    %v2802 = vpack.c.b16 %v1826, %v1822
    %v2803 = vpack.c.b16 %v1831, %v1827
    %v2804 = vpack.c.b16 %v1832, %v1828
    %v2805 = vpack.c.b16 %v1833, %v1829
    %v2806 = vpack.c.b16 %v1834, %v1830
    %v2807 = vpack.c.b16 %v1839, %v1835
    %v2808 = vpack.c.b16 %v1840, %v1836
    %v2809 = vpack.c.b16 %v1841, %v1837
    %v2810 = vpack.c.b16 %v1842, %v1838
    %v2811 = vpack.c.b16 %v1847, %v1843
    %v2812 = vpack.c.b16 %v1848, %v1844
    %v2813 = vpack.c.b16 %v1849, %v1845
    %v2814 = vpack.c.b16 %v1850, %v1846
    %v2815 = vpack.c.b16 %v1855, %v1851
    %v2816 = vpack.c.b16 %v1856, %v1852
    %v2817 = vpack.c.b16 %v1857, %v1853
    %v2818 = vpack.c.b16 %v1858, %v1854
    %v2819 = vpack.c.b16 %v1863, %v1859
    %v2820 = vpack.c.b16 %v1864, %v1860
    %v2821 = vpack.c.b16 %v1865, %v1861
    %v2822 = vpack.c.b16 %v1866, %v1862
    %v2823 = vpack.c.b16 %v1871, %v1867
    %v2824 = vpack.c.b16 %v1872, %v1868
    %v2825 = vpack.c.b16 %v1873, %v1869
    %v2826 = vpack.c.b16 %v1874, %v1870
    %v2827 = vpack.c.b16 %v1879, %v1875
    %v2828 = vpack.c.b16 %v1880, %v1876
    %v2829 = vpack.c.b16 %v1881, %v1877
    %v2830 = vpack.c.b16 %v1882, %v1878
    %v2831 = vpack.c.b16 %v1887, %v1883
    %v2832 = vpack.c.b16 %v1888, %v1884
    %v2833 = vpack.c.b16 %v1889, %v1885
    %v2834 = vpack.c.b16 %v1890, %v1886
    %v2835 = vpack.c.b16 %v1895, %v1891
    %v2836 = vpack.c.b16 %v1896, %v1892
    %v2837 = vpack.c.b16 %v1897, %v1893
    %v2838 = vpack.c.b16 %v1898, %v1894
    %v2839 = vpack.c.b16 %v1903, %v1899
    %v2840 = vpack.c.b16 %v1904, %v1900
    %v2841 = vpack.c.b16 %v1905, %v1901
    %v2842 = vpack.c.b16 %v1906, %v1902
    %v2843 = vpack.c.b16 %v1911, %v1907
    %v2844 = vpack.c.b16 %v1912, %v1908
    %v2845 = vpack.c.b16 %v1913, %v1909
    %v2846 = vpack.c.b16 %v1914, %v1910
    %v2847 = vpack.c.b16 %v1919, %v1915
    %v2848 = vpack.c.b16 %v1920, %v1916
    %v2849 = vpack.c.b16 %v1921, %v1917
    %v2850 = vpack.c.b16 %v1922, %v1918
    %v2851 = vpack.c.b16 %v1927, %v1923
    %v2852 = vpack.c.b16 %v1928, %v1924
    %v2853 = vpack.c.b16 %v1929, %v1925
    %v2854 = vpack.c.b16 %v1930, %v1926
    %v2855 = vpack.c.b16 %v1935, %v1931
    %v2856 = vpack.c.b16 %v1936, %v1932
    %v2857 = vpack.c.b16 %v1937, %v1933
    %v2858 = vpack.c.b16 %v1938, %v1934
    %v2859 = vpack.c.b16 %v1943, %v1939
    %v2860 = vpack.c.b16 %v1944, %v1940
    %v2861 = vpack.c.b16 %v1945, %v1941
    %v2862 = vpack.c.b16 %v1946, %v1942
    %v2863 = vpack.c.b16 %v1951, %v1947
    %v2864 = vpack.c.b16 %v1952, %v1948
    %v2865 = vpack.c.b16 %v1953, %v1949
    %v2866 = vpack.c.b16 %v1954, %v1950
    %v2867 = vpack.c.b16 %v1959, %v1955
    %v2868 = vpack.c.b16 %v1960, %v1956
    %v2869 = vpack.c.b16 %v1961, %v1957
    %v2870 = vpack.c.b16 %v1962, %v1958
    %v2871 = vpack.c.b16 %v1967, %v1963
    %v2872 = vpack.c.b16 %v1968, %v1964
    %v2873 = vpack.c.b16 %v1969, %v1965
    %v2874 = vpack.c.b16 %v1970, %v1966
    %v2875 = vpack.c.b16 %v1975, %v1971
    %v2876 = vpack.c.b16 %v1976, %v1972
    %v2877 = vpack.c.b16 %v1977, %v1973
    %v2878 = vpack.c.b16 %v1978, %v1974
    %v2879 = vpack.c.b16 %v1983, %v1979
    %v2880 = vpack.c.b16 %v1984, %v1980
    %v2881 = vpack.c.b16 %v1985, %v1981
    %v2882 = vpack.c.b16 %v1986, %v1982
    %v2883 = vpack.c.b16 %v1991, %v1987
    %v2884 = vpack.c.b16 %v1992, %v1988
    %v2885 = vpack.c.b16 %v1993, %v1989
    %v2886 = vpack.c.b16 %v1994, %v1990
    %v2887 = vpack.c.b16 %v1999, %v1995
    %v2888 = vpack.c.b16 %v2000, %v1996
    %v2889 = vpack.c.b16 %v2001, %v1997
    %v2890 = vpack.c.b16 %v2002, %v1998
    %v2891 = vpack.c.b16 %v2007, %v2003
    %v2892 = vpack.c.b16 %v2008, %v2004
    %v2893 = vpack.c.b16 %v2009, %v2005
    %v2894 = vpack.c.b16 %v2010, %v2006
    %v2895 = vpack.c.b16 %v2015, %v2011
    %v2896 = vpack.c.b16 %v2016, %v2012
    %v2897 = vpack.c.b16 %v2017, %v2013
    %v2898 = vpack.c.b16 %v2018, %v2014
    %v2899 = vpack.c.b16 %v2023, %v2019
    %v2900 = vpack.c.b16 %v2024, %v2020
    %v2901 = vpack.c.b16 %v2025, %v2021
    %v2902 = vpack.c.b16 %v2026, %v2022
    %v2903 = vpack.c.b16 %v2031, %v2027
    %v2904 = vpack.c.b16 %v2032, %v2028
    %v2905 = vpack.c.b16 %v2033, %v2029
    %v2906 = vpack.c.b16 %v2034, %v2030
    %v2907 = vpack.c.b16 %v2039, %v2035
    %v2908 = vpack.c.b16 %v2040, %v2036
    %v2909 = vpack.c.b16 %v2041, %v2037
    %v2910 = vpack.c.b16 %v2042, %v2038
    %v2911 = vpack.c.b16 %v2047, %v2043
    %v2912 = vpack.c.b16 %v2048, %v2044
    %v2913 = vpack.c.b16 %v2049, %v2045
    %v2914 = vpack.c.b16 %v2050, %v2046
    %v2915 = vpack.c.b16 %v2055, %v2051
    %v2916 = vpack.c.b16 %v2056, %v2052
    %v2917 = vpack.c.b16 %v2057, %v2053
    %v2918 = vpack.c.b16 %v2058, %v2054
    %v2919 = vpack.c.b16 %v2063, %v2059
    %v2920 = vpack.c.b16 %v2064, %v2060
    %v2921 = vpack.c.b16 %v2065, %v2061
    %v2922 = vpack.c.b16 %v2066, %v2062
    %v2923 = vpack.c.b16 %v2071, %v2067
    %v2924 = vpack.c.b16 %v2072, %v2068
    %v2925 = vpack.c.b16 %v2073, %v2069
    %v2926 = vpack.c.b16 %v2074, %v2070
    %v2927 = vpack.c.b16 %v2079, %v2075
    %v2928 = vpack.c.b16 %v2080, %v2076
    %v2929 = vpack.c.b16 %v2081, %v2077
    %v2930 = vpack.c.b16 %v2082, %v2078
    %v2931 = vpack.c.b16 %v2087, %v2083
    %v2932 = vpack.c.b16 %v2088, %v2084
    %v2933 = vpack.c.b16 %v2089, %v2085
    %v2934 = vpack.c.b16 %v2090, %v2086
    %v2935 = vpack.c.b16 %v2095, %v2091
    %v2936 = vpack.c.b16 %v2096, %v2092
    %v2937 = vpack.c.b16 %v2097, %v2093
    %v2938 = vpack.c.b16 %v2098, %v2094
    %v2939 = vpack.c.b16 %v2103, %v2099
    %v2940 = vpack.c.b16 %v2104, %v2100
    %v2941 = vpack.c.b16 %v2105, %v2101
    %v2942 = vpack.c.b16 %v2106, %v2102
    %v2943 = vpack.c.b16 %v2111, %v2107
    %v2944 = vpack.c.b16 %v2112, %v2108
    %v2945 = vpack.c.b16 %v2113, %v2109
    %v2946 = vpack.c.b16 %v2114, %v2110
    %v2947 = vpack.c.b16 %v2119, %v2115
    %v2948 = vpack.c.b16 %v2120, %v2116
    %v2949 = vpack.c.b16 %v2121, %v2117
    %v2950 = vpack.c.b16 %v2122, %v2118
    %v2951 = vpack.c.b16 %v2127, %v2123
    %v2952 = vpack.c.b16 %v2128, %v2124
    %v2953 = vpack.c.b16 %v2129, %v2125
    %v2954 = vpack.c.b16 %v2130, %v2126
    %v2955 = vpack.c.b16 %v2135, %v2131
    %v2956 = vpack.c.b16 %v2136, %v2132
    %v2957 = vpack.c.b16 %v2137, %v2133
    %v2958 = vpack.c.b16 %v2138, %v2134
    %v2959 = vpack.c.b16 %v2143, %v2139
    %v2960 = vpack.c.b16 %v2144, %v2140
    %v2961 = vpack.c.b16 %v2145, %v2141
    %v2962 = vpack.c.b16 %v2146, %v2142
    %v2963 = vpack.c.b16 %v2151, %v2147
    %v2964 = vpack.c.b16 %v2152, %v2148
    %v2965 = vpack.c.b16 %v2153, %v2149
    %v2966 = vpack.c.b16 %v2154, %v2150
    %v2967 = vpack.c.b16 %v2159, %v2155
    %v2968 = vpack.c.b16 %v2160, %v2156
    %v2969 = vpack.c.b16 %v2161, %v2157
    %v2970 = vpack.c.b16 %v2162, %v2158
    %v2971 = vpack.c.b16 %v2167, %v2163
    %v2972 = vpack.c.b16 %v2168, %v2164
    %v2973 = vpack.c.b16 %v2169, %v2165
    %v2974 = vpack.c.b16 %v2170, %v2166
    %v2975 = vpack.c.b16 %v2175, %v2171
    %v2976 = vpack.c.b16 %v2176, %v2172
    %v2977 = vpack.c.b16 %v2177, %v2173
    %v2978 = vpack.c.b16 %v2178, %v2174
    %v2979 = vpack.c.b16 %v2183, %v2179
    %v2980 = vpack.c.b16 %v2184, %v2180
    %v2981 = vpack.c.b16 %v2185, %v2181
    %v2982 = vpack.c.b16 %v2186, %v2182
    %v2983 = vpack.c.b16 %v2191, %v2187
    %v2984 = vpack.c.b16 %v2192, %v2188
    %v2985 = vpack.c.b16 %v2193, %v2189
    %v2986 = vpack.c.b16 %v2194, %v2190
    %v2987 = vpack.c.b16 %v2199, %v2195
    %v2988 = vpack.c.b16 %v2200, %v2196
    %v2989 = vpack.c.b16 %v2201, %v2197
    %v2990 = vpack.c.b16 %v2202, %v2198
    %v2991 = vpack.c.b16 %v2207, %v2203
    %v2992 = vpack.c.b16 %v2208, %v2204
    %v2993 = vpack.c.b16 %v2209, %v2205
    %v2994 = vpack.c.b16 %v2210, %v2206
    %v2995 = vpack.c.b16 %v2215, %v2211
    %v2996 = vpack.c.b16 %v2216, %v2212
    %v2997 = vpack.c.b16 %v2217, %v2213
    %v2998 = vpack.c.b16 %v2218, %v2214
    %v2999 = vpack.c.b16 %v2223, %v2219
    %v3000 = vpack.c.b16 %v2224, %v2220
    %v3001 = vpack.c.b16 %v2225, %v2221
    %v3002 = vpack.c.b16 %v2226, %v2222
    %v3003 = vpack.c.b16 %v2231, %v2227
    %v3004 = vpack.c.b16 %v2232, %v2228
    %v3005 = vpack.c.b16 %v2233, %v2229
    %v3006 = vpack.c.b16 %v2234, %v2230
    %v3007 = vpack.c.b16 %v2239, %v2235
    %v3008 = vpack.c.b16 %v2240, %v2236
    %v3009 = vpack.c.b16 %v2241, %v2237
    %v3010 = vpack.c.b16 %v2242, %v2238
    %v3011 = vpack.c.b16 %v2247, %v2243
    %v3012 = vpack.c.b16 %v2248, %v2244
    %v3013 = vpack.c.b16 %v2249, %v2245
    %v3014 = vpack.c.b16 %v2250, %v2246
    %v3015 = vpack.c.b16 %v2255, %v2251
    %v3016 = vpack.c.b16 %v2256, %v2252
    %v3017 = vpack.c.b16 %v2257, %v2253
    %v3018 = vpack.c.b16 %v2258, %v2254
    %v3019 = vpack.c.b16 %v2263, %v2259
    %v3020 = vpack.c.b16 %v2264, %v2260
    %v3021 = vpack.c.b16 %v2265, %v2261
    %v3022 = vpack.c.b16 %v2266, %v2262
    %v3023 = vpack.c.b16 %v2271, %v2267
    %v3024 = vpack.c.b16 %v2272, %v2268
    %v3025 = vpack.c.b16 %v2273, %v2269
    %v3026 = vpack.c.b16 %v2274, %v2270
    %v3027 = vpack.c.b16 %v2279, %v2275
    %v3028 = vpack.c.b16 %v2280, %v2276
    %v3029 = vpack.c.b16 %v2281, %v2277
    %v3030 = vpack.c.b16 %v2282, %v2278
    %v3031 = vpack.c.b16 %v2287, %v2283
    %v3032 = vpack.c.b16 %v2288, %v2284
    %v3033 = vpack.c.b16 %v2289, %v2285
    %v3034 = vpack.c.b16 %v2290, %v2286
    %v3035 = vpack.c.b16 %v2295, %v2291
    %v3036 = vpack.c.b16 %v2296, %v2292
    %v3037 = vpack.c.b16 %v2297, %v2293
    %v3038 = vpack.c.b16 %v2298, %v2294
    %v3039 = vpack.c.b16 %v2303, %v2299
    %v3040 = vpack.c.b16 %v2304, %v2300
    %v3041 = vpack.c.b16 %v2305, %v2301
    %v3042 = vpack.c.b16 %v2306, %v2302
    %v3043 = vpack.c.b16 %v2311, %v2307
    %v3044 = vpack.c.b16 %v2312, %v2308
    %v3045 = vpack.c.b16 %v2313, %v2309
    %v3046 = vpack.c.b16 %v2314, %v2310
    %v3047 = vpack.c.b16 %v2319, %v2315
    %v3048 = vpack.c.b16 %v2320, %v2316
    %v3049 = vpack.c.b16 %v2321, %v2317
    %v3050 = vpack.c.b16 %v2322, %v2318
    %v3051 = vpack.c.b16 %v2327, %v2323
    %v3052 = vpack.c.b16 %v2328, %v2324
    %v3053 = vpack.c.b16 %v2329, %v2325
    %v3054 = vpack.c.b16 %v2330, %v2326
    %v3055 = vpack.c.b16 %v2335, %v2331
    %v3056 = vpack.c.b16 %v2336, %v2332
    %v3057 = vpack.c.b16 %v2337, %v2333
    %v3058 = vpack.c.b16 %v2338, %v2334
    %v3059 = vpack.c.b16 %v2343, %v2339
    %v3060 = vpack.c.b16 %v2344, %v2340
    %v3061 = vpack.c.b16 %v2345, %v2341
    %v3062 = vpack.c.b16 %v2346, %v2342
    %v3063 = vpack.c.b16 %v2351, %v2347
    %v3064 = vpack.c.b16 %v2352, %v2348
    %v3065 = vpack.c.b16 %v2353, %v2349
    %v3066 = vpack.c.b16 %v2354, %v2350
    %v3067 = vpack.c.b16 %v2359, %v2355
    %v3068 = vpack.c.b16 %v2360, %v2356
    %v3069 = vpack.c.b16 %v2361, %v2357
    %v3070 = vpack.c.b16 %v2362, %v2358
    %v3071 = vpack.c.b16 %v2367, %v2363
    %v3072 = vpack.c.b16 %v2368, %v2364
    %v3073 = vpack.c.b16 %v2369, %v2365
    %v3074 = vpack.c.b16 %v2370, %v2366
    %v3075 = vpack.c.b16 %v2375, %v2371
    %v3076 = vpack.c.b16 %v2376, %v2372
    %v3077 = vpack.c.b16 %v2377, %v2373
    %v3078 = vpack.c.b16 %v2378, %v2374
    %v3079 = vpack.c.b16 %v2383, %v2379
    %v3080 = vpack.c.b16 %v2384, %v2380
    %v3081 = vpack.c.b16 %v2385, %v2381
    %v3082 = vpack.c.b16 %v2386, %v2382
    %v3083 = vpack.c.b16 %v2391, %v2387
    %v3084 = vpack.c.b16 %v2392, %v2388
    %v3085 = vpack.c.b16 %v2393, %v2389
    %v3086 = vpack.c.b16 %v2394, %v2390
    %v3087 = vpack.c.b16 %v2399, %v2395
    %v3088 = vpack.c.b16 %v2400, %v2396
    %v3089 = vpack.c.b16 %v2401, %v2397
    %v3090 = vpack.c.b16 %v2402, %v2398
    %v3091 = vpack.c.b16 %v2407, %v2403
    %v3092 = vpack.c.b16 %v2408, %v2404
    %v3093 = vpack.c.b16 %v2409, %v2405
    %v3094 = vpack.c.b16 %v2410, %v2406
    %v3095 = vpack.c.b16 %v2415, %v2411
    %v3096 = vpack.c.b16 %v2416, %v2412
    %v3097 = vpack.c.b16 %v2417, %v2413
    %v3098 = vpack.c.b16 %v2418, %v2414
    %v3099 = vpack.c.b16 %v2423, %v2419
    %v3100 = vpack.c.b16 %v2424, %v2420
    %v3101 = vpack.c.b16 %v2425, %v2421
    %v3102 = vpack.c.b16 %v2426, %v2422
    %v3103 = vpack.c.b16 %v2431, %v2427
    %v3104 = vpack.c.b16 %v2432, %v2428
    %v3105 = vpack.c.b16 %v2433, %v2429
    %v3106 = vpack.c.b16 %v2434, %v2430
    %v3107 = vpack.c.b16 %v2439, %v2435
    %v3108 = vpack.c.b16 %v2440, %v2436
    %v3109 = vpack.c.b16 %v2441, %v2437
    %v3110 = vpack.c.b16 %v2442, %v2438
    %v3111 = vpack.c.b16 %v2447, %v2443
    %v3112 = vpack.c.b16 %v2448, %v2444
    %v3113 = vpack.c.b16 %v2449, %v2445
    %v3114 = vpack.c.b16 %v2450, %v2446
    %v3115 = vpack.c.b16 %v2455, %v2451
    %v3116 = vpack.c.b16 %v2456, %v2452
    %v3117 = vpack.c.b16 %v2457, %v2453
    %v3118 = vpack.c.b16 %v2458, %v2454
    %v3119 = vpack.c.b16 %v2463, %v2459
    %v3120 = vpack.c.b16 %v2464, %v2460
    %v3121 = vpack.c.b16 %v2465, %v2461
    %v3122 = vpack.c.b16 %v2466, %v2462
    %v3123 = vpack.c.b16 %v2471, %v2467
    %v3124 = vpack.c.b16 %v2472, %v2468
    %v3125 = vpack.c.b16 %v2473, %v2469
    %v3126 = vpack.c.b16 %v2474, %v2470
    %v3127 = vpack.c.b16 %v2479, %v2475
    %v3128 = vpack.c.b16 %v2480, %v2476
    %v3129 = vpack.c.b16 %v2481, %v2477
    %v3130 = vpack.c.b16 %v2482, %v2478
    %v3131 = vpack.c.b16 %v2487, %v2483
    %v3132 = vpack.c.b16 %v2488, %v2484
    %v3133 = vpack.c.b16 %v2489, %v2485
    %v3134 = vpack.c.b16 %v2490, %v2486
    %v3135 = vpack.c.b16 %v2495, %v2491
    %v3136 = vpack.c.b16 %v2496, %v2492
    %v3137 = vpack.c.b16 %v2497, %v2493
    %v3138 = vpack.c.b16 %v2498, %v2494
    %v3139 = vpack.c.b16 %v2503, %v2499
    %v3140 = vpack.c.b16 %v2504, %v2500
    %v3141 = vpack.c.b16 %v2505, %v2501
    %v3142 = vpack.c.b16 %v2506, %v2502
    %v3143 = vpack.c.b16 %v2511, %v2507
    %v3144 = vpack.c.b16 %v2512, %v2508
    %v3145 = vpack.c.b16 %v2513, %v2509
    %v3146 = vpack.c.b16 %v2514, %v2510
    %v3147 = vpack.c.b16 %v2519, %v2515
    %v3148 = vpack.c.b16 %v2520, %v2516
    %v3149 = vpack.c.b16 %v2521, %v2517
    %v3150 = vpack.c.b16 %v2522, %v2518
    %v3151 = vpack.c.b16 %v2527, %v2523
    %v3152 = vpack.c.b16 %v2528, %v2524
    %v3153 = vpack.c.b16 %v2529, %v2525
    %v3154 = vpack.c.b16 %v2530, %v2526
    %v3155 = vpack.c.b16 %v2535, %v2531
    %v3156 = vpack.c.b16 %v2536, %v2532
    %v3157 = vpack.c.b16 %v2537, %v2533
    %v3158 = vpack.c.b16 %v2538, %v2534
    %v3159 = vpack.c.b16 %v2543, %v2539
    %v3160 = vpack.c.b16 %v2544, %v2540
    %v3161 = vpack.c.b16 %v2545, %v2541
    %v3162 = vpack.c.b16 %v2546, %v2542
    %v3163 = vpack.c.b16 %v2551, %v2547
    %v3164 = vpack.c.b16 %v2552, %v2548
    %v3165 = vpack.c.b16 %v2553, %v2549
    %v3166 = vpack.c.b16 %v2554, %v2550
    %v3167 = vpack.c.b16 %v2559, %v2555
    %v3168 = vpack.c.b16 %v2560, %v2556
    %v3169 = vpack.c.b16 %v2561, %v2557
    %v3170 = vpack.c.b16 %v2562, %v2558
    %3779 = vmatpush.bf16.msra.mxu0 %v2591
    %3780 = vmatpush.bf16.msra.mxu0 %v2587
    %3781 = vmatpush.bf16.msra.mxu0 %v2583
    %3782 = vmatpush.bf16.msra.mxu0 %v2579
    %3783 = vmatpush.bf16.msra.mxu0 %v2575
    %3784 = vmatpush.bf16.msra.mxu0 %v2571
    %3785 = vmatpush.bf16.msra.mxu0 %v2567
    %3786 = vmatpush.bf16.msra.mxu0 %v2563
    %3787 = vmatmul.bf16.gmra.mxu0 %v701
    %v3788 = vpop.f32.mrf.mxu0
    %v3789 = vadd.f32 %v664, %v3788
    %v3790 = vpop.f32.mrf.mxu0
    %3791 = vdwg.mxu0
    %3792 = vmatpush.bf16.msra.mxu0 %v2623
    %3793 = vmatpush.bf16.msra.mxu0 %v2619
    %3794 = vmatpush.bf16.msra.mxu0 %v2615
    %3795 = vmatpush.bf16.msra.mxu0 %v2611
    %3796 = vmatpush.bf16.msra.mxu0 %v2607
    %3797 = vmatpush.bf16.msra.mxu0 %v2603
    %3798 = vmatpush.bf16.msra.mxu0 %v2599
    %3799 = vmatpush.bf16.msra.mxu0 %v2595
    %3800 = vmatmul.bf16.gmra.mxu0 %v702
    %v3801 = vpop.f32.mrf.mxu0
    %v3802 = vadd.f32 %v3789, %v3801
    %v3803 = vpop.f32.mrf.mxu0
    %3804 = vdwg.mxu0
    %3805 = vmatpush.bf16.msra.mxu0 %v2655
    %3806 = vmatpush.bf16.msra.mxu0 %v2651
    %3807 = vmatpush.bf16.msra.mxu0 %v2647
    %3808 = vmatpush.bf16.msra.mxu0 %v2643
    %3809 = vmatpush.bf16.msra.mxu0 %v2639
    %3810 = vmatpush.bf16.msra.mxu0 %v2635
    %3811 = vmatpush.bf16.msra.mxu0 %v2631
    %3812 = vmatpush.bf16.msra.mxu0 %v2627
    %3813 = vmatmul.bf16.gmra.mxu0 %v703
    %v3814 = vpop.f32.mrf.mxu0
    %v3815 = vadd.f32 %v3802, %v3814
    %v3816 = vpop.f32.mrf.mxu0
    %3817 = vdwg.mxu0
    %3818 = vmatpush.bf16.msra.mxu0 %v2687
    %3819 = vmatpush.bf16.msra.mxu0 %v2683
    %3820 = vmatpush.bf16.msra.mxu0 %v2679
    %3821 = vmatpush.bf16.msra.mxu0 %v2675
    %3822 = vmatpush.bf16.msra.mxu0 %v2671
    %3823 = vmatpush.bf16.msra.mxu0 %v2667
    %3824 = vmatpush.bf16.msra.mxu0 %v2663
    %3825 = vmatpush.bf16.msra.mxu0 %v2659
    %3826 = vmatmul.bf16.gmra.mxu0 %v704
    %v3827 = vpop.f32.mrf.mxu0
    %v3828 = vadd.f32 %v3815, %v3827
    %v3829 = vpop.f32.mrf.mxu0
    %3830 = vdwg.mxu0
    %3831 = vmatpush.bf16.msra.mxu0 %v2719
    %3832 = vmatpush.bf16.msra.mxu0 %v2715
    %3833 = vmatpush.bf16.msra.mxu0 %v2711
    %3834 = vmatpush.bf16.msra.mxu0 %v2707
    %3835 = vmatpush.bf16.msra.mxu0 %v2703
    %3836 = vmatpush.bf16.msra.mxu0 %v2699
    %3837 = vmatpush.bf16.msra.mxu0 %v2695
    %3838 = vmatpush.bf16.msra.mxu0 %v2691
    %3839 = vmatmul.bf16.gmra.mxu0 %v705
    %v3840 = vpop.f32.mrf.mxu0
    %v3841 = vadd.f32 %v3828, %v3840
    %v3842 = vpop.f32.mrf.mxu0
    %3843 = vdwg.mxu0
    %3844 = vmatpush.bf16.msra.mxu0 %v2751
    %3845 = vmatpush.bf16.msra.mxu0 %v2747
    %3846 = vmatpush.bf16.msra.mxu0 %v2743
    %3847 = vmatpush.bf16.msra.mxu0 %v2739
    %3848 = vmatpush.bf16.msra.mxu0 %v2735
    %3849 = vmatpush.bf16.msra.mxu0 %v2731
    %3850 = vmatpush.bf16.msra.mxu0 %v2727
    %3851 = vmatpush.bf16.msra.mxu0 %v2723
    %3852 = vmatmul.bf16.gmra.mxu0 %v706
    %v3853 = vpop.f32.mrf.mxu0
    %v3854 = vadd.f32 %v3841, %v3853
    %v3855 = vpop.f32.mrf.mxu0
    %3856 = vdwg.mxu0
    %3857 = vmatpush.bf16.msra.mxu0 %v2783
    %3858 = vmatpush.bf16.msra.mxu0 %v2779
    %3859 = vmatpush.bf16.msra.mxu0 %v2775
    %3860 = vmatpush.bf16.msra.mxu0 %v2771
    %3861 = vmatpush.bf16.msra.mxu0 %v2767
    %3862 = vmatpush.bf16.msra.mxu0 %v2763
    %3863 = vmatpush.bf16.msra.mxu0 %v2759
    %3864 = vmatpush.bf16.msra.mxu0 %v2755
    %3865 = vmatmul.bf16.gmra.mxu0 %v707
    %v3866 = vpop.f32.mrf.mxu0
    %v3867 = vadd.f32 %v3854, %v3866
    %v3868 = vpop.f32.mrf.mxu0
    %3869 = vdwg.mxu0
    %3870 = vmatpush.bf16.msra.mxu0 %v2815
    %3871 = vmatpush.bf16.msra.mxu0 %v2811
    %3872 = vmatpush.bf16.msra.mxu0 %v2807
    %3873 = vmatpush.bf16.msra.mxu0 %v2803
    %3874 = vmatpush.bf16.msra.mxu0 %v2799
    %3875 = vmatpush.bf16.msra.mxu0 %v2795
    %3876 = vmatpush.bf16.msra.mxu0 %v2791
    %3877 = vmatpush.bf16.msra.mxu0 %v2787
    %3878 = vmatmul.bf16.gmra.mxu0 %v708
    %v3879 = vpop.f32.mrf.mxu0
    %v3880 = vadd.f32 %v3867, %v3879
    %v3881 = vpop.f32.mrf.mxu0
    %3882 = vdwg.mxu0
    %3883 = vmatpush.bf16.msra.mxu0 %v2847
    %3884 = vmatpush.bf16.msra.mxu0 %v2843
    %3885 = vmatpush.bf16.msra.mxu0 %v2839
    %3886 = vmatpush.bf16.msra.mxu0 %v2835
    %3887 = vmatpush.bf16.msra.mxu0 %v2831
    %3888 = vmatpush.bf16.msra.mxu0 %v2827
    %3889 = vmatpush.bf16.msra.mxu0 %v2823
    %3890 = vmatpush.bf16.msra.mxu0 %v2819
    %3891 = vmatmul.bf16.gmra.mxu0 %v709
    %v3892 = vpop.f32.mrf.mxu0
    %v3893 = vadd.f32 %v3880, %v3892
    %v3894 = vpop.f32.mrf.mxu0
    %3895 = vdwg.mxu0
    %3896 = vmatpush.bf16.msra.mxu0 %v2879
    %3897 = vmatpush.bf16.msra.mxu0 %v2875
    %3898 = vmatpush.bf16.msra.mxu0 %v2871
    %3899 = vmatpush.bf16.msra.mxu0 %v2867
    %3900 = vmatpush.bf16.msra.mxu0 %v2863
    %3901 = vmatpush.bf16.msra.mxu0 %v2859
    %3902 = vmatpush.bf16.msra.mxu0 %v2855
    %3903 = vmatpush.bf16.msra.mxu0 %v2851
    %3904 = vmatmul.bf16.gmra.mxu0 %v710
    %v3905 = vpop.f32.mrf.mxu0
    %v3906 = vadd.f32 %v3893, %v3905
    %v3907 = vpop.f32.mrf.mxu0
    %3908 = vdwg.mxu0
    %3909 = vmatpush.bf16.msra.mxu0 %v2911
    %3910 = vmatpush.bf16.msra.mxu0 %v2907
    %3911 = vmatpush.bf16.msra.mxu0 %v2903
    %3912 = vmatpush.bf16.msra.mxu0 %v2899
    %3913 = vmatpush.bf16.msra.mxu0 %v2895
    %3914 = vmatpush.bf16.msra.mxu0 %v2891
    %3915 = vmatpush.bf16.msra.mxu0 %v2887
    %3916 = vmatpush.bf16.msra.mxu0 %v2883
    %3917 = vmatmul.bf16.gmra.mxu0 %v711
    %v3918 = vpop.f32.mrf.mxu0
    %v3919 = vadd.f32 %v3906, %v3918
    %v3920 = vpop.f32.mrf.mxu0
    %3921 = vdwg.mxu0
    %3922 = vmatpush.bf16.msra.mxu0 %v2943
    %3923 = vmatpush.bf16.msra.mxu0 %v2939
    %3924 = vmatpush.bf16.msra.mxu0 %v2935
    %3925 = vmatpush.bf16.msra.mxu0 %v2931
    %3926 = vmatpush.bf16.msra.mxu0 %v2927
    %3927 = vmatpush.bf16.msra.mxu0 %v2923
    %3928 = vmatpush.bf16.msra.mxu0 %v2919
    %3929 = vmatpush.bf16.msra.mxu0 %v2915
    %3930 = vmatmul.bf16.gmra.mxu0 %v712
    %v3931 = vpop.f32.mrf.mxu0
    %v3932 = vadd.f32 %v3919, %v3931
    %v3933 = vpop.f32.mrf.mxu0
    %3934 = vdwg.mxu0
    %3935 = vmatpush.bf16.msra.mxu0 %v2975
    %3936 = vmatpush.bf16.msra.mxu0 %v2971
    %3937 = vmatpush.bf16.msra.mxu0 %v2967
    %3938 = vmatpush.bf16.msra.mxu0 %v2963
    %3939 = vmatpush.bf16.msra.mxu0 %v2959
    %3940 = vmatpush.bf16.msra.mxu0 %v2955
    %3941 = vmatpush.bf16.msra.mxu0 %v2951
    %3942 = vmatpush.bf16.msra.mxu0 %v2947
    %3943 = vmatmul.bf16.gmra.mxu0 %v713
    %v3944 = vpop.f32.mrf.mxu0
    %v3945 = vadd.f32 %v3932, %v3944
    %v3946 = vpop.f32.mrf.mxu0
    %3947 = vdwg.mxu0
    %3948 = vmatpush.bf16.msra.mxu0 %v3007
    %3949 = vmatpush.bf16.msra.mxu0 %v3003
    %3950 = vmatpush.bf16.msra.mxu0 %v2999
    %3951 = vmatpush.bf16.msra.mxu0 %v2995
    %3952 = vmatpush.bf16.msra.mxu0 %v2991
    %3953 = vmatpush.bf16.msra.mxu0 %v2987
    %3954 = vmatpush.bf16.msra.mxu0 %v2983
    %3955 = vmatpush.bf16.msra.mxu0 %v2979
    %3956 = vmatmul.bf16.gmra.mxu0 %v714
    %v3957 = vpop.f32.mrf.mxu0
    %v3958 = vadd.f32 %v3945, %v3957
    %v3959 = vpop.f32.mrf.mxu0
    %3960 = vdwg.mxu0
    %3961 = vmatpush.bf16.msra.mxu0 %v3039
    %3962 = vmatpush.bf16.msra.mxu0 %v3035
    %3963 = vmatpush.bf16.msra.mxu0 %v3031
    %3964 = vmatpush.bf16.msra.mxu0 %v3027
    %3965 = vmatpush.bf16.msra.mxu0 %v3023
    %3966 = vmatpush.bf16.msra.mxu0 %v3019
    %3967 = vmatpush.bf16.msra.mxu0 %v3015
    %3968 = vmatpush.bf16.msra.mxu0 %v3011
    %3969 = vmatmul.bf16.gmra.mxu0 %v715
    %v3970 = vpop.f32.mrf.mxu0
    %v3971 = vadd.f32 %v3958, %v3970
    %v3972 = vpop.f32.mrf.mxu0
    %3973 = vdwg.mxu0
    %3974 = vmatpush.bf16.msra.mxu0 %v3071
    %3975 = vmatpush.bf16.msra.mxu0 %v3067
    %3976 = vmatpush.bf16.msra.mxu0 %v3063
    %3977 = vmatpush.bf16.msra.mxu0 %v3059
    %3978 = vmatpush.bf16.msra.mxu0 %v3055
    %3979 = vmatpush.bf16.msra.mxu0 %v3051
    %3980 = vmatpush.bf16.msra.mxu0 %v3047
    %3981 = vmatpush.bf16.msra.mxu0 %v3043
    %3982 = vmatmul.bf16.gmra.mxu0 %v716
    %v3983 = vpop.f32.mrf.mxu0
    %v3984 = vadd.f32 %v3971, %v3983
    %v3985 = vpop.f32.mrf.mxu0
    %3986 = vdwg.mxu0
    %3987 = vmatpush.bf16.msra.mxu0 %v3103
    %3988 = vmatpush.bf16.msra.mxu0 %v3099
    %3989 = vmatpush.bf16.msra.mxu0 %v3095
    %3990 = vmatpush.bf16.msra.mxu0 %v3091
    %3991 = vmatpush.bf16.msra.mxu0 %v3087
    %3992 = vmatpush.bf16.msra.mxu0 %v3083
    %3993 = vmatpush.bf16.msra.mxu0 %v3079
    %3994 = vmatpush.bf16.msra.mxu0 %v3075
    %3995 = vmatmul.bf16.gmra.mxu0 %v717
    %v3996 = vpop.f32.mrf.mxu0
    %v3997 = vadd.f32 %v3984, %v3996
    %v3998 = vpop.f32.mrf.mxu0
    %3999 = vdwg.mxu0
    %4000 = vmatpush.bf16.msra.mxu0 %v3135
    %4001 = vmatpush.bf16.msra.mxu0 %v3131
    %4002 = vmatpush.bf16.msra.mxu0 %v3127
    %4003 = vmatpush.bf16.msra.mxu0 %v3123
    %4004 = vmatpush.bf16.msra.mxu0 %v3119
    %4005 = vmatpush.bf16.msra.mxu0 %v3115
    %4006 = vmatpush.bf16.msra.mxu0 %v3111
    %4007 = vmatpush.bf16.msra.mxu0 %v3107
    %4008 = vmatmul.bf16.gmra.mxu0 %v718
    %v4009 = vpop.f32.mrf.mxu0
    %v4010 = vadd.f32 %v3997, %v4009
    %v4011 = vpop.f32.mrf.mxu0
    %4012 = vdwg.mxu0
    %4013 = vmatpush.bf16.msra.mxu0 %v3167
    %4014 = vmatpush.bf16.msra.mxu0 %v3163
    %4015 = vmatpush.bf16.msra.mxu0 %v3159
    %4016 = vmatpush.bf16.msra.mxu0 %v3155
    %4017 = vmatpush.bf16.msra.mxu0 %v3151
    %4018 = vmatpush.bf16.msra.mxu0 %v3147
    %4019 = vmatpush.bf16.msra.mxu0 %v3143
    %4020 = vmatpush.bf16.msra.mxu0 %v3139
    %4021 = vmatmul.bf16.gmra.mxu0 %v719
    %v4022 = vpop.f32.mrf.mxu0
    %v4023 = vadd.f32 %v4010, %v4022
    %v4024 = vpop.f32.mrf.mxu0
    %4025 = vdwg.mxu0
    %4026 = vmatpush.bf16.msra.mxu0 %v2592
    %4027 = vmatpush.bf16.msra.mxu0 %v2588
    %4028 = vmatpush.bf16.msra.mxu0 %v2584
    %4029 = vmatpush.bf16.msra.mxu0 %v2580
    %4030 = vmatpush.bf16.msra.mxu0 %v2576
    %4031 = vmatpush.bf16.msra.mxu0 %v2572
    %4032 = vmatpush.bf16.msra.mxu0 %v2568
    %4033 = vmatpush.bf16.msra.mxu0 %v2564
    %4034 = vmatmul.bf16.gmra.mxu0 %v701
    %v4035 = vpop.f32.mrf.mxu0
    %v4036 = vadd.f32 %v665, %v4035
    %v4037 = vpop.f32.mrf.mxu0
    %4038 = vdwg.mxu0
    %4039 = vmatpush.bf16.msra.mxu0 %v2624
    %4040 = vmatpush.bf16.msra.mxu0 %v2620
    %4041 = vmatpush.bf16.msra.mxu0 %v2616
    %4042 = vmatpush.bf16.msra.mxu0 %v2612
    %4043 = vmatpush.bf16.msra.mxu0 %v2608
    %4044 = vmatpush.bf16.msra.mxu0 %v2604
    %4045 = vmatpush.bf16.msra.mxu0 %v2600
    %4046 = vmatpush.bf16.msra.mxu0 %v2596
    %4047 = vmatmul.bf16.gmra.mxu0 %v702
    %v4048 = vpop.f32.mrf.mxu0
    %v4049 = vadd.f32 %v4036, %v4048
    %v4050 = vpop.f32.mrf.mxu0
    %4051 = vdwg.mxu0
    %4052 = vmatpush.bf16.msra.mxu0 %v2656
    %4053 = vmatpush.bf16.msra.mxu0 %v2652
    %4054 = vmatpush.bf16.msra.mxu0 %v2648
    %4055 = vmatpush.bf16.msra.mxu0 %v2644
    %4056 = vmatpush.bf16.msra.mxu0 %v2640
    %4057 = vmatpush.bf16.msra.mxu0 %v2636
    %4058 = vmatpush.bf16.msra.mxu0 %v2632
    %4059 = vmatpush.bf16.msra.mxu0 %v2628
    %4060 = vmatmul.bf16.gmra.mxu0 %v703
    %v4061 = vpop.f32.mrf.mxu0
    %v4062 = vadd.f32 %v4049, %v4061
    %v4063 = vpop.f32.mrf.mxu0
    %4064 = vdwg.mxu0
    %4065 = vmatpush.bf16.msra.mxu0 %v2688
    %4066 = vmatpush.bf16.msra.mxu0 %v2684
    %4067 = vmatpush.bf16.msra.mxu0 %v2680
    %4068 = vmatpush.bf16.msra.mxu0 %v2676
    %4069 = vmatpush.bf16.msra.mxu0 %v2672
    %4070 = vmatpush.bf16.msra.mxu0 %v2668
    %4071 = vmatpush.bf16.msra.mxu0 %v2664
    %4072 = vmatpush.bf16.msra.mxu0 %v2660
    %4073 = vmatmul.bf16.gmra.mxu0 %v704
    %v4074 = vpop.f32.mrf.mxu0
    %v4075 = vadd.f32 %v4062, %v4074
    %v4076 = vpop.f32.mrf.mxu0
    %4077 = vdwg.mxu0
    %4078 = vmatpush.bf16.msra.mxu0 %v2720
    %4079 = vmatpush.bf16.msra.mxu0 %v2716
    %4080 = vmatpush.bf16.msra.mxu0 %v2712
    %4081 = vmatpush.bf16.msra.mxu0 %v2708
    %4082 = vmatpush.bf16.msra.mxu0 %v2704
    %4083 = vmatpush.bf16.msra.mxu0 %v2700
    %4084 = vmatpush.bf16.msra.mxu0 %v2696
    %4085 = vmatpush.bf16.msra.mxu0 %v2692
    %4086 = vmatmul.bf16.gmra.mxu0 %v705
    %v4087 = vpop.f32.mrf.mxu0
    %v4088 = vadd.f32 %v4075, %v4087
    %v4089 = vpop.f32.mrf.mxu0
    %4090 = vdwg.mxu0
    %4091 = vmatpush.bf16.msra.mxu0 %v2752
    %4092 = vmatpush.bf16.msra.mxu0 %v2748
    %4093 = vmatpush.bf16.msra.mxu0 %v2744
    %4094 = vmatpush.bf16.msra.mxu0 %v2740
    %4095 = vmatpush.bf16.msra.mxu0 %v2736
    %4096 = vmatpush.bf16.msra.mxu0 %v2732
    %4097 = vmatpush.bf16.msra.mxu0 %v2728
    %4098 = vmatpush.bf16.msra.mxu0 %v2724
    %4099 = vmatmul.bf16.gmra.mxu0 %v706
    %v4100 = vpop.f32.mrf.mxu0
    %v4101 = vadd.f32 %v4088, %v4100
    %v4102 = vpop.f32.mrf.mxu0
    %4103 = vdwg.mxu0
    %4104 = vmatpush.bf16.msra.mxu0 %v2784
    %4105 = vmatpush.bf16.msra.mxu0 %v2780
    %4106 = vmatpush.bf16.msra.mxu0 %v2776
    %4107 = vmatpush.bf16.msra.mxu0 %v2772
    %4108 = vmatpush.bf16.msra.mxu0 %v2768
    %4109 = vmatpush.bf16.msra.mxu0 %v2764
    %4110 = vmatpush.bf16.msra.mxu0 %v2760
    %4111 = vmatpush.bf16.msra.mxu0 %v2756
    %4112 = vmatmul.bf16.gmra.mxu0 %v707
    %v4113 = vpop.f32.mrf.mxu0
    %v4114 = vadd.f32 %v4101, %v4113
    %v4115 = vpop.f32.mrf.mxu0
    %4116 = vdwg.mxu0
    %4117 = vmatpush.bf16.msra.mxu0 %v2816
    %4118 = vmatpush.bf16.msra.mxu0 %v2812
    %4119 = vmatpush.bf16.msra.mxu0 %v2808
    %4120 = vmatpush.bf16.msra.mxu0 %v2804
    %4121 = vmatpush.bf16.msra.mxu0 %v2800
    %4122 = vmatpush.bf16.msra.mxu0 %v2796
    %4123 = vmatpush.bf16.msra.mxu0 %v2792
    %4124 = vmatpush.bf16.msra.mxu0 %v2788
    %4125 = vmatmul.bf16.gmra.mxu0 %v708
    %v4126 = vpop.f32.mrf.mxu0
    %v4127 = vadd.f32 %v4114, %v4126
    %v4128 = vpop.f32.mrf.mxu0
    %4129 = vdwg.mxu0
    %4130 = vmatpush.bf16.msra.mxu0 %v2848
    %4131 = vmatpush.bf16.msra.mxu0 %v2844
    %4132 = vmatpush.bf16.msra.mxu0 %v2840
    %4133 = vmatpush.bf16.msra.mxu0 %v2836
    %4134 = vmatpush.bf16.msra.mxu0 %v2832
    %4135 = vmatpush.bf16.msra.mxu0 %v2828
    %4136 = vmatpush.bf16.msra.mxu0 %v2824
    %4137 = vmatpush.bf16.msra.mxu0 %v2820
    %4138 = vmatmul.bf16.gmra.mxu0 %v709
    %v4139 = vpop.f32.mrf.mxu0
    %v4140 = vadd.f32 %v4127, %v4139
    %v4141 = vpop.f32.mrf.mxu0
    %4142 = vdwg.mxu0
    %4143 = vmatpush.bf16.msra.mxu0 %v2880
    %4144 = vmatpush.bf16.msra.mxu0 %v2876
    %4145 = vmatpush.bf16.msra.mxu0 %v2872
    %4146 = vmatpush.bf16.msra.mxu0 %v2868
    %4147 = vmatpush.bf16.msra.mxu0 %v2864
    %4148 = vmatpush.bf16.msra.mxu0 %v2860
    %4149 = vmatpush.bf16.msra.mxu0 %v2856
    %4150 = vmatpush.bf16.msra.mxu0 %v2852
    %4151 = vmatmul.bf16.gmra.mxu0 %v710
    %v4152 = vpop.f32.mrf.mxu0
    %v4153 = vadd.f32 %v4140, %v4152
    %v4154 = vpop.f32.mrf.mxu0
    %4155 = vdwg.mxu0
    %4156 = vmatpush.bf16.msra.mxu0 %v2912
    %4157 = vmatpush.bf16.msra.mxu0 %v2908
    %4158 = vmatpush.bf16.msra.mxu0 %v2904
    %4159 = vmatpush.bf16.msra.mxu0 %v2900
    %4160 = vmatpush.bf16.msra.mxu0 %v2896
    %4161 = vmatpush.bf16.msra.mxu0 %v2892
    %4162 = vmatpush.bf16.msra.mxu0 %v2888
    %4163 = vmatpush.bf16.msra.mxu0 %v2884
    %4164 = vmatmul.bf16.gmra.mxu0 %v711
    %v4165 = vpop.f32.mrf.mxu0
    %v4166 = vadd.f32 %v4153, %v4165
    %v4167 = vpop.f32.mrf.mxu0
    %4168 = vdwg.mxu0
    %4169 = vmatpush.bf16.msra.mxu0 %v2944
    %4170 = vmatpush.bf16.msra.mxu0 %v2940
    %4171 = vmatpush.bf16.msra.mxu0 %v2936
    %4172 = vmatpush.bf16.msra.mxu0 %v2932
    %4173 = vmatpush.bf16.msra.mxu0 %v2928
    %4174 = vmatpush.bf16.msra.mxu0 %v2924
    %4175 = vmatpush.bf16.msra.mxu0 %v2920
    %4176 = vmatpush.bf16.msra.mxu0 %v2916
    %4177 = vmatmul.bf16.gmra.mxu0 %v712
    %v4178 = vpop.f32.mrf.mxu0
    %v4179 = vadd.f32 %v4166, %v4178
    %v4180 = vpop.f32.mrf.mxu0
    %4181 = vdwg.mxu0
    %4182 = vmatpush.bf16.msra.mxu0 %v2976
    %4183 = vmatpush.bf16.msra.mxu0 %v2972
    %4184 = vmatpush.bf16.msra.mxu0 %v2968
    %4185 = vmatpush.bf16.msra.mxu0 %v2964
    %4186 = vmatpush.bf16.msra.mxu0 %v2960
    %4187 = vmatpush.bf16.msra.mxu0 %v2956
    %4188 = vmatpush.bf16.msra.mxu0 %v2952
    %4189 = vmatpush.bf16.msra.mxu0 %v2948
    %4190 = vmatmul.bf16.gmra.mxu0 %v713
    %v4191 = vpop.f32.mrf.mxu0
    %v4192 = vadd.f32 %v4179, %v4191
    %v4193 = vpop.f32.mrf.mxu0
    %4194 = vdwg.mxu0
    %4195 = vmatpush.bf16.msra.mxu0 %v3008
    %4196 = vmatpush.bf16.msra.mxu0 %v3004
    %4197 = vmatpush.bf16.msra.mxu0 %v3000
    %4198 = vmatpush.bf16.msra.mxu0 %v2996
    %4199 = vmatpush.bf16.msra.mxu0 %v2992
    %4200 = vmatpush.bf16.msra.mxu0 %v2988
    %4201 = vmatpush.bf16.msra.mxu0 %v2984
    %4202 = vmatpush.bf16.msra.mxu0 %v2980
    %4203 = vmatmul.bf16.gmra.mxu0 %v714
    %v4204 = vpop.f32.mrf.mxu0
    %v4205 = vadd.f32 %v4192, %v4204
    %v4206 = vpop.f32.mrf.mxu0
    %4207 = vdwg.mxu0
    %4208 = vmatpush.bf16.msra.mxu0 %v3040
    %4209 = vmatpush.bf16.msra.mxu0 %v3036
    %4210 = vmatpush.bf16.msra.mxu0 %v3032
    %4211 = vmatpush.bf16.msra.mxu0 %v3028
    %4212 = vmatpush.bf16.msra.mxu0 %v3024
    %4213 = vmatpush.bf16.msra.mxu0 %v3020
    %4214 = vmatpush.bf16.msra.mxu0 %v3016
    %4215 = vmatpush.bf16.msra.mxu0 %v3012
    %4216 = vmatmul.bf16.gmra.mxu0 %v715
    %v4217 = vpop.f32.mrf.mxu0
    %v4218 = vadd.f32 %v4205, %v4217
    %v4219 = vpop.f32.mrf.mxu0
    %4220 = vdwg.mxu0
    %4221 = vmatpush.bf16.msra.mxu0 %v3072
    %4222 = vmatpush.bf16.msra.mxu0 %v3068
    %4223 = vmatpush.bf16.msra.mxu0 %v3064
    %4224 = vmatpush.bf16.msra.mxu0 %v3060
    %4225 = vmatpush.bf16.msra.mxu0 %v3056
    %4226 = vmatpush.bf16.msra.mxu0 %v3052
    %4227 = vmatpush.bf16.msra.mxu0 %v3048
    %4228 = vmatpush.bf16.msra.mxu0 %v3044
    %4229 = vmatmul.bf16.gmra.mxu0 %v716
    %v4230 = vpop.f32.mrf.mxu0
    %v4231 = vadd.f32 %v4218, %v4230
    %v4232 = vpop.f32.mrf.mxu0
    %4233 = vdwg.mxu0
    %4234 = vmatpush.bf16.msra.mxu0 %v3104
    %4235 = vmatpush.bf16.msra.mxu0 %v3100
    %4236 = vmatpush.bf16.msra.mxu0 %v3096
    %4237 = vmatpush.bf16.msra.mxu0 %v3092
    %4238 = vmatpush.bf16.msra.mxu0 %v3088
    %4239 = vmatpush.bf16.msra.mxu0 %v3084
    %4240 = vmatpush.bf16.msra.mxu0 %v3080
    %4241 = vmatpush.bf16.msra.mxu0 %v3076
    %4242 = vmatmul.bf16.gmra.mxu0 %v717
    %v4243 = vpop.f32.mrf.mxu0
    %v4244 = vadd.f32 %v4231, %v4243
    %v4245 = vpop.f32.mrf.mxu0
    %4246 = vdwg.mxu0
    %4247 = vmatpush.bf16.msra.mxu0 %v3136
    %4248 = vmatpush.bf16.msra.mxu0 %v3132
    %4249 = vmatpush.bf16.msra.mxu0 %v3128
    %4250 = vmatpush.bf16.msra.mxu0 %v3124
    %4251 = vmatpush.bf16.msra.mxu0 %v3120
    %4252 = vmatpush.bf16.msra.mxu0 %v3116
    %4253 = vmatpush.bf16.msra.mxu0 %v3112
    %4254 = vmatpush.bf16.msra.mxu0 %v3108
    %4255 = vmatmul.bf16.gmra.mxu0 %v718
    %v4256 = vpop.f32.mrf.mxu0
    %v4257 = vadd.f32 %v4244, %v4256
    %v4258 = vpop.f32.mrf.mxu0
    %4259 = vdwg.mxu0
    %4260 = vmatpush.bf16.msra.mxu0 %v3168
    %4261 = vmatpush.bf16.msra.mxu0 %v3164
    %4262 = vmatpush.bf16.msra.mxu0 %v3160
    %4263 = vmatpush.bf16.msra.mxu0 %v3156
    %4264 = vmatpush.bf16.msra.mxu0 %v3152
    %4265 = vmatpush.bf16.msra.mxu0 %v3148
    %4266 = vmatpush.bf16.msra.mxu0 %v3144
    %4267 = vmatpush.bf16.msra.mxu0 %v3140
    %4268 = vmatmul.bf16.gmra.mxu0 %v719
    %v4269 = vpop.f32.mrf.mxu0
    %v4270 = vadd.f32 %v4257, %v4269
    %v4271 = vpop.f32.mrf.mxu0
    %4272 = vdwg.mxu0
    %4273 = vmatpush.bf16.msra.mxu0 %v2593
    %4274 = vmatpush.bf16.msra.mxu0 %v2589
    %4275 = vmatpush.bf16.msra.mxu0 %v2585
    %4276 = vmatpush.bf16.msra.mxu0 %v2581
    %4277 = vmatpush.bf16.msra.mxu0 %v2577
    %4278 = vmatpush.bf16.msra.mxu0 %v2573
    %4279 = vmatpush.bf16.msra.mxu0 %v2569
    %4280 = vmatpush.bf16.msra.mxu0 %v2565
    %4281 = vmatmul.bf16.gmra.mxu0 %v701
    %v4282 = vpop.f32.mrf.mxu0
    %v4283 = vadd.f32 %v666, %v4282
    %v4284 = vpop.f32.mrf.mxu0
    %4285 = vdwg.mxu0
    %4286 = vmatpush.bf16.msra.mxu0 %v2625
    %4287 = vmatpush.bf16.msra.mxu0 %v2621
    %4288 = vmatpush.bf16.msra.mxu0 %v2617
    %4289 = vmatpush.bf16.msra.mxu0 %v2613
    %4290 = vmatpush.bf16.msra.mxu0 %v2609
    %4291 = vmatpush.bf16.msra.mxu0 %v2605
    %4292 = vmatpush.bf16.msra.mxu0 %v2601
    %4293 = vmatpush.bf16.msra.mxu0 %v2597
    %4294 = vmatmul.bf16.gmra.mxu0 %v702
    %v4295 = vpop.f32.mrf.mxu0
    %v4296 = vadd.f32 %v4283, %v4295
    %v4297 = vpop.f32.mrf.mxu0
    %4298 = vdwg.mxu0
    %4299 = vmatpush.bf16.msra.mxu0 %v2657
    %4300 = vmatpush.bf16.msra.mxu0 %v2653
    %4301 = vmatpush.bf16.msra.mxu0 %v2649
    %4302 = vmatpush.bf16.msra.mxu0 %v2645
    %4303 = vmatpush.bf16.msra.mxu0 %v2641
    %4304 = vmatpush.bf16.msra.mxu0 %v2637
    %4305 = vmatpush.bf16.msra.mxu0 %v2633
    %4306 = vmatpush.bf16.msra.mxu0 %v2629
    %4307 = vmatmul.bf16.gmra.mxu0 %v703
    %v4308 = vpop.f32.mrf.mxu0
    %v4309 = vadd.f32 %v4296, %v4308
    %v4310 = vpop.f32.mrf.mxu0
    %4311 = vdwg.mxu0
    %4312 = vmatpush.bf16.msra.mxu0 %v2689
    %4313 = vmatpush.bf16.msra.mxu0 %v2685
    %4314 = vmatpush.bf16.msra.mxu0 %v2681
    %4315 = vmatpush.bf16.msra.mxu0 %v2677
    %4316 = vmatpush.bf16.msra.mxu0 %v2673
    %4317 = vmatpush.bf16.msra.mxu0 %v2669
    %4318 = vmatpush.bf16.msra.mxu0 %v2665
    %4319 = vmatpush.bf16.msra.mxu0 %v2661
    %4320 = vmatmul.bf16.gmra.mxu0 %v704
    %v4321 = vpop.f32.mrf.mxu0
    %v4322 = vadd.f32 %v4309, %v4321
    %v4323 = vpop.f32.mrf.mxu0
    %4324 = vdwg.mxu0
    %4325 = vmatpush.bf16.msra.mxu0 %v2721
    %4326 = vmatpush.bf16.msra.mxu0 %v2717
    %4327 = vmatpush.bf16.msra.mxu0 %v2713
    %4328 = vmatpush.bf16.msra.mxu0 %v2709
    %4329 = vmatpush.bf16.msra.mxu0 %v2705
    %4330 = vmatpush.bf16.msra.mxu0 %v2701
    %4331 = vmatpush.bf16.msra.mxu0 %v2697
    %4332 = vmatpush.bf16.msra.mxu0 %v2693
    %4333 = vmatmul.bf16.gmra.mxu0 %v705
    %v4334 = vpop.f32.mrf.mxu0
    %v4335 = vadd.f32 %v4322, %v4334
    %v4336 = vpop.f32.mrf.mxu0
    %4337 = vdwg.mxu0
    %4338 = vmatpush.bf16.msra.mxu0 %v2753
    %4339 = vmatpush.bf16.msra.mxu0 %v2749
    %4340 = vmatpush.bf16.msra.mxu0 %v2745
    %4341 = vmatpush.bf16.msra.mxu0 %v2741
    %4342 = vmatpush.bf16.msra.mxu0 %v2737
    %4343 = vmatpush.bf16.msra.mxu0 %v2733
    %4344 = vmatpush.bf16.msra.mxu0 %v2729
    %4345 = vmatpush.bf16.msra.mxu0 %v2725
    %4346 = vmatmul.bf16.gmra.mxu0 %v706
    %v4347 = vpop.f32.mrf.mxu0
    %v4348 = vadd.f32 %v4335, %v4347
    %v4349 = vpop.f32.mrf.mxu0
    %4350 = vdwg.mxu0
    %4351 = vmatpush.bf16.msra.mxu0 %v2785
    %4352 = vmatpush.bf16.msra.mxu0 %v2781
    %4353 = vmatpush.bf16.msra.mxu0 %v2777
    %4354 = vmatpush.bf16.msra.mxu0 %v2773
    %4355 = vmatpush.bf16.msra.mxu0 %v2769
    %4356 = vmatpush.bf16.msra.mxu0 %v2765
    %4357 = vmatpush.bf16.msra.mxu0 %v2761
    %4358 = vmatpush.bf16.msra.mxu0 %v2757
    %4359 = vmatmul.bf16.gmra.mxu0 %v707
    %v4360 = vpop.f32.mrf.mxu0
    %v4361 = vadd.f32 %v4348, %v4360
    %v4362 = vpop.f32.mrf.mxu0
    %4363 = vdwg.mxu0
    %4364 = vmatpush.bf16.msra.mxu0 %v2817
    %4365 = vmatpush.bf16.msra.mxu0 %v2813
    %4366 = vmatpush.bf16.msra.mxu0 %v2809
    %4367 = vmatpush.bf16.msra.mxu0 %v2805
    %4368 = vmatpush.bf16.msra.mxu0 %v2801
    %4369 = vmatpush.bf16.msra.mxu0 %v2797
    %4370 = vmatpush.bf16.msra.mxu0 %v2793
    %4371 = vmatpush.bf16.msra.mxu0 %v2789
    %4372 = vmatmul.bf16.gmra.mxu0 %v708
    %v4373 = vpop.f32.mrf.mxu0
    %v4374 = vadd.f32 %v4361, %v4373
    %v4375 = vpop.f32.mrf.mxu0
    %4376 = vdwg.mxu0
    %4377 = vmatpush.bf16.msra.mxu0 %v2849
    %4378 = vmatpush.bf16.msra.mxu0 %v2845
    %4379 = vmatpush.bf16.msra.mxu0 %v2841
    %4380 = vmatpush.bf16.msra.mxu0 %v2837
    %4381 = vmatpush.bf16.msra.mxu0 %v2833
    %4382 = vmatpush.bf16.msra.mxu0 %v2829
    %4383 = vmatpush.bf16.msra.mxu0 %v2825
    %4384 = vmatpush.bf16.msra.mxu0 %v2821
    %4385 = vmatmul.bf16.gmra.mxu0 %v709
    %v4386 = vpop.f32.mrf.mxu0
    %v4387 = vadd.f32 %v4374, %v4386
    %v4388 = vpop.f32.mrf.mxu0
    %4389 = vdwg.mxu0
    %4390 = vmatpush.bf16.msra.mxu0 %v2881
    %4391 = vmatpush.bf16.msra.mxu0 %v2877
    %4392 = vmatpush.bf16.msra.mxu0 %v2873
    %4393 = vmatpush.bf16.msra.mxu0 %v2869
    %4394 = vmatpush.bf16.msra.mxu0 %v2865
    %4395 = vmatpush.bf16.msra.mxu0 %v2861
    %4396 = vmatpush.bf16.msra.mxu0 %v2857
    %4397 = vmatpush.bf16.msra.mxu0 %v2853
    %4398 = vmatmul.bf16.gmra.mxu0 %v710
    %v4399 = vpop.f32.mrf.mxu0
    %v4400 = vadd.f32 %v4387, %v4399
    %v4401 = vpop.f32.mrf.mxu0
    %4402 = vdwg.mxu0
    %4403 = vmatpush.bf16.msra.mxu0 %v2913
    %4404 = vmatpush.bf16.msra.mxu0 %v2909
    %4405 = vmatpush.bf16.msra.mxu0 %v2905
    %4406 = vmatpush.bf16.msra.mxu0 %v2901
    %4407 = vmatpush.bf16.msra.mxu0 %v2897
    %4408 = vmatpush.bf16.msra.mxu0 %v2893
    %4409 = vmatpush.bf16.msra.mxu0 %v2889
    %4410 = vmatpush.bf16.msra.mxu0 %v2885
    %4411 = vmatmul.bf16.gmra.mxu0 %v711
    %v4412 = vpop.f32.mrf.mxu0
    %v4413 = vadd.f32 %v4400, %v4412
    %v4414 = vpop.f32.mrf.mxu0
    %4415 = vdwg.mxu0
    %4416 = vmatpush.bf16.msra.mxu0 %v2945
    %4417 = vmatpush.bf16.msra.mxu0 %v2941
    %4418 = vmatpush.bf16.msra.mxu0 %v2937
    %4419 = vmatpush.bf16.msra.mxu0 %v2933
    %4420 = vmatpush.bf16.msra.mxu0 %v2929
    %4421 = vmatpush.bf16.msra.mxu0 %v2925
    %4422 = vmatpush.bf16.msra.mxu0 %v2921
    %4423 = vmatpush.bf16.msra.mxu0 %v2917
    %4424 = vmatmul.bf16.gmra.mxu0 %v712
    %v4425 = vpop.f32.mrf.mxu0
    %v4426 = vadd.f32 %v4413, %v4425
    %v4427 = vpop.f32.mrf.mxu0
    %4428 = vdwg.mxu0
    %4429 = vmatpush.bf16.msra.mxu0 %v2977
    %4430 = vmatpush.bf16.msra.mxu0 %v2973
    %4431 = vmatpush.bf16.msra.mxu0 %v2969
    %4432 = vmatpush.bf16.msra.mxu0 %v2965
    %4433 = vmatpush.bf16.msra.mxu0 %v2961
    %4434 = vmatpush.bf16.msra.mxu0 %v2957
    %4435 = vmatpush.bf16.msra.mxu0 %v2953
    %4436 = vmatpush.bf16.msra.mxu0 %v2949
    %4437 = vmatmul.bf16.gmra.mxu0 %v713
    %v4438 = vpop.f32.mrf.mxu0
    %v4439 = vadd.f32 %v4426, %v4438
    %v4440 = vpop.f32.mrf.mxu0
    %4441 = vdwg.mxu0
    %4442 = vmatpush.bf16.msra.mxu0 %v3009
    %4443 = vmatpush.bf16.msra.mxu0 %v3005
    %4444 = vmatpush.bf16.msra.mxu0 %v3001
    %4445 = vmatpush.bf16.msra.mxu0 %v2997
    %4446 = vmatpush.bf16.msra.mxu0 %v2993
    %4447 = vmatpush.bf16.msra.mxu0 %v2989
    %4448 = vmatpush.bf16.msra.mxu0 %v2985
    %4449 = vmatpush.bf16.msra.mxu0 %v2981
    %4450 = vmatmul.bf16.gmra.mxu0 %v714
    %v4451 = vpop.f32.mrf.mxu0
    %v4452 = vadd.f32 %v4439, %v4451
    %v4453 = vpop.f32.mrf.mxu0
    %4454 = vdwg.mxu0
    %4455 = vmatpush.bf16.msra.mxu0 %v3041
    %4456 = vmatpush.bf16.msra.mxu0 %v3037
    %4457 = vmatpush.bf16.msra.mxu0 %v3033
    %4458 = vmatpush.bf16.msra.mxu0 %v3029
    %4459 = vmatpush.bf16.msra.mxu0 %v3025
    %4460 = vmatpush.bf16.msra.mxu0 %v3021
    %4461 = vmatpush.bf16.msra.mxu0 %v3017
    %4462 = vmatpush.bf16.msra.mxu0 %v3013
    %4463 = vmatmul.bf16.gmra.mxu0 %v715
    %v4464 = vpop.f32.mrf.mxu0
    %v4465 = vadd.f32 %v4452, %v4464
    %v4466 = vpop.f32.mrf.mxu0
    %4467 = vdwg.mxu0
    %4468 = vmatpush.bf16.msra.mxu0 %v3073
    %4469 = vmatpush.bf16.msra.mxu0 %v3069
    %4470 = vmatpush.bf16.msra.mxu0 %v3065
    %4471 = vmatpush.bf16.msra.mxu0 %v3061
    %4472 = vmatpush.bf16.msra.mxu0 %v3057
    %4473 = vmatpush.bf16.msra.mxu0 %v3053
    %4474 = vmatpush.bf16.msra.mxu0 %v3049
    %4475 = vmatpush.bf16.msra.mxu0 %v3045
    %4476 = vmatmul.bf16.gmra.mxu0 %v716
    %v4477 = vpop.f32.mrf.mxu0
    %v4478 = vadd.f32 %v4465, %v4477
    %v4479 = vpop.f32.mrf.mxu0
    %4480 = vdwg.mxu0
    %4481 = vmatpush.bf16.msra.mxu0 %v3105
    %4482 = vmatpush.bf16.msra.mxu0 %v3101
    %4483 = vmatpush.bf16.msra.mxu0 %v3097
    %4484 = vmatpush.bf16.msra.mxu0 %v3093
    %4485 = vmatpush.bf16.msra.mxu0 %v3089
    %4486 = vmatpush.bf16.msra.mxu0 %v3085
    %4487 = vmatpush.bf16.msra.mxu0 %v3081
    %4488 = vmatpush.bf16.msra.mxu0 %v3077
    %4489 = vmatmul.bf16.gmra.mxu0 %v717
    %v4490 = vpop.f32.mrf.mxu0
    %v4491 = vadd.f32 %v4478, %v4490
    %v4492 = vpop.f32.mrf.mxu0
    %4493 = vdwg.mxu0
    %4494 = vmatpush.bf16.msra.mxu0 %v3137
    %4495 = vmatpush.bf16.msra.mxu0 %v3133
    %4496 = vmatpush.bf16.msra.mxu0 %v3129
    %4497 = vmatpush.bf16.msra.mxu0 %v3125
    %4498 = vmatpush.bf16.msra.mxu0 %v3121
    %4499 = vmatpush.bf16.msra.mxu0 %v3117
    %4500 = vmatpush.bf16.msra.mxu0 %v3113
    %4501 = vmatpush.bf16.msra.mxu0 %v3109
    %4502 = vmatmul.bf16.gmra.mxu0 %v718
    %v4503 = vpop.f32.mrf.mxu0
    %v4504 = vadd.f32 %v4491, %v4503
    %v4505 = vpop.f32.mrf.mxu0
    %4506 = vdwg.mxu0
    %4507 = vmatpush.bf16.msra.mxu0 %v3169
    %4508 = vmatpush.bf16.msra.mxu0 %v3165
    %4509 = vmatpush.bf16.msra.mxu0 %v3161
    %4510 = vmatpush.bf16.msra.mxu0 %v3157
    %4511 = vmatpush.bf16.msra.mxu0 %v3153
    %4512 = vmatpush.bf16.msra.mxu0 %v3149
    %4513 = vmatpush.bf16.msra.mxu0 %v3145
    %4514 = vmatpush.bf16.msra.mxu0 %v3141
    %4515 = vmatmul.bf16.gmra.mxu0 %v719
    %v4516 = vpop.f32.mrf.mxu0
    %v4517 = vadd.f32 %v4504, %v4516
    %v4518 = vpop.f32.mrf.mxu0
    %4519 = vdwg.mxu0
    %4520 = vmatpush.bf16.msra.mxu0 %v2594
    %4521 = vmatpush.bf16.msra.mxu0 %v2590
    %4522 = vmatpush.bf16.msra.mxu0 %v2586
    %4523 = vmatpush.bf16.msra.mxu0 %v2582
    %4524 = vmatpush.bf16.msra.mxu0 %v2578
    %4525 = vmatpush.bf16.msra.mxu0 %v2574
    %4526 = vmatpush.bf16.msra.mxu0 %v2570
    %4527 = vmatpush.bf16.msra.mxu0 %v2566
    %4528 = vmatmul.bf16.gmra.mxu0 %v701
    %v4529 = vpop.f32.mrf.mxu0
    %v4530 = vadd.f32 %v667, %v4529
    %v4531 = vpop.f32.mrf.mxu0
    %4532 = vdwg.mxu0
    %4533 = vmatpush.bf16.msra.mxu0 %v2626
    %4534 = vmatpush.bf16.msra.mxu0 %v2622
    %4535 = vmatpush.bf16.msra.mxu0 %v2618
    %4536 = vmatpush.bf16.msra.mxu0 %v2614
    %4537 = vmatpush.bf16.msra.mxu0 %v2610
    %4538 = vmatpush.bf16.msra.mxu0 %v2606
    %4539 = vmatpush.bf16.msra.mxu0 %v2602
    %4540 = vmatpush.bf16.msra.mxu0 %v2598
    %4541 = vmatmul.bf16.gmra.mxu0 %v702
    %v4542 = vpop.f32.mrf.mxu0
    %v4543 = vadd.f32 %v4530, %v4542
    %v4544 = vpop.f32.mrf.mxu0
    %4545 = vdwg.mxu0
    %4546 = vmatpush.bf16.msra.mxu0 %v2658
    %4547 = vmatpush.bf16.msra.mxu0 %v2654
    %4548 = vmatpush.bf16.msra.mxu0 %v2650
    %4549 = vmatpush.bf16.msra.mxu0 %v2646
    %4550 = vmatpush.bf16.msra.mxu0 %v2642
    %4551 = vmatpush.bf16.msra.mxu0 %v2638
    %4552 = vmatpush.bf16.msra.mxu0 %v2634
    %4553 = vmatpush.bf16.msra.mxu0 %v2630
    %4554 = vmatmul.bf16.gmra.mxu0 %v703
    %v4555 = vpop.f32.mrf.mxu0
    %v4556 = vadd.f32 %v4543, %v4555
    %v4557 = vpop.f32.mrf.mxu0
    %4558 = vdwg.mxu0
    %4559 = vmatpush.bf16.msra.mxu0 %v2690
    %4560 = vmatpush.bf16.msra.mxu0 %v2686
    %4561 = vmatpush.bf16.msra.mxu0 %v2682
    %4562 = vmatpush.bf16.msra.mxu0 %v2678
    %4563 = vmatpush.bf16.msra.mxu0 %v2674
    %4564 = vmatpush.bf16.msra.mxu0 %v2670
    %4565 = vmatpush.bf16.msra.mxu0 %v2666
    %4566 = vmatpush.bf16.msra.mxu0 %v2662
    %4567 = vmatmul.bf16.gmra.mxu0 %v704
    %v4568 = vpop.f32.mrf.mxu0
    %v4569 = vadd.f32 %v4556, %v4568
    %v4570 = vpop.f32.mrf.mxu0
    %4571 = vdwg.mxu0
    %4572 = vmatpush.bf16.msra.mxu0 %v2722
    %4573 = vmatpush.bf16.msra.mxu0 %v2718
    %4574 = vmatpush.bf16.msra.mxu0 %v2714
    %4575 = vmatpush.bf16.msra.mxu0 %v2710
    %4576 = vmatpush.bf16.msra.mxu0 %v2706
    %4577 = vmatpush.bf16.msra.mxu0 %v2702
    %4578 = vmatpush.bf16.msra.mxu0 %v2698
    %4579 = vmatpush.bf16.msra.mxu0 %v2694
    %4580 = vmatmul.bf16.gmra.mxu0 %v705
    %v4581 = vpop.f32.mrf.mxu0
    %v4582 = vadd.f32 %v4569, %v4581
    %v4583 = vpop.f32.mrf.mxu0
    %4584 = vdwg.mxu0
    %4585 = vmatpush.bf16.msra.mxu0 %v2754
    %4586 = vmatpush.bf16.msra.mxu0 %v2750
    %4587 = vmatpush.bf16.msra.mxu0 %v2746
    %4588 = vmatpush.bf16.msra.mxu0 %v2742
    %4589 = vmatpush.bf16.msra.mxu0 %v2738
    %4590 = vmatpush.bf16.msra.mxu0 %v2734
    %4591 = vmatpush.bf16.msra.mxu0 %v2730
    %4592 = vmatpush.bf16.msra.mxu0 %v2726
    %4593 = vmatmul.bf16.gmra.mxu0 %v706
    %v4594 = vpop.f32.mrf.mxu0
    %v4595 = vadd.f32 %v4582, %v4594
    %v4596 = vpop.f32.mrf.mxu0
    %4597 = vdwg.mxu0
    %4598 = vmatpush.bf16.msra.mxu0 %v2786
    %4599 = vmatpush.bf16.msra.mxu0 %v2782
    %4600 = vmatpush.bf16.msra.mxu0 %v2778
    %4601 = vmatpush.bf16.msra.mxu0 %v2774
    %4602 = vmatpush.bf16.msra.mxu0 %v2770
    %4603 = vmatpush.bf16.msra.mxu0 %v2766
    %4604 = vmatpush.bf16.msra.mxu0 %v2762
    %4605 = vmatpush.bf16.msra.mxu0 %v2758
    %4606 = vmatmul.bf16.gmra.mxu0 %v707
    %v4607 = vpop.f32.mrf.mxu0
    %v4608 = vadd.f32 %v4595, %v4607
    %v4609 = vpop.f32.mrf.mxu0
    %4610 = vdwg.mxu0
    %4611 = vmatpush.bf16.msra.mxu0 %v2818
    %4612 = vmatpush.bf16.msra.mxu0 %v2814
    %4613 = vmatpush.bf16.msra.mxu0 %v2810
    %4614 = vmatpush.bf16.msra.mxu0 %v2806
    %4615 = vmatpush.bf16.msra.mxu0 %v2802
    %4616 = vmatpush.bf16.msra.mxu0 %v2798
    %4617 = vmatpush.bf16.msra.mxu0 %v2794
    %4618 = vmatpush.bf16.msra.mxu0 %v2790
    %4619 = vmatmul.bf16.gmra.mxu0 %v708
    %v4620 = vpop.f32.mrf.mxu0
    %v4621 = vadd.f32 %v4608, %v4620
    %v4622 = vpop.f32.mrf.mxu0
    %4623 = vdwg.mxu0
    %4624 = vmatpush.bf16.msra.mxu0 %v2850
    %4625 = vmatpush.bf16.msra.mxu0 %v2846
    %4626 = vmatpush.bf16.msra.mxu0 %v2842
    %4627 = vmatpush.bf16.msra.mxu0 %v2838
    %4628 = vmatpush.bf16.msra.mxu0 %v2834
    %4629 = vmatpush.bf16.msra.mxu0 %v2830
    %4630 = vmatpush.bf16.msra.mxu0 %v2826
    %4631 = vmatpush.bf16.msra.mxu0 %v2822
    %4632 = vmatmul.bf16.gmra.mxu0 %v709
    %v4633 = vpop.f32.mrf.mxu0
    %v4634 = vadd.f32 %v4621, %v4633
    %v4635 = vpop.f32.mrf.mxu0
    %4636 = vdwg.mxu0
    %4637 = vmatpush.bf16.msra.mxu0 %v2882
    %4638 = vmatpush.bf16.msra.mxu0 %v2878
    %4639 = vmatpush.bf16.msra.mxu0 %v2874
    %4640 = vmatpush.bf16.msra.mxu0 %v2870
    %4641 = vmatpush.bf16.msra.mxu0 %v2866
    %4642 = vmatpush.bf16.msra.mxu0 %v2862
    %4643 = vmatpush.bf16.msra.mxu0 %v2858
    %4644 = vmatpush.bf16.msra.mxu0 %v2854
    %4645 = vmatmul.bf16.gmra.mxu0 %v710
    %v4646 = vpop.f32.mrf.mxu0
    %v4647 = vadd.f32 %v4634, %v4646
    %v4648 = vpop.f32.mrf.mxu0
    %4649 = vdwg.mxu0
    %4650 = vmatpush.bf16.msra.mxu0 %v2914
    %4651 = vmatpush.bf16.msra.mxu0 %v2910
    %4652 = vmatpush.bf16.msra.mxu0 %v2906
    %4653 = vmatpush.bf16.msra.mxu0 %v2902
    %4654 = vmatpush.bf16.msra.mxu0 %v2898
    %4655 = vmatpush.bf16.msra.mxu0 %v2894
    %4656 = vmatpush.bf16.msra.mxu0 %v2890
    %4657 = vmatpush.bf16.msra.mxu0 %v2886
    %4658 = vmatmul.bf16.gmra.mxu0 %v711
    %v4659 = vpop.f32.mrf.mxu0
    %v4660 = vadd.f32 %v4647, %v4659
    %v4661 = vpop.f32.mrf.mxu0
    %4662 = vdwg.mxu0
    %4663 = vmatpush.bf16.msra.mxu0 %v2946
    %4664 = vmatpush.bf16.msra.mxu0 %v2942
    %4665 = vmatpush.bf16.msra.mxu0 %v2938
    %4666 = vmatpush.bf16.msra.mxu0 %v2934
    %4667 = vmatpush.bf16.msra.mxu0 %v2930
    %4668 = vmatpush.bf16.msra.mxu0 %v2926
    %4669 = vmatpush.bf16.msra.mxu0 %v2922
    %4670 = vmatpush.bf16.msra.mxu0 %v2918
    %4671 = vmatmul.bf16.gmra.mxu0 %v712
    %v4672 = vpop.f32.mrf.mxu0
    %v4673 = vadd.f32 %v4660, %v4672
    %v4674 = vpop.f32.mrf.mxu0
    %4675 = vdwg.mxu0
    %4676 = vmatpush.bf16.msra.mxu0 %v2978
    %4677 = vmatpush.bf16.msra.mxu0 %v2974
    %4678 = vmatpush.bf16.msra.mxu0 %v2970
    %4679 = vmatpush.bf16.msra.mxu0 %v2966
    %4680 = vmatpush.bf16.msra.mxu0 %v2962
    %4681 = vmatpush.bf16.msra.mxu0 %v2958
    %4682 = vmatpush.bf16.msra.mxu0 %v2954
    %4683 = vmatpush.bf16.msra.mxu0 %v2950
    %4684 = vmatmul.bf16.gmra.mxu0 %v713
    %v4685 = vpop.f32.mrf.mxu0
    %v4686 = vadd.f32 %v4673, %v4685
    %v4687 = vpop.f32.mrf.mxu0
    %4688 = vdwg.mxu0
    %4689 = vmatpush.bf16.msra.mxu0 %v3010
    %4690 = vmatpush.bf16.msra.mxu0 %v3006
    %4691 = vmatpush.bf16.msra.mxu0 %v3002
    %4692 = vmatpush.bf16.msra.mxu0 %v2998
    %4693 = vmatpush.bf16.msra.mxu0 %v2994
    %4694 = vmatpush.bf16.msra.mxu0 %v2990
    %4695 = vmatpush.bf16.msra.mxu0 %v2986
    %4696 = vmatpush.bf16.msra.mxu0 %v2982
    %4697 = vmatmul.bf16.gmra.mxu0 %v714
    %v4698 = vpop.f32.mrf.mxu0
    %v4699 = vadd.f32 %v4686, %v4698
    %v4700 = vpop.f32.mrf.mxu0
    %4701 = vdwg.mxu0
    %4702 = vmatpush.bf16.msra.mxu0 %v3042
    %4703 = vmatpush.bf16.msra.mxu0 %v3038
    %4704 = vmatpush.bf16.msra.mxu0 %v3034
    %4705 = vmatpush.bf16.msra.mxu0 %v3030
    %4706 = vmatpush.bf16.msra.mxu0 %v3026
    %4707 = vmatpush.bf16.msra.mxu0 %v3022
    %4708 = vmatpush.bf16.msra.mxu0 %v3018
    %4709 = vmatpush.bf16.msra.mxu0 %v3014
    %4710 = vmatmul.bf16.gmra.mxu0 %v715
    %v4711 = vpop.f32.mrf.mxu0
    %v4712 = vadd.f32 %v4699, %v4711
    %v4713 = vpop.f32.mrf.mxu0
    %4714 = vdwg.mxu0
    %4715 = vmatpush.bf16.msra.mxu0 %v3074
    %4716 = vmatpush.bf16.msra.mxu0 %v3070
    %4717 = vmatpush.bf16.msra.mxu0 %v3066
    %4718 = vmatpush.bf16.msra.mxu0 %v3062
    %4719 = vmatpush.bf16.msra.mxu0 %v3058
    %4720 = vmatpush.bf16.msra.mxu0 %v3054
    %4721 = vmatpush.bf16.msra.mxu0 %v3050
    %4722 = vmatpush.bf16.msra.mxu0 %v3046
    %4723 = vmatmul.bf16.gmra.mxu0 %v716
    %v4724 = vpop.f32.mrf.mxu0
    %v4725 = vadd.f32 %v4712, %v4724
    %v4726 = vpop.f32.mrf.mxu0
    %4727 = vdwg.mxu0
    %4728 = vmatpush.bf16.msra.mxu0 %v3106
    %4729 = vmatpush.bf16.msra.mxu0 %v3102
    %4730 = vmatpush.bf16.msra.mxu0 %v3098
    %4731 = vmatpush.bf16.msra.mxu0 %v3094
    %4732 = vmatpush.bf16.msra.mxu0 %v3090
    %4733 = vmatpush.bf16.msra.mxu0 %v3086
    %4734 = vmatpush.bf16.msra.mxu0 %v3082
    %4735 = vmatpush.bf16.msra.mxu0 %v3078
    %4736 = vmatmul.bf16.gmra.mxu0 %v717
    %v4737 = vpop.f32.mrf.mxu0
    %v4738 = vadd.f32 %v4725, %v4737
    %v4739 = vpop.f32.mrf.mxu0
    %4740 = vdwg.mxu0
    %4741 = vmatpush.bf16.msra.mxu0 %v3138
    %4742 = vmatpush.bf16.msra.mxu0 %v3134
    %4743 = vmatpush.bf16.msra.mxu0 %v3130
    %4744 = vmatpush.bf16.msra.mxu0 %v3126
    %4745 = vmatpush.bf16.msra.mxu0 %v3122
    %4746 = vmatpush.bf16.msra.mxu0 %v3118
    %4747 = vmatpush.bf16.msra.mxu0 %v3114
    %4748 = vmatpush.bf16.msra.mxu0 %v3110
    %4749 = vmatmul.bf16.gmra.mxu0 %v718
    %v4750 = vpop.f32.mrf.mxu0
    %v4751 = vadd.f32 %v4738, %v4750
    %v4752 = vpop.f32.mrf.mxu0
    %4753 = vdwg.mxu0
    %4754 = vmatpush.bf16.msra.mxu0 %v3170
    %4755 = vmatpush.bf16.msra.mxu0 %v3166
    %4756 = vmatpush.bf16.msra.mxu0 %v3162
    %4757 = vmatpush.bf16.msra.mxu0 %v3158
    %4758 = vmatpush.bf16.msra.mxu0 %v3154
    %4759 = vmatpush.bf16.msra.mxu0 %v3150
    %4760 = vmatpush.bf16.msra.mxu0 %v3146
    %4761 = vmatpush.bf16.msra.mxu0 %v3142
    %4762 = vmatmul.bf16.gmra.mxu0 %v719
    %v4763 = vpop.f32.mrf.mxu0
    %v4764 = vadd.f32 %v4751, %v4763
    %v4765 = vpop.f32.mrf.mxu0
    %4766 = vdwg.mxu0
    %v4767 = vmax.f32 %v4023, 0.0
    %v4768 = vmax.f32 %v4270, 0.0
    %v4769 = vmax.f32 %v4517, 0.0
    %v4770 = vmax.f32 %v4764, 0.0
    %s4771 = scalar_lea.vmem [#allocation4], 1
    %v4772 = vld [vmem:[%s4771] ss:$4 sm:$0xf]
    %v4774 = vperm.slane %v4772, 0
    %v4775 = vperm.slane %v4772, 1
    %v4776 = vperm.slane %v4772, 2
    %v4777 = vperm.slane %v4772, 3
    %v4782 = vmul.f32 %v4767, %v4774
    %v4783 = vmul.f32 %v4768, %v4775
    %v4784 = vmul.f32 %v4769, %v4776
    %v4785 = vmul.f32 %v4770, %v4777
    %v4786 = vadd.f32 %v4782, %v4783
    %v4787 = vadd.f32 %v4786, %v4784
    %v4788 = vadd.f32 %v4787, %v4785
    %4789 = vadd.xlane.f32.xlu0 %v4788
    %v4790 = vpop.xlane.xlu0 %4789
    %v4791 = vld [vmem:[#allocation4 + $0x2] sm:$0x1]
    %v4792 = vperm.slane %v4791, 0
    %v4793 = vadd.f32 %v4790, %v4792
    %v4794 = vsub.f32 0.0, %v4793
    %v4795 = vmul.f32 %v4794, 1.442695
    %v4796 = vpow.pop %v4795
    %v4797 = vadd.f32 %v4796, 1.0
    %v4798 = vrcp.pop %v4797
    %v4799 = vmul.f32 %v4797, %v4798
    %v4800 = vsub.f32 1.0, %v4799
    %v4801 = vmul.f32 %v4798, %v4800
    %v4802 = vadd.f32 %v4798, %v4801
    %vm4803 = vweird.f32 %v4797
    %vm4804 = vweird.f32 %v4798
    %vm4805 = vmor %vm4803, %vm4804
    %v4806 = vsel %vm4805, %v4798, %v4802
    %v4807 = vand.u32 2147483647, %v4797
    %vm4808 = vcmp.eq.f32.partialorder %v4807, 8.507059e+37
    %v4809 = vand.u32 %v4797, 2147483648
    %v4810 = vor.u32 1.1754944e-38, %v4809
    %v4811 = vsel %vm4808, %v4810, %v4806
    %v4812 = vmul.f32 1.0, %v4811
    %4814 = vset.pattern.permute.xlu0 0
    %4815 = vperm.xlu0 %4814, %v4812
    %v4816 = vpop.permute.xlu0 %4815
    %4818 = vst [vmem:[%s3] sm:$0xff] %v4816
    // Predicated region
    $region22: #{hybrid_model_setting2_forward.1} parent=1 // pred_check
      _
    $region23: #{hybrid_model_setting2_forward.1} parent=1 // pred_check_branch
      %4820 = sbr.rel (0) target = $region25
    $region24: #{hybrid_model_setting2_forward.1} parent=1 // pred_region
      _
    $region25: #{hybrid_model_setting2_forward.1} parent=1 // pred_fallthru
      _
    // Predicated region
    $region26: #{hybrid_model_setting2_forward.1} parent=1 // pred_check
      _
    $region27: #{hybrid_model_setting2_forward.1} parent=1 // pred_check_branch
      %4822 = sbr.rel (0) target = $region29
    $region28: #{hybrid_model_setting2_forward.1} parent=1 // pred_region
      _
    $region29: #{hybrid_model_setting2_forward.1} parent=1 // pred_fallthru
      _
    %4823 = vsyncpa [#allocation3], 1
    %4824 = vsyncpa [#allocation5], 1

</llo_original>
